<compile_context>
chip_gen: v7x
topology: tpu7x:2x2x1
jax: 0.10.0
libtpu: 0.0.40
codegen_flags: <defaults>
</compile_context>

<pallas_src>
import jax
import jax.numpy as jnp
from jax.experimental import pallas as pl
from jax.experimental.pallas import tpu as pltpu

EPS = 1e-5
KSIZE = 5
PAD = 2

CONV_DIMS = [(1, 16), (16, 32), (32, 64), (64, 128)]
ACT_DTYPE = jnp.bfloat16          # weights + HBM-crossing activations


def _round_up(a, b):
    return (a + b - 1) // b * b


def _const_spec(arr):
    """Whole-array block with a constant index_map -> stays VMEM-resident."""
    nd = arr.ndim
    return pl.BlockSpec(arr.shape, lambda i: (0,) * nd)


# ----------------------------------------------------------------------------
# Kernel 1: fused conv stack (conv+BN+ReLU+pool x4, one sample per grid step)
# ----------------------------------------------------------------------------
def _store_padded(buf, val, p):
    """Write an activation into the interior of a zero-padded scratch buffer."""
    c = val.shape[-1]
    zeros = jnp.zeros((PAD, c), buf.dtype)
    buf[pl.ds(0, PAD), :] = zeros
    buf[pl.ds(PAD, p), :] = val.astype(buf.dtype)
    buf[pl.ds(PAD + p, PAD), :] = zeros


def _conv_bn_relu_pool_mxu(in_buf, w_ref, b_ref, p_out, c_out):
    """Conv1d(k=5,pad=2) as 5 shifted matmuls + bias + ReLU + MaxPool1d(2).

    Even / odd conv-output rows are accumulated as two strided streams so the
    pool is a single jnp.maximum (no deinterleave / im2col materialization).

    in_buf: VMEM scratch ref, (p_in + 2*PAD, c_in) f32, zero padded.
    w_ref : (KSIZE, c_in, c_out) bf16 (BN-folded).
    b_ref : (1, c_out) f32 (BN-folded).
    """
    ye = jnp.zeros((p_out, c_out), jnp.float32)
    yo = jnp.zeros((p_out, c_out), jnp.float32)
    for k in range(KSIZE):
        wk = w_ref[k]                                           # (c_in, c_out)
        xe = in_buf[pl.ds(k, p_out, stride=2), :]               # conv rows 2m
        xo = in_buf[pl.ds(k + 1, p_out, stride=2), :]           # conv rows 2m+1
        ye = ye + jnp.dot(xe.astype(ACT_DTYPE), wk,
                          preferred_element_type=jnp.float32)
        yo = yo + jnp.dot(xo.astype(ACT_DTYPE), wk,
                          preferred_element_type=jnp.float32)
    b = b_ref[...]
    return jnp.maximum(jnp.maximum(ye + b, 0.0), jnp.maximum(yo + b, 0.0))


def make_conv_stack_kernel(p1, p2, p3, p4):
    c1, c2, c3, c4 = [c for _, c in CONV_DIMS]

    def kernel(x_ref, w1_ref, b1_ref, w2_ref, b2_ref, w3_ref, b3_ref,
               w4_ref, b4_ref, o_ref, a1_buf, a2_buf, a3_buf):
        # Block 1: Cin == 1 -> VPU broadcast-FMA path (MXU would be ~all pad).
        ye = jnp.zeros((p1, c1), jnp.float32)
        yo = jnp.zeros((p1, c1), jnp.float32)
        for k in range(KSIZE):
            wk = w1_ref[pl.ds(k, 1), :]                         # (1, c1)
            ye = ye + x_ref[pl.ds(k, p1, stride=2), :] * wk     # (p1,1)*(1,c1)
            yo = yo + x_ref[pl.ds(k + 1, p1, stride=2), :] * wk
        b1 = b1_ref[...]
        pooled = jnp.maximum(jnp.maximum(ye + b1, 0.0),
                             jnp.maximum(yo + b1, 0.0))
        _store_padded(a1_buf, pooled, p1)

        # Blocks 2-4: bf16 MXU matmuls, f32 accumulation, VMEM-resident acts.
        pooled = _conv_bn_relu_pool_mxu(a1_buf, w2_ref, b2_ref, p2, c2)
        _store_padded(a2_buf, pooled, p2)
        pooled = _conv_bn_relu_pool_mxu(a2_buf, w3_ref, b3_ref, p3, c3)
        _store_padded(a3_buf, pooled, p3)
        pooled = _conv_bn_relu_pool_mxu(a3_buf, w4_ref, b4_ref, p4, c4)
        o_ref[...] = pooled.astype(o_ref.dtype)                 # lane-dense (p4, 128)

    return kernel


def conv_stack(x_nl, conv_params):
    """x_nl: (N, L) f32 -> (N, L//16, 128) bf16 channel-last pooled features."""
    n, l = x_nl.shape
    p1, p2, p3, p4 = l // 2, l // 4, l // 8, l // 16   # == repeated floor pools
    c1, c2, c3, c4 = [c for _, c in CONV_DIMS]

    xp = jnp.pad(x_nl, ((0, 0), (PAD, PAD)))[..., None]         # (N, L+4, 1) f32

    (w1, b1), (w2, b2), (w3, b3), (w4, b4) = conv_params
    weights = (w1, b1, w2, b2, w3, b3, w4, b4)

    return pl.pallas_call(
        make_conv_stack_kernel(p1, p2, p3, p4),
        out_shape=jax.ShapeDtypeStruct((n, p4, c4), ACT_DTYPE),
        grid=(n,),
        in_specs=[pl.BlockSpec((None, l + 2 * PAD, 1), lambda b: (b, 0, 0))]
                 + [_const_spec(w) for w in weights],
        out_specs=pl.BlockSpec((None, p4, c4), lambda b: (b, 0, 0)),
        scratch_shapes=[pltpu.VMEM((p1 + 2 * PAD, c1), jnp.float32),
                        pltpu.VMEM((p2 + 2 * PAD, c2), jnp.float32),
                        pltpu.VMEM((p3 + 2 * PAD, c3), jnp.float32)],
        compiler_params=pltpu.CompilerParams(
            dimension_semantics=("parallel",)),
    )(xp, *weights)


# ----------------------------------------------------------------------------
# Kernel 2: fused fc1 + ReLU + fc2 + ReLU + fc3
# ----------------------------------------------------------------------------
def fc_stack_kernel(x_ref, w1_ref, b1_ref, w2_ref, b2_ref, w3_ref, b3_ref,
                    o_ref):
    h = jnp.dot(x_ref[...], w1_ref[...], preferred_element_type=jnp.float32)
    h = jnp.maximum(h + b1_ref[...], 0.0).astype(ACT_DTYPE)
    # TODO(synk): dropout1 (p=0.5) is identity in eval mode; not applied.
    h = jnp.dot(h, w2_ref[...], preferred_element_type=jnp.float32)
    h = jnp.maximum(h + b2_ref[...], 0.0).astype(ACT_DTYPE)
    # TODO(synk): dropout2 (p=0.3) is identity in eval mode; not applied.
    y = jnp.dot(h, w3_ref[...], preferred_element_type=jnp.float32) + b3_ref[...]
    o_ref[...] = y.astype(o_ref.dtype)


def fc_stack(x, fc_params):
    """x: (N, F) bf16 -> logits (N, 2) f32; fc1+fc2+fc3 fused in one kernel."""
    n, f = x.shape
    (w1, b1), (w2, b2), (w3, b3) = fc_params
    n_out = w3.shape[1]

    # Row tile: multiple of 8 sublanes, sized so a double-buffered bf16 input
    # tile stays ~<=2 MiB (fits v5e's 16 MiB default scoped VMEM alongside the
    # resident fc1 weight, and well inside v7x's 64 MiB physical VMEM).
    bytes_per_row = f * x.dtype.itemsize
    tm = max(8, min(128, (2 * 1024 * 1024 // max(bytes_per_row, 1)) // 8 * 8))
    tm = min(tm, _round_up(n, 8))
    n_pad = _round_up(n, tm)
    if n_pad != n:
        x = jnp.pad(x, ((0, n_pad - n), (0, 0)))

    out = pl.pallas_call(
        fc_stack_kernel,
        out_shape=jax.ShapeDtypeStruct((n_pad, n_out), jnp.float32),
        grid=(n_pad // tm,),
        in_specs=[pl.BlockSpec((tm, f), lambda i: (i, 0)),
                  _const_spec(w1), _const_spec(b1),
                  _const_spec(w2), _const_spec(b2),
                  _const_spec(w3), _const_spec(b3)],
        out_specs=pl.BlockSpec((tm, n_out), lambda i: (i, 0)),
        compiler_params=pltpu.CompilerParams(
            dimension_semantics=("parallel",)),
    )(x, w1, b1, w2, b2, w3, b3)
    return out[:n]


# ----------------------------------------------------------------------------
# Parameter preparation (BN folding, layout, dtype) and forward pass
# ----------------------------------------------------------------------------
def fold_conv_bn(w, b, gamma, beta, mean, var, dtype):
    """Fold eval-mode BatchNorm1d into the conv.

    w: (Cout, Cin, K) PyTorch layout -> (K, Cin, Cout) tap-major weight,
    plus (1, Cout) f32 bias.
    """
    scale = gamma / jnp.sqrt(var + EPS)
    w_eff = w * scale[:, None, None]
    b_eff = (b - mean) * scale + beta
    w_kio = jnp.transpose(w_eff, (2, 1, 0)).astype(dtype)
    return w_kio, b_eff.reshape(1, -1).astype(jnp.float32)


def prepare_params(params):
    conv = []
    for i in range(1, 5):
        dtype = jnp.float32 if i == 1 else ACT_DTYPE   # block 1 runs on the VPU
        w, b = fold_conv_bn(params[f"conv{i}_w"], params[f"conv{i}_b"],
                            params[f"bn{i}_gamma"], params[f"bn{i}_beta"],
                            params[f"bn{i}_mean"], params[f"bn{i}_var"], dtype)
        if i == 1:
            w = w.reshape(KSIZE, CONV_DIMS[0][1])      # Cin == 1 -> (5, 16)
        conv.append((w, b))
    fc = []
    for i in range(1, 4):
        fc.append((jnp.transpose(params[f"fc{i}_w"]).astype(ACT_DTYPE),
                   params[f"fc{i}_b"].reshape(1, -1).astype(jnp.float32)))
    return conv, fc


def ecg_classifier_forward(x_ncl, params):
    conv_p, fc_p = prepare_params(params)
    x = x_ncl[:, 0, :].astype(jnp.float32)             # (N, L); Cin == 1
    feats = conv_stack(x, conv_p)                      # (N, L//16, 128) bf16
    n, p4, c4 = feats.shape
    # Reproduce PyTorch x.view(N, -1) on (N, C, L): channel-major flatten.
    flat = jnp.transpose(feats, (0, 2, 1)).reshape(n, c4 * p4)
    return fc_stack(flat, fc_p)


# ----------------------------------------------------------------------------
# Parameter init (deterministic, PyTorch-like fan-in uniform)
# ----------------------------------------------------------------------------
def _uniform(key, shape, bound):
    return jax.random.uniform(key, shape, jnp.float32, -bound, bound)


def init_params(key, input_size):
    params = {}
    keys = iter(jax.random.split(key, 64))
    for i, (c_in, c_out) in enumerate(CONV_DIMS, start=1):
        bound = 1.0 / jnp.sqrt(c_in * KSIZE)
        params[f"conv{i}_w"] = _uniform(next(keys), (c_out, c_in, KSIZE), bound)
        params[f"conv{i}_b"] = _uniform(next(keys), (c_out,), bound)
        params[f"bn{i}_gamma"] = 1.0 + 0.1 * jax.random.normal(next(keys), (c_out,))
        params[f"bn{i}_beta"] = 0.1 * jax.random.normal(next(keys), (c_out,))
        params[f"bn{i}_mean"] = 0.1 * jax.random.normal(next(keys), (c_out,))
        params[f"bn{i}_var"] = 0.5 + jax.random.uniform(next(keys), (c_out,))
    fc_in = 128 * (input_size // 16)
    for i, (d_in, d_out) in enumerate([(fc_in, 256), (256, 64), (64, 2)], 1):
        bound = 1.0 / jnp.sqrt(d_in)
        params[f"fc{i}_w"] = _uniform(next(keys), (d_out, d_in), bound)
        params[f"fc{i}_b"] = _uniform(next(keys), (d_out,), bound)
    return params


if __name__ == "__main__":
    INPUT_SIZE = 64   # small stand-in for 2500
    BATCH = 2

    root = jax.random.PRNGKey(0)
    k_param, k_x = jax.random.split(root)
    params = init_params(k_param, INPUT_SIZE)
    x = jax.random.normal(k_x, (BATCH, 1, INPUT_SIZE), dtype=jnp.float32)

    fwd = jax.jit(lambda xx: ecg_classifier_forward(xx, params))
    logits = fwd(x)
    jax.block_until_ready(logits)
    assert logits.shape == (BATCH, 2), logits.shape
    assert bool(jnp.all(jnp.isfinite(logits)))
    print("KERNEL_OK")
</pallas_src>

<mosaic_0001>
module attributes {stable_mosaic.version = 11 : i64} {
  func.func @kernel(%arg0: i32, %arg1: memref<1x68x1xf32, #tpu.memory_space<vmem>>, %arg2: memref<5x16xf32, #tpu.memory_space<vmem>>, %arg3: memref<1x16xf32, #tpu.memory_space<vmem>>, %arg4: memref<5x16x32xbf16, #tpu.memory_space<vmem>>, %arg5: memref<1x32xf32, #tpu.memory_space<vmem>>, %arg6: memref<5x32x64xbf16, #tpu.memory_space<vmem>>, %arg7: memref<1x64xf32, #tpu.memory_space<vmem>>, %arg8: memref<5x64x128xbf16, #tpu.memory_space<vmem>>, %arg9: memref<1x128xf32, #tpu.memory_space<vmem>>, %arg10: memref<1x4x128xbf16, #tpu.memory_space<vmem>>, %arg11: memref<36x16xf32, #tpu.memory_space<vmem>>, %arg12: memref<20x32xf32, #tpu.memory_space<vmem>>, %arg13: memref<12x64xf32, #tpu.memory_space<vmem>>) attributes {dimension_semantics = [#tpu.dimension_semantics<parallel>], iteration_bounds = array<i64: 2>, scalar_prefetch = 0 : i64, scratch_operands = 3 : i64, tpu.core_type = #tpu.core_type<tc>, window_params = [{transform_indices = @transform_0, window_bounds = array<i64: 1, 68, 1>}, {pipeline_mode = #tpu.pipeline_mode<synchronous>, transform_indices = @transform_1, window_bounds = array<i64: 5, 16>}, {pipeline_mode = #tpu.pipeline_mode<synchronous>, transform_indices = @transform_2, window_bounds = array<i64: 1, 16>}, {pipeline_mode = #tpu.pipeline_mode<synchronous>, transform_indices = @transform_3, window_bounds = array<i64: 5, 16, 32>}, {pipeline_mode = #tpu.pipeline_mode<synchronous>, transform_indices = @transform_4, window_bounds = array<i64: 1, 32>}, {pipeline_mode = #tpu.pipeline_mode<synchronous>, transform_indices = @transform_5, window_bounds = array<i64: 5, 32, 64>}, {pipeline_mode = #tpu.pipeline_mode<synchronous>, transform_indices = @transform_6, window_bounds = array<i64: 1, 64>}, {pipeline_mode = #tpu.pipeline_mode<synchronous>, transform_indices = @transform_7, window_bounds = array<i64: 5, 64, 128>}, {pipeline_mode = #tpu.pipeline_mode<synchronous>, transform_indices = @transform_8, window_bounds = array<i64: 1, 128>}, {transform_indices = @transform_9, window_bounds = array<i64: 1, 4, 128>}]} {
    %cst = arith.constant 0.000000e+00 : f32
    %0 = vector.broadcast %cst : f32 to vector<32x16xf32>
    %cst_0 = arith.constant 0.000000e+00 : f32
    %1 = vector.broadcast %cst_0 : f32 to vector<32x16xf32>
    %c0 = arith.constant 0 : index
    %c0_1 = arith.constant 0 : index
    %2 = vector.load %arg2[%c0, %c0_1] : memref<5x16xf32, #tpu.memory_space<vmem>>, vector<1x16xf32>
    %c0_2 = arith.constant 0 : index
    %c0_3 = arith.constant 0 : index
    %c0_4 = arith.constant 0 : index
    %3 = tpu.strided_load %arg1[%c0_2, %c0_3, %c0_4] {strides = array<i32: 1, 2, 1>} : memref<1x68x1xf32, #tpu.memory_space<vmem>>, vector<1x32x1xf32>
    %4 = vector.shape_cast %3 : vector<1x32x1xf32> to vector<32x1xf32>
    %5 = vector.broadcast %4 : vector<32x1xf32> to vector<32x16xf32>
    %6 = vector.broadcast %2 : vector<1x16xf32> to vector<32x16xf32>
    %7 = arith.mulf %5, %6 : vector<32x16xf32>
    %8 = arith.addf %0, %7 : vector<32x16xf32>
    %c0_5 = arith.constant 0 : index
    %c1 = arith.constant 1 : index
    %c0_6 = arith.constant 0 : index
    %9 = tpu.strided_load %arg1[%c0_5, %c1, %c0_6] {strides = array<i32: 1, 2, 1>} : memref<1x68x1xf32, #tpu.memory_space<vmem>>, vector<1x32x1xf32>
    %10 = vector.shape_cast %9 : vector<1x32x1xf32> to vector<32x1xf32>
    %11 = vector.broadcast %10 : vector<32x1xf32> to vector<32x16xf32>
    %12 = vector.broadcast %2 : vector<1x16xf32> to vector<32x16xf32>
    %13 = arith.mulf %11, %12 : vector<32x16xf32>
    %14 = arith.addf %1, %13 : vector<32x16xf32>
    %c1_7 = arith.constant 1 : index
    %c0_8 = arith.constant 0 : index
    %15 = vector.load %arg2[%c1_7, %c0_8] : memref<5x16xf32, #tpu.memory_space<vmem>>, vector<1x16xf32>
    %c0_9 = arith.constant 0 : index
    %c1_10 = arith.constant 1 : index
    %c0_11 = arith.constant 0 : index
    %16 = tpu.strided_load %arg1[%c0_9, %c1_10, %c0_11] {strides = array<i32: 1, 2, 1>} : memref<1x68x1xf32, #tpu.memory_space<vmem>>, vector<1x32x1xf32>
    %17 = vector.shape_cast %16 : vector<1x32x1xf32> to vector<32x1xf32>
    %18 = vector.broadcast %17 : vector<32x1xf32> to vector<32x16xf32>
    %19 = vector.broadcast %15 : vector<1x16xf32> to vector<32x16xf32>
    %20 = arith.mulf %18, %19 : vector<32x16xf32>
    %21 = arith.addf %8, %20 : vector<32x16xf32>
    %c0_12 = arith.constant 0 : index
    %c2 = arith.constant 2 : index
    %c0_13 = arith.constant 0 : index
    %22 = tpu.strided_load %arg1[%c0_12, %c2, %c0_13] {strides = array<i32: 1, 2, 1>} : memref<1x68x1xf32, #tpu.memory_space<vmem>>, vector<1x32x1xf32>
    %23 = vector.shape_cast %22 : vector<1x32x1xf32> to vector<32x1xf32>
    %24 = vector.broadcast %23 : vector<32x1xf32> to vector<32x16xf32>
    %25 = vector.broadcast %15 : vector<1x16xf32> to vector<32x16xf32>
    %26 = arith.mulf %24, %25 : vector<32x16xf32>
    %27 = arith.addf %14, %26 : vector<32x16xf32>
    %c2_14 = arith.constant 2 : index
    %c0_15 = arith.constant 0 : index
    %28 = vector.load %arg2[%c2_14, %c0_15] : memref<5x16xf32, #tpu.memory_space<vmem>>, vector<1x16xf32>
    %c0_16 = arith.constant 0 : index
    %c2_17 = arith.constant 2 : index
    %c0_18 = arith.constant 0 : index
    %29 = tpu.strided_load %arg1[%c0_16, %c2_17, %c0_18] {strides = array<i32: 1, 2, 1>} : memref<1x68x1xf32, #tpu.memory_space<vmem>>, vector<1x32x1xf32>
    %30 = vector.shape_cast %29 : vector<1x32x1xf32> to vector<32x1xf32>
    %31 = vector.broadcast %30 : vector<32x1xf32> to vector<32x16xf32>
    %32 = vector.broadcast %28 : vector<1x16xf32> to vector<32x16xf32>
    %33 = arith.mulf %31, %32 : vector<32x16xf32>
    %34 = arith.addf %21, %33 : vector<32x16xf32>
    %c0_19 = arith.constant 0 : index
    %c3 = arith.constant 3 : index
    %c0_20 = arith.constant 0 : index
    %35 = tpu.strided_load %arg1[%c0_19, %c3, %c0_20] {strides = array<i32: 1, 2, 1>} : memref<1x68x1xf32, #tpu.memory_space<vmem>>, vector<1x32x1xf32>
    %36 = vector.shape_cast %35 : vector<1x32x1xf32> to vector<32x1xf32>
    %37 = vector.broadcast %36 : vector<32x1xf32> to vector<32x16xf32>
    %38 = vector.broadcast %28 : vector<1x16xf32> to vector<32x16xf32>
    %39 = arith.mulf %37, %38 : vector<32x16xf32>
    %40 = arith.addf %27, %39 : vector<32x16xf32>
    %c3_21 = arith.constant 3 : index
    %c0_22 = arith.constant 0 : index
    %41 = vector.load %arg2[%c3_21, %c0_22] : memref<5x16xf32, #tpu.memory_space<vmem>>, vector<1x16xf32>
    %c0_23 = arith.constant 0 : index
    %c3_24 = arith.constant 3 : index
    %c0_25 = arith.constant 0 : index
    %42 = tpu.strided_load %arg1[%c0_23, %c3_24, %c0_25] {strides = array<i32: 1, 2, 1>} : memref<1x68x1xf32, #tpu.memory_space<vmem>>, vector<1x32x1xf32>
    %43 = vector.shape_cast %42 : vector<1x32x1xf32> to vector<32x1xf32>
    %44 = vector.broadcast %43 : vector<32x1xf32> to vector<32x16xf32>
    %45 = vector.broadcast %41 : vector<1x16xf32> to vector<32x16xf32>
    %46 = arith.mulf %44, %45 : vector<32x16xf32>
    %47 = arith.addf %34, %46 : vector<32x16xf32>
    %c0_26 = arith.constant 0 : index
    %c4 = arith.constant 4 : index
    %c0_27 = arith.constant 0 : index
    %48 = tpu.strided_load %arg1[%c0_26, %c4, %c0_27] {strides = array<i32: 1, 2, 1>} : memref<1x68x1xf32, #tpu.memory_space<vmem>>, vector<1x32x1xf32>
    %49 = vector.shape_cast %48 : vector<1x32x1xf32> to vector<32x1xf32>
    %50 = vector.broadcast %49 : vector<32x1xf32> to vector<32x16xf32>
    %51 = vector.broadcast %41 : vector<1x16xf32> to vector<32x16xf32>
    %52 = arith.mulf %50, %51 : vector<32x16xf32>
    %53 = arith.addf %40, %52 : vector<32x16xf32>
    %c4_28 = arith.constant 4 : index
    %c0_29 = arith.constant 0 : index
    %54 = vector.load %arg2[%c4_28, %c0_29] : memref<5x16xf32, #tpu.memory_space<vmem>>, vector<1x16xf32>
    %c0_30 = arith.constant 0 : index
    %c4_31 = arith.constant 4 : index
    %c0_32 = arith.constant 0 : index
    %55 = tpu.strided_load %arg1[%c0_30, %c4_31, %c0_32] {strides = array<i32: 1, 2, 1>} : memref<1x68x1xf32, #tpu.memory_space<vmem>>, vector<1x32x1xf32>
    %56 = vector.shape_cast %55 : vector<1x32x1xf32> to vector<32x1xf32>
    %57 = vector.broadcast %56 : vector<32x1xf32> to vector<32x16xf32>
    %58 = vector.broadcast %54 : vector<1x16xf32> to vector<32x16xf32>
    %59 = arith.mulf %57, %58 : vector<32x16xf32>
    %60 = arith.addf %47, %59 : vector<32x16xf32>
    %c0_33 = arith.constant 0 : index
    %c5 = arith.constant 5 : index
    %c0_34 = arith.constant 0 : index
    %61 = tpu.strided_load %arg1[%c0_33, %c5, %c0_34] {strides = array<i32: 1, 2, 1>} : memref<1x68x1xf32, #tpu.memory_space<vmem>>, vector<1x32x1xf32>
    %62 = vector.shape_cast %61 : vector<1x32x1xf32> to vector<32x1xf32>
    %63 = vector.broadcast %62 : vector<32x1xf32> to vector<32x16xf32>
    %64 = vector.broadcast %54 : vector<1x16xf32> to vector<32x16xf32>
    %65 = arith.mulf %63, %64 : vector<32x16xf32>
    %66 = arith.addf %53, %65 : vector<32x16xf32>
    %c0_35 = arith.constant 0 : index
    %c0_36 = arith.constant 0 : index
    %67 = vector.load %arg3[%c0_35, %c0_36] : memref<1x16xf32, #tpu.memory_space<vmem>>, vector<1x16xf32>
    %68 = vector.broadcast %67 : vector<1x16xf32> to vector<32x16xf32>
    %69 = arith.addf %60, %68 : vector<32x16xf32>
    %cst_37 = arith.constant 0.000000e+00 : f32
    %70 = vector.broadcast %cst_37 : f32 to vector<32x16xf32>
    %71 = arith.maximumf %69, %70 : vector<32x16xf32>
    %72 = vector.broadcast %67 : vector<1x16xf32> to vector<32x16xf32>
    %73 = arith.addf %66, %72 : vector<32x16xf32>
    %cst_38 = arith.constant 0.000000e+00 : f32
    %74 = vector.broadcast %cst_38 : f32 to vector<32x16xf32>
    %75 = arith.maximumf %73, %74 : vector<32x16xf32>
    %76 = arith.maximumf %71, %75 : vector<32x16xf32>
    %cst_39 = arith.constant 0.000000e+00 : f32
    %77 = vector.broadcast %cst_39 : f32 to vector<2x16xf32>
    %c0_40 = arith.constant 0 : index
    %c0_41 = arith.constant 0 : index
    %78 = vector.load %arg11[%c0_40, %c0_41] : memref<36x16xf32, #tpu.memory_space<vmem>>, vector<2x16xf32>
    tpu.vector_store %arg11[%c0_40, %c0_41], %77 {strides = array<i32>} : memref<36x16xf32, #tpu.memory_space<vmem>>, vector<2x16xf32>,
    %c2_42 = arith.constant 2 : index
    %c0_43 = arith.constant 0 : index
    %79 = vector.load %arg11[%c2_42, %c0_43] : memref<36x16xf32, #tpu.memory_space<vmem>>, vector<32x16xf32>
    tpu.vector_store %arg11[%c2_42, %c0_43], %76 {strides = array<i32>} : memref<36x16xf32, #tpu.memory_space<vmem>>, vector<32x16xf32>,
    %c34 = arith.constant 34 : index
    %c0_44 = arith.constant 0 : index
    %80 = vector.load %arg11[%c34, %c0_44] : memref<36x16xf32, #tpu.memory_space<vmem>>, vector<2x16xf32>
    tpu.vector_store %arg11[%c34, %c0_44], %77 {strides = array<i32>} : memref<36x16xf32, #tpu.memory_space<vmem>>, vector<2x16xf32>,
    %cst_45 = arith.constant 0.000000e+00 : f32
    %81 = vector.broadcast %cst_45 : f32 to vector<16x32xf32>
    %cst_46 = arith.constant 0.000000e+00 : f32
    %82 = vector.broadcast %cst_46 : f32 to vector<16x32xf32>
    %c0_47 = arith.constant 0 : index
    %c0_48 = arith.constant 0 : index
    %c0_49 = arith.constant 0 : index
    %83 = vector.load %arg4[%c0_47, %c0_48, %c0_49] : memref<5x16x32xbf16, #tpu.memory_space<vmem>>, vector<1x16x32xbf16>
    %84 = vector.shape_cast %83 : vector<1x16x32xbf16> to vector<16x32xbf16>
    %c0_50 = arith.constant 0 : index
    %c0_51 = arith.constant 0 : index
    %85 = tpu.strided_load %arg11[%c0_50, %c0_51] {strides = array<i32: 2, 1>} : memref<36x16xf32, #tpu.memory_space<vmem>>, vector<16x16xf32>
    %c1_52 = arith.constant 1 : index
    %c0_53 = arith.constant 0 : index
    %86 = tpu.strided_load %arg11[%c1_52, %c0_53] {strides = array<i32: 2, 1>} : memref<36x16xf32, #tpu.memory_space<vmem>>, vector<16x16xf32>
    %87 = arith.truncf %85 : vector<16x16xf32> to vector<16x16xbf16>
    %cst_54 = arith.constant dense<0.000000e+00> : vector<16x32xf32>
    %88 = tpu.matmul %87, %84, %cst_54 {dimension_numbers = #tpu.dot_dimension_numbers<[1], [0], [0], [1], [0, 0, 1, 1], [], []>} : vector<16x16xbf16>, vector<16x32xbf16>, vector<16x32xf32> -> vector<16x32xf32>
    %89 = arith.addf %81, %88 : vector<16x32xf32>
    %90 = arith.truncf %86 : vector<16x16xf32> to vector<16x16xbf16>
    %cst_55 = arith.constant dense<0.000000e+00> : vector<16x32xf32>
    %91 = tpu.matmul %90, %84, %cst_55 {dimension_numbers = #tpu.dot_dimension_numbers<[1], [0], [0], [1], [0, 0, 1, 1], [], []>} : vector<16x16xbf16>, vector<16x32xbf16>, vector<16x32xf32> -> vector<16x32xf32>
    %92 = arith.addf %82, %91 : vector<16x32xf32>
    %c1_56 = arith.constant 1 : index
    %c0_57 = arith.constant 0 : index
    %c0_58 = arith.constant 0 : index
    %93 = vector.load %arg4[%c1_56, %c0_57, %c0_58] : memref<5x16x32xbf16, #tpu.memory_space<vmem>>, vector<1x16x32xbf16>
    %94 = vector.shape_cast %93 : vector<1x16x32xbf16> to vector<16x32xbf16>
    %c1_59 = arith.constant 1 : index
    %c0_60 = arith.constant 0 : index
    %95 = tpu.strided_load %arg11[%c1_59, %c0_60] {strides = array<i32: 2, 1>} : memref<36x16xf32, #tpu.memory_space<vmem>>, vector<16x16xf32>
    %c2_61 = arith.constant 2 : index
    %c0_62 = arith.constant 0 : index
    %96 = tpu.strided_load %arg11[%c2_61, %c0_62] {strides = array<i32: 2, 1>} : memref<36x16xf32, #tpu.memory_space<vmem>>, vector<16x16xf32>
    %97 = arith.truncf %95 : vector<16x16xf32> to vector<16x16xbf16>
    %cst_63 = arith.constant dense<0.000000e+00> : vector<16x32xf32>
    %98 = tpu.matmul %97, %94, %cst_63 {dimension_numbers = #tpu.dot_dimension_numbers<[1], [0], [0], [1], [0, 0, 1, 1], [], []>} : vector<16x16xbf16>, vector<16x32xbf16>, vector<16x32xf32> -> vector<16x32xf32>
    %99 = arith.addf %89, %98 : vector<16x32xf32>
    %100 = arith.truncf %96 : vector<16x16xf32> to vector<16x16xbf16>
    %cst_64 = arith.constant dense<0.000000e+00> : vector<16x32xf32>
    %101 = tpu.matmul %100, %94, %cst_64 {dimension_numbers = #tpu.dot_dimension_numbers<[1], [0], [0], [1], [0, 0, 1, 1], [], []>} : vector<16x16xbf16>, vector<16x32xbf16>, vector<16x32xf32> -> vector<16x32xf32>
    %102 = arith.addf %92, %101 : vector<16x32xf32>
    %c2_65 = arith.constant 2 : index
    %c0_66 = arith.constant 0 : index
    %c0_67 = arith.constant 0 : index
    %103 = vector.load %arg4[%c2_65, %c0_66, %c0_67] : memref<5x16x32xbf16, #tpu.memory_space<vmem>>, vector<1x16x32xbf16>
    %104 = vector.shape_cast %103 : vector<1x16x32xbf16> to vector<16x32xbf16>
    %c2_68 = arith.constant 2 : index
    %c0_69 = arith.constant 0 : index
    %105 = tpu.strided_load %arg11[%c2_68, %c0_69] {strides = array<i32: 2, 1>} : memref<36x16xf32, #tpu.memory_space<vmem>>, vector<16x16xf32>
    %c3_70 = arith.constant 3 : index
    %c0_71 = arith.constant 0 : index
    %106 = tpu.strided_load %arg11[%c3_70, %c0_71] {strides = array<i32: 2, 1>} : memref<36x16xf32, #tpu.memory_space<vmem>>, vector<16x16xf32>
    %107 = arith.truncf %105 : vector<16x16xf32> to vector<16x16xbf16>
    %cst_72 = arith.constant dense<0.000000e+00> : vector<16x32xf32>
    %108 = tpu.matmul %107, %104, %cst_72 {dimension_numbers = #tpu.dot_dimension_numbers<[1], [0], [0], [1], [0, 0, 1, 1], [], []>} : vector<16x16xbf16>, vector<16x32xbf16>, vector<16x32xf32> -> vector<16x32xf32>
    %109 = arith.addf %99, %108 : vector<16x32xf32>
    %110 = arith.truncf %106 : vector<16x16xf32> to vector<16x16xbf16>
    %cst_73 = arith.constant dense<0.000000e+00> : vector<16x32xf32>
    %111 = tpu.matmul %110, %104, %cst_73 {dimension_numbers = #tpu.dot_dimension_numbers<[1], [0], [0], [1], [0, 0, 1, 1], [], []>} : vector<16x16xbf16>, vector<16x32xbf16>, vector<16x32xf32> -> vector<16x32xf32>
    %112 = arith.addf %102, %111 : vector<16x32xf32>
    %c3_74 = arith.constant 3 : index
    %c0_75 = arith.constant 0 : index
    %c0_76 = arith.constant 0 : index
    %113 = vector.load %arg4[%c3_74, %c0_75, %c0_76] : memref<5x16x32xbf16, #tpu.memory_space<vmem>>, vector<1x16x32xbf16>
    %114 = vector.shape_cast %113 : vector<1x16x32xbf16> to vector<16x32xbf16>
    %c3_77 = arith.constant 3 : index
    %c0_78 = arith.constant 0 : index
    %115 = tpu.strided_load %arg11[%c3_77, %c0_78] {strides = array<i32: 2, 1>} : memref<36x16xf32, #tpu.memory_space<vmem>>, vector<16x16xf32>
    %c4_79 = arith.constant 4 : index
    %c0_80 = arith.constant 0 : index
    %116 = tpu.strided_load %arg11[%c4_79, %c0_80] {strides = array<i32: 2, 1>} : memref<36x16xf32, #tpu.memory_space<vmem>>, vector<16x16xf32>
    %117 = arith.truncf %115 : vector<16x16xf32> to vector<16x16xbf16>
    %cst_81 = arith.constant dense<0.000000e+00> : vector<16x32xf32>
    %118 = tpu.matmul %117, %114, %cst_81 {dimension_numbers = #tpu.dot_dimension_numbers<[1], [0], [0], [1], [0, 0, 1, 1], [], []>} : vector<16x16xbf16>, vector<16x32xbf16>, vector<16x32xf32> -> vector<16x32xf32>
    %119 = arith.addf %109, %118 : vector<16x32xf32>
    %120 = arith.truncf %116 : vector<16x16xf32> to vector<16x16xbf16>
    %cst_82 = arith.constant dense<0.000000e+00> : vector<16x32xf32>
    %121 = tpu.matmul %120, %114, %cst_82 {dimension_numbers = #tpu.dot_dimension_numbers<[1], [0], [0], [1], [0, 0, 1, 1], [], []>} : vector<16x16xbf16>, vector<16x32xbf16>, vector<16x32xf32> -> vector<16x32xf32>
    %122 = arith.addf %112, %121 : vector<16x32xf32>
    %c4_83 = arith.constant 4 : index
    %c0_84 = arith.constant 0 : index
    %c0_85 = arith.constant 0 : index
    %123 = vector.load %arg4[%c4_83, %c0_84, %c0_85] : memref<5x16x32xbf16, #tpu.memory_space<vmem>>, vector<1x16x32xbf16>
    %124 = vector.shape_cast %123 : vector<1x16x32xbf16> to vector<16x32xbf16>
    %c4_86 = arith.constant 4 : index
    %c0_87 = arith.constant 0 : index
    %125 = tpu.strided_load %arg11[%c4_86, %c0_87] {strides = array<i32: 2, 1>} : memref<36x16xf32, #tpu.memory_space<vmem>>, vector<16x16xf32>
    %c5_88 = arith.constant 5 : index
    %c0_89 = arith.constant 0 : index
    %126 = tpu.strided_load %arg11[%c5_88, %c0_89] {strides = array<i32: 2, 1>} : memref<36x16xf32, #tpu.memory_space<vmem>>, vector<16x16xf32>
    %127 = arith.truncf %125 : vector<16x16xf32> to vector<16x16xbf16>
    %cst_90 = arith.constant dense<0.000000e+00> : vector<16x32xf32>
    %128 = tpu.matmul %127, %124, %cst_90 {dimension_numbers = #tpu.dot_dimension_numbers<[1], [0], [0], [1], [0, 0, 1, 1], [], []>} : vector<16x16xbf16>, vector<16x32xbf16>, vector<16x32xf32> -> vector<16x32xf32>
    %129 = arith.addf %119, %128 : vector<16x32xf32>
    %130 = arith.truncf %126 : vector<16x16xf32> to vector<16x16xbf16>
    %cst_91 = arith.constant dense<0.000000e+00> : vector<16x32xf32>
    %131 = tpu.matmul %130, %124, %cst_91 {dimension_numbers = #tpu.dot_dimension_numbers<[1], [0], [0], [1], [0, 0, 1, 1], [], []>} : vector<16x16xbf16>, vector<16x32xbf16>, vector<16x32xf32> -> vector<16x32xf32>
    %132 = arith.addf %122, %131 : vector<16x32xf32>
    %c0_92 = arith.constant 0 : index
    %c0_93 = arith.constant 0 : index
    %133 = vector.load %arg5[%c0_92, %c0_93] : memref<1x32xf32, #tpu.memory_space<vmem>>, vector<1x32xf32>
    %134 = vector.broadcast %133 : vector<1x32xf32> to vector<16x32xf32>
    %135 = arith.addf %129, %134 : vector<16x32xf32>
    %cst_94 = arith.constant 0.000000e+00 : f32
    %136 = vector.broadcast %cst_94 : f32 to vector<16x32xf32>
    %137 = arith.maximumf %135, %136 : vector<16x32xf32>
    %138 = vector.broadcast %133 : vector<1x32xf32> to vector<16x32xf32>
    %139 = arith.addf %132, %138 : vector<16x32xf32>
    %cst_95 = arith.constant 0.000000e+00 : f32
    %140 = vector.broadcast %cst_95 : f32 to vector<16x32xf32>
    %141 = arith.maximumf %139, %140 : vector<16x32xf32>
    %142 = arith.maximumf %137, %141 : vector<16x32xf32>
    %cst_96 = arith.constant 0.000000e+00 : f32
    %143 = vector.broadcast %cst_96 : f32 to vector<2x32xf32>
    %c0_97 = arith.constant 0 : index
    %c0_98 = arith.constant 0 : index
    %144 = vector.load %arg12[%c0_97, %c0_98] : memref<20x32xf32, #tpu.memory_space<vmem>>, vector<2x32xf32>
    tpu.vector_store %arg12[%c0_97, %c0_98], %143 {strides = array<i32>} : memref<20x32xf32, #tpu.memory_space<vmem>>, vector<2x32xf32>,
    %c2_99 = arith.constant 2 : index
    %c0_100 = arith.constant 0 : index
    %145 = vector.load %arg12[%c2_99, %c0_100] : memref<20x32xf32, #tpu.memory_space<vmem>>, vector<16x32xf32>
    tpu.vector_store %arg12[%c2_99, %c0_100], %142 {strides = array<i32>} : memref<20x32xf32, #tpu.memory_space<vmem>>, vector<16x32xf32>,
    %c18 = arith.constant 18 : index
    %c0_101 = arith.constant 0 : index
    %146 = vector.load %arg12[%c18, %c0_101] : memref<20x32xf32, #tpu.memory_space<vmem>>, vector<2x32xf32>
    tpu.vector_store %arg12[%c18, %c0_101], %143 {strides = array<i32>} : memref<20x32xf32, #tpu.memory_space<vmem>>, vector<2x32xf32>,
    %cst_102 = arith.constant 0.000000e+00 : f32
    %147 = vector.broadcast %cst_102 : f32 to vector<8x64xf32>
    %cst_103 = arith.constant 0.000000e+00 : f32
    %148 = vector.broadcast %cst_103 : f32 to vector<8x64xf32>
    %c0_104 = arith.constant 0 : index
    %c0_105 = arith.constant 0 : index
    %c0_106 = arith.constant 0 : index
    %149 = vector.load %arg6[%c0_104, %c0_105, %c0_106] : memref<5x32x64xbf16, #tpu.memory_space<vmem>>, vector<1x32x64xbf16>
    %150 = vector.shape_cast %149 : vector<1x32x64xbf16> to vector<32x64xbf16>
    %c0_107 = arith.constant 0 : index
    %c0_108 = arith.constant 0 : index
    %151 = tpu.strided_load %arg12[%c0_107, %c0_108] {strides = array<i32: 2, 1>} : memref<20x32xf32, #tpu.memory_space<vmem>>, vector<8x32xf32>
    %c1_109 = arith.constant 1 : index
    %c0_110 = arith.constant 0 : index
    %152 = tpu.strided_load %arg12[%c1_109, %c0_110] {strides = array<i32: 2, 1>} : memref<20x32xf32, #tpu.memory_space<vmem>>, vector<8x32xf32>
    %153 = arith.truncf %151 : vector<8x32xf32> to vector<8x32xbf16>
    %cst_111 = arith.constant dense<0.000000e+00> : vector<8x64xf32>
    %154 = tpu.matmul %153, %150, %cst_111 {dimension_numbers = #tpu.dot_dimension_numbers<[1], [0], [0], [1], [0, 0, 1, 1], [], []>} : vector<8x32xbf16>, vector<32x64xbf16>, vector<8x64xf32> -> vector<8x64xf32>
    %155 = arith.addf %147, %154 : vector<8x64xf32>
    %156 = arith.truncf %152 : vector<8x32xf32> to vector<8x32xbf16>
    %cst_112 = arith.constant dense<0.000000e+00> : vector<8x64xf32>
    %157 = tpu.matmul %156, %150, %cst_112 {dimension_numbers = #tpu.dot_dimension_numbers<[1], [0], [0], [1], [0, 0, 1, 1], [], []>} : vector<8x32xbf16>, vector<32x64xbf16>, vector<8x64xf32> -> vector<8x64xf32>
    %158 = arith.addf %148, %157 : vector<8x64xf32>
    %c1_113 = arith.constant 1 : index
    %c0_114 = arith.constant 0 : index
    %c0_115 = arith.constant 0 : index
    %159 = vector.load %arg6[%c1_113, %c0_114, %c0_115] : memref<5x32x64xbf16, #tpu.memory_space<vmem>>, vector<1x32x64xbf16>
    %160 = vector.shape_cast %159 : vector<1x32x64xbf16> to vector<32x64xbf16>
    %c1_116 = arith.constant 1 : index
    %c0_117 = arith.constant 0 : index
    %161 = tpu.strided_load %arg12[%c1_116, %c0_117] {strides = array<i32: 2, 1>} : memref<20x32xf32, #tpu.memory_space<vmem>>, vector<8x32xf32>
    %c2_118 = arith.constant 2 : index
    %c0_119 = arith.constant 0 : index
    %162 = tpu.strided_load %arg12[%c2_118, %c0_119] {strides = array<i32: 2, 1>} : memref<20x32xf32, #tpu.memory_space<vmem>>, vector<8x32xf32>
    %163 = arith.truncf %161 : vector<8x32xf32> to vector<8x32xbf16>
    %cst_120 = arith.constant dense<0.000000e+00> : vector<8x64xf32>
    %164 = tpu.matmul %163, %160, %cst_120 {dimension_numbers = #tpu.dot_dimension_numbers<[1], [0], [0], [1], [0, 0, 1, 1], [], []>} : vector<8x32xbf16>, vector<32x64xbf16>, vector<8x64xf32> -> vector<8x64xf32>
    %165 = arith.addf %155, %164 : vector<8x64xf32>
    %166 = arith.truncf %162 : vector<8x32xf32> to vector<8x32xbf16>
    %cst_121 = arith.constant dense<0.000000e+00> : vector<8x64xf32>
    %167 = tpu.matmul %166, %160, %cst_121 {dimension_numbers = #tpu.dot_dimension_numbers<[1], [0], [0], [1], [0, 0, 1, 1], [], []>} : vector<8x32xbf16>, vector<32x64xbf16>, vector<8x64xf32> -> vector<8x64xf32>
    %168 = arith.addf %158, %167 : vector<8x64xf32>
    %c2_122 = arith.constant 2 : index
    %c0_123 = arith.constant 0 : index
    %c0_124 = arith.constant 0 : index
    %169 = vector.load %arg6[%c2_122, %c0_123, %c0_124] : memref<5x32x64xbf16, #tpu.memory_space<vmem>>, vector<1x32x64xbf16>
    %170 = vector.shape_cast %169 : vector<1x32x64xbf16> to vector<32x64xbf16>
    %c2_125 = arith.constant 2 : index
    %c0_126 = arith.constant 0 : index
    %171 = tpu.strided_load %arg12[%c2_125, %c0_126] {strides = array<i32: 2, 1>} : memref<20x32xf32, #tpu.memory_space<vmem>>, vector<8x32xf32>
    %c3_127 = arith.constant 3 : index
    %c0_128 = arith.constant 0 : index
    %172 = tpu.strided_load %arg12[%c3_127, %c0_128] {strides = array<i32: 2, 1>} : memref<20x32xf32, #tpu.memory_space<vmem>>, vector<8x32xf32>
    %173 = arith.truncf %171 : vector<8x32xf32> to vector<8x32xbf16>
    %cst_129 = arith.constant dense<0.000000e+00> : vector<8x64xf32>
    %174 = tpu.matmul %173, %170, %cst_129 {dimension_numbers = #tpu.dot_dimension_numbers<[1], [0], [0], [1], [0, 0, 1, 1], [], []>} : vector<8x32xbf16>, vector<32x64xbf16>, vector<8x64xf32> -> vector<8x64xf32>
    %175 = arith.addf %165, %174 : vector<8x64xf32>
    %176 = arith.truncf %172 : vector<8x32xf32> to vector<8x32xbf16>
    %cst_130 = arith.constant dense<0.000000e+00> : vector<8x64xf32>
    %177 = tpu.matmul %176, %170, %cst_130 {dimension_numbers = #tpu.dot_dimension_numbers<[1], [0], [0], [1], [0, 0, 1, 1], [], []>} : vector<8x32xbf16>, vector<32x64xbf16>, vector<8x64xf32> -> vector<8x64xf32>
    %178 = arith.addf %168, %177 : vector<8x64xf32>
    %c3_131 = arith.constant 3 : index
    %c0_132 = arith.constant 0 : index
    %c0_133 = arith.constant 0 : index
    %179 = vector.load %arg6[%c3_131, %c0_132, %c0_133] : memref<5x32x64xbf16, #tpu.memory_space<vmem>>, vector<1x32x64xbf16>
    %180 = vector.shape_cast %179 : vector<1x32x64xbf16> to vector<32x64xbf16>
    %c3_134 = arith.constant 3 : index
    %c0_135 = arith.constant 0 : index
    %181 = tpu.strided_load %arg12[%c3_134, %c0_135] {strides = array<i32: 2, 1>} : memref<20x32xf32, #tpu.memory_space<vmem>>, vector<8x32xf32>
    %c4_136 = arith.constant 4 : index
    %c0_137 = arith.constant 0 : index
    %182 = tpu.strided_load %arg12[%c4_136, %c0_137] {strides = array<i32: 2, 1>} : memref<20x32xf32, #tpu.memory_space<vmem>>, vector<8x32xf32>
    %183 = arith.truncf %181 : vector<8x32xf32> to vector<8x32xbf16>
    %cst_138 = arith.constant dense<0.000000e+00> : vector<8x64xf32>
    %184 = tpu.matmul %183, %180, %cst_138 {dimension_numbers = #tpu.dot_dimension_numbers<[1], [0], [0], [1], [0, 0, 1, 1], [], []>} : vector<8x32xbf16>, vector<32x64xbf16>, vector<8x64xf32> -> vector<8x64xf32>
    %185 = arith.addf %175, %184 : vector<8x64xf32>
    %186 = arith.truncf %182 : vector<8x32xf32> to vector<8x32xbf16>
    %cst_139 = arith.constant dense<0.000000e+00> : vector<8x64xf32>
    %187 = tpu.matmul %186, %180, %cst_139 {dimension_numbers = #tpu.dot_dimension_numbers<[1], [0], [0], [1], [0, 0, 1, 1], [], []>} : vector<8x32xbf16>, vector<32x64xbf16>, vector<8x64xf32> -> vector<8x64xf32>
    %188 = arith.addf %178, %187 : vector<8x64xf32>
    %c4_140 = arith.constant 4 : index
    %c0_141 = arith.constant 0 : index
    %c0_142 = arith.constant 0 : index
    %189 = vector.load %arg6[%c4_140, %c0_141, %c0_142] : memref<5x32x64xbf16, #tpu.memory_space<vmem>>, vector<1x32x64xbf16>
    %190 = vector.shape_cast %189 : vector<1x32x64xbf16> to vector<32x64xbf16>
    %c4_143 = arith.constant 4 : index
    %c0_144 = arith.constant 0 : index
    %191 = tpu.strided_load %arg12[%c4_143, %c0_144] {strides = array<i32: 2, 1>} : memref<20x32xf32, #tpu.memory_space<vmem>>, vector<8x32xf32>
    %c5_145 = arith.constant 5 : index
    %c0_146 = arith.constant 0 : index
    %192 = tpu.strided_load %arg12[%c5_145, %c0_146] {strides = array<i32: 2, 1>} : memref<20x32xf32, #tpu.memory_space<vmem>>, vector<8x32xf32>
    %193 = arith.truncf %191 : vector<8x32xf32> to vector<8x32xbf16>
    %cst_147 = arith.constant dense<0.000000e+00> : vector<8x64xf32>
    %194 = tpu.matmul %193, %190, %cst_147 {dimension_numbers = #tpu.dot_dimension_numbers<[1], [0], [0], [1], [0, 0, 1, 1], [], []>} : vector<8x32xbf16>, vector<32x64xbf16>, vector<8x64xf32> -> vector<8x64xf32>
    %195 = arith.addf %185, %194 : vector<8x64xf32>
    %196 = arith.truncf %192 : vector<8x32xf32> to vector<8x32xbf16>
    %cst_148 = arith.constant dense<0.000000e+00> : vector<8x64xf32>
    %197 = tpu.matmul %196, %190, %cst_148 {dimension_numbers = #tpu.dot_dimension_numbers<[1], [0], [0], [1], [0, 0, 1, 1], [], []>} : vector<8x32xbf16>, vector<32x64xbf16>, vector<8x64xf32> -> vector<8x64xf32>
    %198 = arith.addf %188, %197 : vector<8x64xf32>
    %c0_149 = arith.constant 0 : index
    %c0_150 = arith.constant 0 : index
    %199 = vector.load %arg7[%c0_149, %c0_150] : memref<1x64xf32, #tpu.memory_space<vmem>>, vector<1x64xf32>
    %200 = vector.broadcast %199 : vector<1x64xf32> to vector<8x64xf32>
    %201 = arith.addf %195, %200 : vector<8x64xf32>
    %cst_151 = arith.constant 0.000000e+00 : f32
    %202 = vector.broadcast %cst_151 : f32 to vector<8x64xf32>
    %203 = arith.maximumf %201, %202 : vector<8x64xf32>
    %204 = vector.broadcast %199 : vector<1x64xf32> to vector<8x64xf32>
    %205 = arith.addf %198, %204 : vector<8x64xf32>
    %cst_152 = arith.constant 0.000000e+00 : f32
    %206 = vector.broadcast %cst_152 : f32 to vector<8x64xf32>
    %207 = arith.maximumf %205, %206 : vector<8x64xf32>
    %208 = arith.maximumf %203, %207 : vector<8x64xf32>
    %cst_153 = arith.constant 0.000000e+00 : f32
    %209 = vector.broadcast %cst_153 : f32 to vector<2x64xf32>
    %c0_154 = arith.constant 0 : index
    %c0_155 = arith.constant 0 : index
    %210 = vector.load %arg13[%c0_154, %c0_155] : memref<12x64xf32, #tpu.memory_space<vmem>>, vector<2x64xf32>
    tpu.vector_store %arg13[%c0_154, %c0_155], %209 {strides = array<i32>} : memref<12x64xf32, #tpu.memory_space<vmem>>, vector<2x64xf32>,
    %c2_156 = arith.constant 2 : index
    %c0_157 = arith.constant 0 : index
    %211 = vector.load %arg13[%c2_156, %c0_157] : memref<12x64xf32, #tpu.memory_space<vmem>>, vector<8x64xf32>
    tpu.vector_store %arg13[%c2_156, %c0_157], %208 {strides = array<i32>} : memref<12x64xf32, #tpu.memory_space<vmem>>, vector<8x64xf32>,
    %c10 = arith.constant 10 : index
    %c0_158 = arith.constant 0 : index
    %212 = vector.load %arg13[%c10, %c0_158] : memref<12x64xf32, #tpu.memory_space<vmem>>, vector<2x64xf32>
    tpu.vector_store %arg13[%c10, %c0_158], %209 {strides = array<i32>} : memref<12x64xf32, #tpu.memory_space<vmem>>, vector<2x64xf32>,
    %cst_159 = arith.constant 0.000000e+00 : f32
    %213 = vector.broadcast %cst_159 : f32 to vector<4x128xf32>
    %cst_160 = arith.constant 0.000000e+00 : f32
    %214 = vector.broadcast %cst_160 : f32 to vector<4x128xf32>
    %c0_161 = arith.constant 0 : index
    %c0_162 = arith.constant 0 : index
    %c0_163 = arith.constant 0 : index
    %215 = vector.load %arg8[%c0_161, %c0_162, %c0_163] : memref<5x64x128xbf16, #tpu.memory_space<vmem>>, vector<1x64x128xbf16>
    %216 = vector.shape_cast %215 : vector<1x64x128xbf16> to vector<64x128xbf16>
    %c0_164 = arith.constant 0 : index
    %c0_165 = arith.constant 0 : index
    %217 = tpu.strided_load %arg13[%c0_164, %c0_165] {strides = array<i32: 2, 1>} : memref<12x64xf32, #tpu.memory_space<vmem>>, vector<4x64xf32>
    %c1_166 = arith.constant 1 : index
    %c0_167 = arith.constant 0 : index
    %218 = tpu.strided_load %arg13[%c1_166, %c0_167] {strides = array<i32: 2, 1>} : memref<12x64xf32, #tpu.memory_space<vmem>>, vector<4x64xf32>
    %219 = arith.truncf %217 : vector<4x64xf32> to vector<4x64xbf16>
    %cst_168 = arith.constant dense<0.000000e+00> : vector<4x128xf32>
    %220 = tpu.matmul %219, %216, %cst_168 {dimension_numbers = #tpu.dot_dimension_numbers<[1], [0], [0], [1], [0, 0, 1, 1], [], []>} : vector<4x64xbf16>, vector<64x128xbf16>, vector<4x128xf32> -> vector<4x128xf32>
    %221 = arith.addf %213, %220 : vector<4x128xf32>
    %222 = arith.truncf %218 : vector<4x64xf32> to vector<4x64xbf16>
    %cst_169 = arith.constant dense<0.000000e+00> : vector<4x128xf32>
    %223 = tpu.matmul %222, %216, %cst_169 {dimension_numbers = #tpu.dot_dimension_numbers<[1], [0], [0], [1], [0, 0, 1, 1], [], []>} : vector<4x64xbf16>, vector<64x128xbf16>, vector<4x128xf32> -> vector<4x128xf32>
    %224 = arith.addf %214, %223 : vector<4x128xf32>
    %c1_170 = arith.constant 1 : index
    %c0_171 = arith.constant 0 : index
    %c0_172 = arith.constant 0 : index
    %225 = vector.load %arg8[%c1_170, %c0_171, %c0_172] : memref<5x64x128xbf16, #tpu.memory_space<vmem>>, vector<1x64x128xbf16>
    %226 = vector.shape_cast %225 : vector<1x64x128xbf16> to vector<64x128xbf16>
    %c1_173 = arith.constant 1 : index
    %c0_174 = arith.constant 0 : index
    %227 = tpu.strided_load %arg13[%c1_173, %c0_174] {strides = array<i32: 2, 1>} : memref<12x64xf32, #tpu.memory_space<vmem>>, vector<4x64xf32>
    %c2_175 = arith.constant 2 : index
    %c0_176 = arith.constant 0 : index
    %228 = tpu.strided_load %arg13[%c2_175, %c0_176] {strides = array<i32: 2, 1>} : memref<12x64xf32, #tpu.memory_space<vmem>>, vector<4x64xf32>
    %229 = arith.truncf %227 : vector<4x64xf32> to vector<4x64xbf16>
    %cst_177 = arith.constant dense<0.000000e+00> : vector<4x128xf32>
    %230 = tpu.matmul %229, %226, %cst_177 {dimension_numbers = #tpu.dot_dimension_numbers<[1], [0], [0], [1], [0, 0, 1, 1], [], []>} : vector<4x64xbf16>, vector<64x128xbf16>, vector<4x128xf32> -> vector<4x128xf32>
    %231 = arith.addf %221, %230 : vector<4x128xf32>
    %232 = arith.truncf %228 : vector<4x64xf32> to vector<4x64xbf16>
    %cst_178 = arith.constant dense<0.000000e+00> : vector<4x128xf32>
    %233 = tpu.matmul %232, %226, %cst_178 {dimension_numbers = #tpu.dot_dimension_numbers<[1], [0], [0], [1], [0, 0, 1, 1], [], []>} : vector<4x64xbf16>, vector<64x128xbf16>, vector<4x128xf32> -> vector<4x128xf32>
    %234 = arith.addf %224, %233 : vector<4x128xf32>
    %c2_179 = arith.constant 2 : index
    %c0_180 = arith.constant 0 : index
    %c0_181 = arith.constant 0 : index
    %235 = vector.load %arg8[%c2_179, %c0_180, %c0_181] : memref<5x64x128xbf16, #tpu.memory_space<vmem>>, vector<1x64x128xbf16>
    %236 = vector.shape_cast %235 : vector<1x64x128xbf16> to vector<64x128xbf16>
    %c2_182 = arith.constant 2 : index
    %c0_183 = arith.constant 0 : index
    %237 = tpu.strided_load %arg13[%c2_182, %c0_183] {strides = array<i32: 2, 1>} : memref<12x64xf32, #tpu.memory_space<vmem>>, vector<4x64xf32>
    %c3_184 = arith.constant 3 : index
    %c0_185 = arith.constant 0 : index
    %238 = tpu.strided_load %arg13[%c3_184, %c0_185] {strides = array<i32: 2, 1>} : memref<12x64xf32, #tpu.memory_space<vmem>>, vector<4x64xf32>
    %239 = arith.truncf %237 : vector<4x64xf32> to vector<4x64xbf16>
    %cst_186 = arith.constant dense<0.000000e+00> : vector<4x128xf32>
    %240 = tpu.matmul %239, %236, %cst_186 {dimension_numbers = #tpu.dot_dimension_numbers<[1], [0], [0], [1], [0, 0, 1, 1], [], []>} : vector<4x64xbf16>, vector<64x128xbf16>, vector<4x128xf32> -> vector<4x128xf32>
    %241 = arith.addf %231, %240 : vector<4x128xf32>
    %242 = arith.truncf %238 : vector<4x64xf32> to vector<4x64xbf16>
    %cst_187 = arith.constant dense<0.000000e+00> : vector<4x128xf32>
    %243 = tpu.matmul %242, %236, %cst_187 {dimension_numbers = #tpu.dot_dimension_numbers<[1], [0], [0], [1], [0, 0, 1, 1], [], []>} : vector<4x64xbf16>, vector<64x128xbf16>, vector<4x128xf32> -> vector<4x128xf32>
    %244 = arith.addf %234, %243 : vector<4x128xf32>
    %c3_188 = arith.constant 3 : index
    %c0_189 = arith.constant 0 : index
    %c0_190 = arith.constant 0 : index
    %245 = vector.load %arg8[%c3_188, %c0_189, %c0_190] : memref<5x64x128xbf16, #tpu.memory_space<vmem>>, vector<1x64x128xbf16>
    %246 = vector.shape_cast %245 : vector<1x64x128xbf16> to vector<64x128xbf16>
    %c3_191 = arith.constant 3 : index
    %c0_192 = arith.constant 0 : index
    %247 = tpu.strided_load %arg13[%c3_191, %c0_192] {strides = array<i32: 2, 1>} : memref<12x64xf32, #tpu.memory_space<vmem>>, vector<4x64xf32>
    %c4_193 = arith.constant 4 : index
    %c0_194 = arith.constant 0 : index
    %248 = tpu.strided_load %arg13[%c4_193, %c0_194] {strides = array<i32: 2, 1>} : memref<12x64xf32, #tpu.memory_space<vmem>>, vector<4x64xf32>
    %249 = arith.truncf %247 : vector<4x64xf32> to vector<4x64xbf16>
    %cst_195 = arith.constant dense<0.000000e+00> : vector<4x128xf32>
    %250 = tpu.matmul %249, %246, %cst_195 {dimension_numbers = #tpu.dot_dimension_numbers<[1], [0], [0], [1], [0, 0, 1, 1], [], []>} : vector<4x64xbf16>, vector<64x128xbf16>, vector<4x128xf32> -> vector<4x128xf32>
    %251 = arith.addf %241, %250 : vector<4x128xf32>
    %252 = arith.truncf %248 : vector<4x64xf32> to vector<4x64xbf16>
    %cst_196 = arith.constant dense<0.000000e+00> : vector<4x128xf32>
    %253 = tpu.matmul %252, %246, %cst_196 {dimension_numbers = #tpu.dot_dimension_numbers<[1], [0], [0], [1], [0, 0, 1, 1], [], []>} : vector<4x64xbf16>, vector<64x128xbf16>, vector<4x128xf32> -> vector<4x128xf32>
    %254 = arith.addf %244, %253 : vector<4x128xf32>
    %c4_197 = arith.constant 4 : index
    %c0_198 = arith.constant 0 : index
    %c0_199 = arith.constant 0 : index
    %255 = vector.load %arg8[%c4_197, %c0_198, %c0_199] : memref<5x64x128xbf16, #tpu.memory_space<vmem>>, vector<1x64x128xbf16>
    %256 = vector.shape_cast %255 : vector<1x64x128xbf16> to vector<64x128xbf16>
    %c4_200 = arith.constant 4 : index
    %c0_201 = arith.constant 0 : index
    %257 = tpu.strided_load %arg13[%c4_200, %c0_201] {strides = array<i32: 2, 1>} : memref<12x64xf32, #tpu.memory_space<vmem>>, vector<4x64xf32>
    %c5_202 = arith.constant 5 : index
    %c0_203 = arith.constant 0 : index
    %258 = tpu.strided_load %arg13[%c5_202, %c0_203] {strides = array<i32: 2, 1>} : memref<12x64xf32, #tpu.memory_space<vmem>>, vector<4x64xf32>
    %259 = arith.truncf %257 : vector<4x64xf32> to vector<4x64xbf16>
    %cst_204 = arith.constant dense<0.000000e+00> : vector<4x128xf32>
    %260 = tpu.matmul %259, %256, %cst_204 {dimension_numbers = #tpu.dot_dimension_numbers<[1], [0], [0], [1], [0, 0, 1, 1], [], []>} : vector<4x64xbf16>, vector<64x128xbf16>, vector<4x128xf32> -> vector<4x128xf32>
    %261 = arith.addf %251, %260 : vector<4x128xf32>
    %262 = arith.truncf %258 : vector<4x64xf32> to vector<4x64xbf16>
    %cst_205 = arith.constant dense<0.000000e+00> : vector<4x128xf32>
    %263 = tpu.matmul %262, %256, %cst_205 {dimension_numbers = #tpu.dot_dimension_numbers<[1], [0], [0], [1], [0, 0, 1, 1], [], []>} : vector<4x64xbf16>, vector<64x128xbf16>, vector<4x128xf32> -> vector<4x128xf32>
    %264 = arith.addf %254, %263 : vector<4x128xf32>
    %c0_206 = arith.constant 0 : index
    %c0_207 = arith.constant 0 : index
    %265 = vector.load %arg9[%c0_206, %c0_207] : memref<1x128xf32, #tpu.memory_space<vmem>>, vector<1x128xf32>
    %266 = vector.broadcast %265 : vector<1x128xf32> to vector<4x128xf32>
    %267 = arith.addf %261, %266 : vector<4x128xf32>
    %cst_208 = arith.constant 0.000000e+00 : f32
    %268 = vector.broadcast %cst_208 : f32 to vector<4x128xf32>
    %269 = arith.maximumf %267, %268 : vector<4x128xf32>
    %270 = vector.broadcast %265 : vector<1x128xf32> to vector<4x128xf32>
    %271 = arith.addf %264, %270 : vector<4x128xf32>
    %cst_209 = arith.constant 0.000000e+00 : f32
    %272 = vector.broadcast %cst_209 : f32 to vector<4x128xf32>
    %273 = arith.maximumf %271, %272 : vector<4x128xf32>
    %274 = arith.maximumf %269, %273 : vector<4x128xf32>
    %275 = arith.truncf %274 : vector<4x128xf32> to vector<4x128xbf16>
    %c0_210 = arith.constant 0 : index
    %c0_211 = arith.constant 0 : index
    %c0_212 = arith.constant 0 : index
    %276 = vector.load %arg10[%c0_210, %c0_211, %c0_212] : memref<1x4x128xbf16, #tpu.memory_space<vmem>>, vector<1x4x128xbf16>
    %277 = vector.shape_cast %276 : vector<1x4x128xbf16> to vector<4x128xbf16>
    %278 = vector.shape_cast %275 : vector<4x128xbf16> to vector<1x4x128xbf16>
    tpu.vector_store %arg10[%c0_210, %c0_211, %c0_212], %278 {strides = array<i32>} : memref<1x4x128xbf16, #tpu.memory_space<vmem>>, vector<1x4x128xbf16>,
    return
  }
  func.func @transform_0(%arg0: i32) -> (i32, i32, i32) {
    %c0_i32 = arith.constant 0 : i32
    %c0_i32_0 = arith.constant 0 : i32
    %c0_i32_1 = arith.constant 0 : i32
    return %arg0, %c0_i32, %c0_i32_0 : i32, i32, i32
  }
  func.func @transform_1(%arg0: i32) -> (i32, i32) {
    %c0_i32 = arith.constant 0 : i32
    %c0_i32_0 = arith.constant 0 : i32
    %c0_i32_1 = arith.constant 0 : i32
    return %c0_i32, %c0_i32_0 : i32, i32
  }
  func.func @transform_2(%arg0: i32) -> (i32, i32) {
    %c0_i32 = arith.constant 0 : i32
    %c0_i32_0 = arith.constant 0 : i32
    %c0_i32_1 = arith.constant 0 : i32
    return %c0_i32, %c0_i32_0 : i32, i32
  }
  func.func @transform_3(%arg0: i32) -> (i32, i32, i32) {
    %c0_i32 = arith.constant 0 : i32
    %c0_i32_0 = arith.constant 0 : i32
    %c0_i32_1 = arith.constant 0 : i32
    %c0_i32_2 = arith.constant 0 : i32
    return %c0_i32, %c0_i32_0, %c0_i32_1 : i32, i32, i32
  }
  func.func @transform_4(%arg0: i32) -> (i32, i32) {
    %c0_i32 = arith.constant 0 : i32
    %c0_i32_0 = arith.constant 0 : i32
    %c0_i32_1 = arith.constant 0 : i32
    return %c0_i32, %c0_i32_0 : i32, i32
  }
  func.func @transform_5(%arg0: i32) -> (i32, i32, i32) {
    %c0_i32 = arith.constant 0 : i32
    %c0_i32_0 = arith.constant 0 : i32
    %c0_i32_1 = arith.constant 0 : i32
    %c0_i32_2 = arith.constant 0 : i32
    return %c0_i32, %c0_i32_0, %c0_i32_1 : i32, i32, i32
  }
  func.func @transform_6(%arg0: i32) -> (i32, i32) {
    %c0_i32 = arith.constant 0 : i32
    %c0_i32_0 = arith.constant 0 : i32
    %c0_i32_1 = arith.constant 0 : i32
    return %c0_i32, %c0_i32_0 : i32, i32
  }
  func.func @transform_7(%arg0: i32) -> (i32, i32, i32) {
    %c0_i32 = arith.constant 0 : i32
    %c0_i32_0 = arith.constant 0 : i32
    %c0_i32_1 = arith.constant 0 : i32
    %c0_i32_2 = arith.constant 0 : i32
    return %c0_i32, %c0_i32_0, %c0_i32_1 : i32, i32, i32
  }
  func.func @transform_8(%arg0: i32) -> (i32, i32) {
    %c0_i32 = arith.constant 0 : i32
    %c0_i32_0 = arith.constant 0 : i32
    %c0_i32_1 = arith.constant 0 : i32
    return %c0_i32, %c0_i32_0 : i32, i32
  }
  func.func @transform_9(%arg0: i32) -> (i32, i32, i32) {
    %c0_i32 = arith.constant 0 : i32
    %c0_i32_0 = arith.constant 0 : i32
    %c0_i32_1 = arith.constant 0 : i32
    return %arg0, %c0_i32, %c0_i32_0 : i32, i32, i32
  }
}

module attributes {stable_mosaic.version = 11 : i64} {
  func.func @fc_stack_kernel(%arg0: i32, %arg1: memref<8x512xbf16, #tpu.memory_space<vmem>>, %arg2: memref<512x256xbf16, #tpu.memory_space<vmem>>, %arg3: memref<1x256xf32, #tpu.memory_space<vmem>>, %arg4: memref<256x64xbf16, #tpu.memory_space<vmem>>, %arg5: memref<1x64xf32, #tpu.memory_space<vmem>>, %arg6: memref<64x2xbf16, #tpu.memory_space<vmem>>, %arg7: memref<1x2xf32, #tpu.memory_space<vmem>>, %arg8: memref<8x2xf32, #tpu.memory_space<vmem>>) attributes {dimension_semantics = [#tpu.dimension_semantics<parallel>], iteration_bounds = array<i64: 1>, scalar_prefetch = 0 : i64, scratch_operands = 0 : i64, tpu.core_type = #tpu.core_type<tc>, window_params = [{transform_indices = @transform_0, window_bounds = array<i64: 8, 512>}, {pipeline_mode = #tpu.pipeline_mode<synchronous>, transform_indices = @transform_1, window_bounds = array<i64: 512, 256>}, {pipeline_mode = #tpu.pipeline_mode<synchronous>, transform_indices = @transform_2, window_bounds = array<i64: 1, 256>}, {pipeline_mode = #tpu.pipeline_mode<synchronous>, transform_indices = @transform_3, window_bounds = array<i64: 256, 64>}, {pipeline_mode = #tpu.pipeline_mode<synchronous>, transform_indices = @transform_4, window_bounds = array<i64: 1, 64>}, {pipeline_mode = #tpu.pipeline_mode<synchronous>, transform_indices = @transform_5, window_bounds = array<i64: 64, 2>}, {pipeline_mode = #tpu.pipeline_mode<synchronous>, transform_indices = @transform_6, window_bounds = array<i64: 1, 2>}, {transform_indices = @transform_7, window_bounds = array<i64: 8, 2>}]} {
    %c0 = arith.constant 0 : index
    %c0_0 = arith.constant 0 : index
    %0 = vector.load %arg1[%c0, %c0_0] : memref<8x512xbf16, #tpu.memory_space<vmem>>, vector<8x512xbf16>
    %c0_1 = arith.constant 0 : index
    %c0_2 = arith.constant 0 : index
    %1 = vector.load %arg2[%c0_1, %c0_2] : memref<512x256xbf16, #tpu.memory_space<vmem>>, vector<512x256xbf16>
    %cst = arith.constant dense<0.000000e+00> : vector<8x256xf32>
    %2 = tpu.matmul %0, %1, %cst {dimension_numbers = #tpu.dot_dimension_numbers<[1], [0], [0], [1], [0, 0, 1, 1], [], []>} : vector<8x512xbf16>, vector<512x256xbf16>, vector<8x256xf32> -> vector<8x256xf32>
    %c0_3 = arith.constant 0 : index
    %c0_4 = arith.constant 0 : index
    %3 = vector.load %arg3[%c0_3, %c0_4] : memref<1x256xf32, #tpu.memory_space<vmem>>, vector<1x256xf32>
    %4 = vector.broadcast %3 : vector<1x256xf32> to vector<8x256xf32>
    %5 = arith.addf %2, %4 : vector<8x256xf32>
    %cst_5 = arith.constant 0.000000e+00 : f32
    %6 = vector.broadcast %cst_5 : f32 to vector<8x256xf32>
    %7 = arith.maximumf %5, %6 : vector<8x256xf32>
    %8 = arith.truncf %7 : vector<8x256xf32> to vector<8x256xbf16>
    %c0_6 = arith.constant 0 : index
    %c0_7 = arith.constant 0 : index
    %9 = vector.load %arg4[%c0_6, %c0_7] : memref<256x64xbf16, #tpu.memory_space<vmem>>, vector<256x64xbf16>
    %cst_8 = arith.constant dense<0.000000e+00> : vector<8x64xf32>
    %10 = tpu.matmul %8, %9, %cst_8 {dimension_numbers = #tpu.dot_dimension_numbers<[1], [0], [0], [1], [0, 0, 1, 1], [], []>} : vector<8x256xbf16>, vector<256x64xbf16>, vector<8x64xf32> -> vector<8x64xf32>
    %c0_9 = arith.constant 0 : index
    %c0_10 = arith.constant 0 : index
    %11 = vector.load %arg5[%c0_9, %c0_10] : memref<1x64xf32, #tpu.memory_space<vmem>>, vector<1x64xf32>
    %12 = vector.broadcast %11 : vector<1x64xf32> to vector<8x64xf32>
    %13 = arith.addf %10, %12 : vector<8x64xf32>
    %cst_11 = arith.constant 0.000000e+00 : f32
    %14 = vector.broadcast %cst_11 : f32 to vector<8x64xf32>
    %15 = arith.maximumf %13, %14 : vector<8x64xf32>
    %16 = arith.truncf %15 : vector<8x64xf32> to vector<8x64xbf16>
    %c0_12 = arith.constant 0 : index
    %c0_13 = arith.constant 0 : index
    %17 = vector.load %arg6[%c0_12, %c0_13] : memref<64x2xbf16, #tpu.memory_space<vmem>>, vector<64x2xbf16>
    %cst_14 = arith.constant dense<0.000000e+00> : vector<8x2xf32>
    %18 = tpu.matmul %16, %17, %cst_14 {dimension_numbers = #tpu.dot_dimension_numbers<[1], [0], [0], [1], [0, 0, 1, 1], [], []>} : vector<8x64xbf16>, vector<64x2xbf16>, vector<8x2xf32> -> vector<8x2xf32>
    %c0_15 = arith.constant 0 : index
    %c0_16 = arith.constant 0 : index
    %19 = vector.load %arg7[%c0_15, %c0_16] : memref<1x2xf32, #tpu.memory_space<vmem>>, vector<1x2xf32>
    %20 = vector.broadcast %19 : vector<1x2xf32> to vector<8x2xf32>
    %21 = arith.addf %18, %20 : vector<8x2xf32>
    %c0_17 = arith.constant 0 : index
    %c0_18 = arith.constant 0 : index
    %22 = vector.load %arg8[%c0_17, %c0_18] : memref<8x2xf32, #tpu.memory_space<vmem>>, vector<8x2xf32>
    tpu.vector_store %arg8[%c0_17, %c0_18], %21 {strides = array<i32>} : memref<8x2xf32, #tpu.memory_space<vmem>>, vector<8x2xf32>,
    return
  }
  func.func @transform_0(%arg0: i32) -> (i32, i32) {
    %c0_i32 = arith.constant 0 : i32
    %c0_i32_0 = arith.constant 0 : i32
    return %arg0, %c0_i32 : i32, i32
  }
  func.func @transform_1(%arg0: i32) -> (i32, i32) {
    %c0_i32 = arith.constant 0 : i32
    %c0_i32_0 = arith.constant 0 : i32
    %c0_i32_1 = arith.constant 0 : i32
    return %c0_i32, %c0_i32_0 : i32, i32
  }
  func.func @transform_2(%arg0: i32) -> (i32, i32) {
    %c0_i32 = arith.constant 0 : i32
    %c0_i32_0 = arith.constant 0 : i32
    %c0_i32_1 = arith.constant 0 : i32
    return %c0_i32, %c0_i32_0 : i32, i32
  }
  func.func @transform_3(%arg0: i32) -> (i32, i32) {
    %c0_i32 = arith.constant 0 : i32
    %c0_i32_0 = arith.constant 0 : i32
    %c0_i32_1 = arith.constant 0 : i32
    return %c0_i32, %c0_i32_0 : i32, i32
  }
  func.func @transform_4(%arg0: i32) -> (i32, i32) {
    %c0_i32 = arith.constant 0 : i32
    %c0_i32_0 = arith.constant 0 : i32
    %c0_i32_1 = arith.constant 0 : i32
    return %c0_i32, %c0_i32_0 : i32, i32
  }
  func.func @transform_5(%arg0: i32) -> (i32, i32) {
    %c0_i32 = arith.constant 0 : i32
    %c0_i32_0 = arith.constant 0 : i32
    %c0_i32_1 = arith.constant 0 : i32
    return %c0_i32, %c0_i32_0 : i32, i32
  }
  func.func @transform_6(%arg0: i32) -> (i32, i32) {
    %c0_i32 = arith.constant 0 : i32
    %c0_i32_0 = arith.constant 0 : i32
    %c0_i32_1 = arith.constant 0 : i32
    return %c0_i32, %c0_i32_0 : i32, i32
  }
  func.func @transform_7(%arg0: i32) -> (i32, i32) {
    %c0_i32 = arith.constant 0 : i32
    %c0_i32_0 = arith.constant 0 : i32
    return %arg0, %c0_i32 : i32, i32
  }
}

</mosaic_0001>

<llo_original>
// kernel: _lambda_.3
$region0: #{_lambda_.3}
  #allocation0 [shape = 'u32[]', space=smem, size = 0x4, offset = 0x4, fixed_abs, tag = 'smem constant byte address 0x4 - core index']
  #allocation1 [shape = 'u32[144,128]{1,0:T(1,128)}', space=vmem, size = 0x12000, scoped, tag = 'internal scratch']
  %s0 = inlined_call_operand.vmem [shape: bf16[8,512], index: 0, kind: input, shape index: {}]
  %s1 = inlined_call_operand.vmem [shape: bf16[512,256], index: 1, kind: input, shape index: {}]
  %s2 = inlined_call_operand.vmem [shape: f32[1,256], index: 2, kind: input, shape index: {}]
  %s3 = inlined_call_operand.vmem [shape: bf16[256,64], index: 3, kind: input, shape index: {}]
  %s4 = inlined_call_operand.vmem [shape: f32[1,64], index: 4, kind: input, shape index: {}]
  %s5 = inlined_call_operand.vmem [shape: bf16[64,2], index: 5, kind: input, shape index: {}]
  %s6 = inlined_call_operand.vmem [shape: f32[1,2], index: 6, kind: input, shape index: {}]
  %s7 = inlined_call_operand.vmem [shape: f32[8,2], index: 7, kind: output, shape index: {}]
  %s8 = sld [smem:[#allocation0]]
  $region38: #{_lambda_.3} parent=0
    _
  %s10 = ssub.s32 1, %s8
  %s11 = scalar_select 0, %s10, %s8
  // Predicated region
  $region2: #{_lambda_.3} parent=0 // pred_check
    _
  $region3: #{_lambda_.3} parent=0 // pred_check_branch
    %13 = sbr.rel (0) target = $region5
  $region4: #{_lambda_.3} parent=0 // pred_region
    _
  $region5: #{_lambda_.3} parent=0 // pred_fallthru
    _
  // Predicated region
  $region6: #{_lambda_.3} parent=0 // pred_check
    _
  $region7: #{_lambda_.3} parent=0 // pred_check_branch
    %15 = sbr.rel (0) target = $region9
  $region8: #{_lambda_.3} parent=0 // pred_region
    _
  $region9: #{_lambda_.3} parent=0 // pred_fallthru
    _
  // Predicated region
  $region10: #{_lambda_.3} parent=0 // pred_check
    _
  $region11: #{_lambda_.3} parent=0 // pred_check_branch
    %17 = sbr.rel (0) target = $region13
  $region12: #{_lambda_.3} parent=0 // pred_region
    _
  $region13: #{_lambda_.3} parent=0 // pred_fallthru
    _
  // Predicated region
  $region14: #{_lambda_.3} parent=0 // pred_check
    _
  $region15: #{_lambda_.3} parent=0 // pred_check_branch
    %19 = sbr.rel (0) target = $region17
  $region16: #{_lambda_.3} parent=0 // pred_region
    _
  $region17: #{_lambda_.3} parent=0 // pred_fallthru
    _
  // Predicated region
  $region18: #{_lambda_.3} parent=0 // pred_check
    _
  $region19: #{_lambda_.3} parent=0 // pred_check_branch
    %21 = sbr.rel (0) target = $region21
  $region20: #{_lambda_.3} parent=0 // pred_region
    _
  $region21: #{_lambda_.3} parent=0 // pred_fallthru
    _
  // Predicated region
  $region22: #{_lambda_.3} parent=0 // pred_check
    _
  $region23: #{_lambda_.3} parent=0 // pred_check_branch
    %23 = sbr.rel (0) target = $region25
  $region24: #{_lambda_.3} parent=0 // pred_region
    _
  $region25: #{_lambda_.3} parent=0 // pred_fallthru
    _
  // Predicated region
  $region26: #{_lambda_.3} parent=0 // pred_check
    _
  $region27: #{_lambda_.3} parent=0 // pred_check_branch
    %25 = sbr.rel (0) target = $region29
  $region28: #{_lambda_.3} parent=0 // pred_region
    _
  $region29: #{_lambda_.3} parent=0 // pred_fallthru
    _
  %v27 = vld [vmem:[%s0] sm:$0xff]
  %v28 = vld [vmem:[%s0 + $0x8] sm:$0xff]
  %v29 = vld [vmem:[%s1] sm:$0xff]
  %v30 = vld [vmem:[%s1 + $0x8] sm:$0xff]
  %v31 = vld [vmem:[%s1 + $0x10] sm:$0xff]
  %v32 = vld [vmem:[%s1 + $0x18] sm:$0xff]
  %v33 = vld [vmem:[%s1 + $0x20] sm:$0xff]
  %v34 = vld [vmem:[%s1 + $0x28] sm:$0xff]
  %v35 = vld [vmem:[%s1 + $0x30] sm:$0xff]
  %v36 = vld [vmem:[%s1 + $0x38] sm:$0xff]
  %v37 = vld [vmem:[%s1 + $0x40] sm:$0xff]
  %v38 = vld [vmem:[%s1 + $0x48] sm:$0xff]
  %v39 = vld [vmem:[%s1 + $0x50] sm:$0xff]
  %v40 = vld [vmem:[%s1 + $0x58] sm:$0xff]
  %v41 = vld [vmem:[%s1 + $0x60] sm:$0xff]
  %v42 = vld [vmem:[%s1 + $0x68] sm:$0xff]
  %v43 = vld [vmem:[%s1 + $0x70] sm:$0xff]
  %v44 = vld [vmem:[%s1 + $0x78] sm:$0xff]
  %v45 = vld [vmem:[%s1 + $0x80] sm:$0xff]
  %v46 = vld [vmem:[%s1 + $0x88] sm:$0xff]
  %v47 = vld [vmem:[%s1 + $0x90] sm:$0xff]
  %v48 = vld [vmem:[%s1 + $0x98] sm:$0xff]
  %v49 = vld [vmem:[%s1 + $0xa0] sm:$0xff]
  %v50 = vld [vmem:[%s1 + $0xa8] sm:$0xff]
  %v51 = vld [vmem:[%s1 + $0xb0] sm:$0xff]
  %v52 = vld [vmem:[%s1 + $0xb8] sm:$0xff]
  %v53 = vld [vmem:[%s1 + $0xc0] sm:$0xff]
  %v54 = vld [vmem:[%s1 + $0xc8] sm:$0xff]
  %v55 = vld [vmem:[%s1 + $0xd0] sm:$0xff]
  %v56 = vld [vmem:[%s1 + $0xd8] sm:$0xff]
  %v57 = vld [vmem:[%s1 + $0xe0] sm:$0xff]
  %v58 = vld [vmem:[%s1 + $0xe8] sm:$0xff]
  %v59 = vld [vmem:[%s1 + $0xf0] sm:$0xff]
  %v60 = vld [vmem:[%s1 + $0xf8] sm:$0xff]
  %v61 = vld [vmem:[%s1 + $0x100] sm:$0xff]
  %v62 = vld [vmem:[%s1 + $0x108] sm:$0xff]
  %v63 = vld [vmem:[%s1 + $0x110] sm:$0xff]
  %v64 = vld [vmem:[%s1 + $0x118] sm:$0xff]
  %v65 = vld [vmem:[%s1 + $0x120] sm:$0xff]
  %v66 = vld [vmem:[%s1 + $0x128] sm:$0xff]
  %v67 = vld [vmem:[%s1 + $0x130] sm:$0xff]
  %v68 = vld [vmem:[%s1 + $0x138] sm:$0xff]
  %v69 = vld [vmem:[%s1 + $0x140] sm:$0xff]
  %v70 = vld [vmem:[%s1 + $0x148] sm:$0xff]
  %v71 = vld [vmem:[%s1 + $0x150] sm:$0xff]
  %v72 = vld [vmem:[%s1 + $0x158] sm:$0xff]
  %v73 = vld [vmem:[%s1 + $0x160] sm:$0xff]
  %v74 = vld [vmem:[%s1 + $0x168] sm:$0xff]
  %v75 = vld [vmem:[%s1 + $0x170] sm:$0xff]
  %v76 = vld [vmem:[%s1 + $0x178] sm:$0xff]
  %v77 = vld [vmem:[%s1 + $0x180] sm:$0xff]
  %v78 = vld [vmem:[%s1 + $0x188] sm:$0xff]
  %v79 = vld [vmem:[%s1 + $0x190] sm:$0xff]
  %v80 = vld [vmem:[%s1 + $0x198] sm:$0xff]
  %v81 = vld [vmem:[%s1 + $0x1a0] sm:$0xff]
  %v82 = vld [vmem:[%s1 + $0x1a8] sm:$0xff]
  %v83 = vld [vmem:[%s1 + $0x1b0] sm:$0xff]
  %v84 = vld [vmem:[%s1 + $0x1b8] sm:$0xff]
  %v85 = vld [vmem:[%s1 + $0x1c0] sm:$0xff]
  %v86 = vld [vmem:[%s1 + $0x1c8] sm:$0xff]
  %v87 = vld [vmem:[%s1 + $0x1d0] sm:$0xff]
  %v88 = vld [vmem:[%s1 + $0x1d8] sm:$0xff]
  %v89 = vld [vmem:[%s1 + $0x1e0] sm:$0xff]
  %v90 = vld [vmem:[%s1 + $0x1e8] sm:$0xff]
  %v91 = vld [vmem:[%s1 + $0x1f0] sm:$0xff]
  %v92 = vld [vmem:[%s1 + $0x1f8] sm:$0xff]
  %v93 = vld [vmem:[%s2] sm:$0x3]
  %v95 = vlaneseq
  %v96 = vshrl.u32 %v95, 7
  %v97 = vsub.s32 0, %v96
  %v98 = vrot.slane %v93, %v97
  %v99 = vlaneseq
  %v100 = vshrl.u32 %v99, 7
  %v101 = vsub.s32 1, %v100
  %v102 = vrot.slane %v93, %v101
  %v107 = vunpack.c.l.b16 %v27
  %v108 = vunpack.c.h.b16 %v27
  %v109 = vunpack.c.l.b16 %v28
  %v110 = vunpack.c.h.b16 %v28
  %v111 = vpack.c.b16 %v107, %v107
  %v112 = vpack.c.b16 %v108, %v108
  %v113 = vpack.c.b16 %v109, %v109
  %v114 = vpack.c.b16 %v110, %v110
  %v183 = vunpack.c.l.b16 %v29
  %v184 = vunpack.c.h.b16 %v29
  %v185 = vunpack.c.l.b16 %v30
  %v186 = vunpack.c.h.b16 %v30
  %v187 = vunpack.c.l.b16 %v31
  %v188 = vunpack.c.h.b16 %v31
  %v189 = vunpack.c.l.b16 %v32
  %v190 = vunpack.c.h.b16 %v32
  %v191 = vunpack.c.l.b16 %v33
  %v192 = vunpack.c.h.b16 %v33
  %v193 = vunpack.c.l.b16 %v34
  %v194 = vunpack.c.h.b16 %v34
  %v195 = vunpack.c.l.b16 %v35
  %v196 = vunpack.c.h.b16 %v35
  %v197 = vunpack.c.l.b16 %v36
  %v198 = vunpack.c.h.b16 %v36
  %v199 = vunpack.c.l.b16 %v37
  %v200 = vunpack.c.h.b16 %v37
  %v201 = vunpack.c.l.b16 %v38
  %v202 = vunpack.c.h.b16 %v38
  %v203 = vunpack.c.l.b16 %v39
  %v204 = vunpack.c.h.b16 %v39
  %v205 = vunpack.c.l.b16 %v40
  %v206 = vunpack.c.h.b16 %v40
  %v207 = vunpack.c.l.b16 %v41
  %v208 = vunpack.c.h.b16 %v41
  %v209 = vunpack.c.l.b16 %v42
  %v210 = vunpack.c.h.b16 %v42
  %v211 = vunpack.c.l.b16 %v43
  %v212 = vunpack.c.h.b16 %v43
  %v213 = vunpack.c.l.b16 %v44
  %v214 = vunpack.c.h.b16 %v44
  %v215 = vunpack.c.l.b16 %v45
  %v216 = vunpack.c.h.b16 %v45
  %v217 = vunpack.c.l.b16 %v46
  %v218 = vunpack.c.h.b16 %v46
  %v219 = vunpack.c.l.b16 %v47
  %v220 = vunpack.c.h.b16 %v47
  %v221 = vunpack.c.l.b16 %v48
  %v222 = vunpack.c.h.b16 %v48
  %v223 = vunpack.c.l.b16 %v49
  %v224 = vunpack.c.h.b16 %v49
  %v225 = vunpack.c.l.b16 %v50
  %v226 = vunpack.c.h.b16 %v50
  %v227 = vunpack.c.l.b16 %v51
  %v228 = vunpack.c.h.b16 %v51
  %v229 = vunpack.c.l.b16 %v52
  %v230 = vunpack.c.h.b16 %v52
  %v231 = vunpack.c.l.b16 %v53
  %v232 = vunpack.c.h.b16 %v53
  %v233 = vunpack.c.l.b16 %v54
  %v234 = vunpack.c.h.b16 %v54
  %v235 = vunpack.c.l.b16 %v55
  %v236 = vunpack.c.h.b16 %v55
  %v237 = vunpack.c.l.b16 %v56
  %v238 = vunpack.c.h.b16 %v56
  %v239 = vunpack.c.l.b16 %v57
  %v240 = vunpack.c.h.b16 %v57
  %v241 = vunpack.c.l.b16 %v58
  %v242 = vunpack.c.h.b16 %v58
  %v243 = vunpack.c.l.b16 %v59
  %v244 = vunpack.c.h.b16 %v59
  %v245 = vunpack.c.l.b16 %v60
  %v246 = vunpack.c.h.b16 %v60
  %v247 = vunpack.c.l.b16 %v61
  %v248 = vunpack.c.h.b16 %v61
  %v249 = vunpack.c.l.b16 %v62
  %v250 = vunpack.c.h.b16 %v62
  %v251 = vunpack.c.l.b16 %v63
  %v252 = vunpack.c.h.b16 %v63
  %v253 = vunpack.c.l.b16 %v64
  %v254 = vunpack.c.h.b16 %v64
  %v255 = vunpack.c.l.b16 %v65
  %v256 = vunpack.c.h.b16 %v65
  %v257 = vunpack.c.l.b16 %v66
  %v258 = vunpack.c.h.b16 %v66
  %v259 = vunpack.c.l.b16 %v67
  %v260 = vunpack.c.h.b16 %v67
  %v261 = vunpack.c.l.b16 %v68
  %v262 = vunpack.c.h.b16 %v68
  %v263 = vunpack.c.l.b16 %v69
  %v264 = vunpack.c.h.b16 %v69
  %v265 = vunpack.c.l.b16 %v70
  %v266 = vunpack.c.h.b16 %v70
  %v267 = vunpack.c.l.b16 %v71
  %v268 = vunpack.c.h.b16 %v71
  %v269 = vunpack.c.l.b16 %v72
  %v270 = vunpack.c.h.b16 %v72
  %v271 = vunpack.c.l.b16 %v73
  %v272 = vunpack.c.h.b16 %v73
  %v273 = vunpack.c.l.b16 %v74
  %v274 = vunpack.c.h.b16 %v74
  %v275 = vunpack.c.l.b16 %v75
  %v276 = vunpack.c.h.b16 %v75
  %v277 = vunpack.c.l.b16 %v76
  %v278 = vunpack.c.h.b16 %v76
  %v279 = vunpack.c.l.b16 %v77
  %v280 = vunpack.c.h.b16 %v77
  %v281 = vunpack.c.l.b16 %v78
  %v282 = vunpack.c.h.b16 %v78
  %v283 = vunpack.c.l.b16 %v79
  %v284 = vunpack.c.h.b16 %v79
  %v285 = vunpack.c.l.b16 %v80
  %v286 = vunpack.c.h.b16 %v80
  %v287 = vunpack.c.l.b16 %v81
  %v288 = vunpack.c.h.b16 %v81
  %v289 = vunpack.c.l.b16 %v82
  %v290 = vunpack.c.h.b16 %v82
  %v291 = vunpack.c.l.b16 %v83
  %v292 = vunpack.c.h.b16 %v83
  %v293 = vunpack.c.l.b16 %v84
  %v294 = vunpack.c.h.b16 %v84
  %v295 = vunpack.c.l.b16 %v85
  %v296 = vunpack.c.h.b16 %v85
  %v297 = vunpack.c.l.b16 %v86
  %v298 = vunpack.c.h.b16 %v86
  %v299 = vunpack.c.l.b16 %v87
  %v300 = vunpack.c.h.b16 %v87
  %v301 = vunpack.c.l.b16 %v88
  %v302 = vunpack.c.h.b16 %v88
  %v303 = vunpack.c.l.b16 %v89
  %v304 = vunpack.c.h.b16 %v89
  %v305 = vunpack.c.l.b16 %v90
  %v306 = vunpack.c.h.b16 %v90
  %v307 = vunpack.c.l.b16 %v91
  %v308 = vunpack.c.h.b16 %v91
  %v309 = vunpack.c.l.b16 %v92
  %v310 = vunpack.c.h.b16 %v92
  %v311 = vpack.c.b16 %v185, %v183
  %v312 = vpack.c.b16 %v186, %v184
  %v313 = vpack.c.b16 %v189, %v187
  %v314 = vpack.c.b16 %v190, %v188
  %v315 = vpack.c.b16 %v193, %v191
  %v316 = vpack.c.b16 %v194, %v192
  %v317 = vpack.c.b16 %v197, %v195
  %v318 = vpack.c.b16 %v198, %v196
  %v319 = vpack.c.b16 %v201, %v199
  %v320 = vpack.c.b16 %v202, %v200
  %v321 = vpack.c.b16 %v205, %v203
  %v322 = vpack.c.b16 %v206, %v204
  %v323 = vpack.c.b16 %v209, %v207
  %v324 = vpack.c.b16 %v210, %v208
  %v325 = vpack.c.b16 %v213, %v211
  %v326 = vpack.c.b16 %v214, %v212
  %v327 = vpack.c.b16 %v217, %v215
  %v328 = vpack.c.b16 %v218, %v216
  %v329 = vpack.c.b16 %v221, %v219
  %v330 = vpack.c.b16 %v222, %v220
  %v331 = vpack.c.b16 %v225, %v223
  %v332 = vpack.c.b16 %v226, %v224
  %v333 = vpack.c.b16 %v229, %v227
  %v334 = vpack.c.b16 %v230, %v228
  %v335 = vpack.c.b16 %v233, %v231
  %v336 = vpack.c.b16 %v234, %v232
  %v337 = vpack.c.b16 %v237, %v235
  %v338 = vpack.c.b16 %v238, %v236
  %v339 = vpack.c.b16 %v241, %v239
  %v340 = vpack.c.b16 %v242, %v240
  %v341 = vpack.c.b16 %v245, %v243
  %v342 = vpack.c.b16 %v246, %v244
  %v343 = vpack.c.b16 %v249, %v247
  %v344 = vpack.c.b16 %v250, %v248
  %v345 = vpack.c.b16 %v253, %v251
  %v346 = vpack.c.b16 %v254, %v252
  %v347 = vpack.c.b16 %v257, %v255
  %v348 = vpack.c.b16 %v258, %v256
  %v349 = vpack.c.b16 %v261, %v259
  %v350 = vpack.c.b16 %v262, %v260
  %v351 = vpack.c.b16 %v265, %v263
  %v352 = vpack.c.b16 %v266, %v264
  %v353 = vpack.c.b16 %v269, %v267
  %v354 = vpack.c.b16 %v270, %v268
  %v355 = vpack.c.b16 %v273, %v271
  %v356 = vpack.c.b16 %v274, %v272
  %v357 = vpack.c.b16 %v277, %v275
  %v358 = vpack.c.b16 %v278, %v276
  %v359 = vpack.c.b16 %v281, %v279
  %v360 = vpack.c.b16 %v282, %v280
  %v361 = vpack.c.b16 %v285, %v283
  %v362 = vpack.c.b16 %v286, %v284
  %v363 = vpack.c.b16 %v289, %v287
  %v364 = vpack.c.b16 %v290, %v288
  %v365 = vpack.c.b16 %v293, %v291
  %v366 = vpack.c.b16 %v294, %v292
  %v367 = vpack.c.b16 %v297, %v295
  %v368 = vpack.c.b16 %v298, %v296
  %v369 = vpack.c.b16 %v301, %v299
  %v370 = vpack.c.b16 %v302, %v300
  %v371 = vpack.c.b16 %v305, %v303
  %v372 = vpack.c.b16 %v306, %v304
  %v373 = vpack.c.b16 %v309, %v307
  %v374 = vpack.c.b16 %v310, %v308
  %439 = vmatprep.subr.bf16.mxu0 %v312
  %440 = vmatpush1.bf16.msra.mxu0 %v311
  %441 = vmatprep.subr.bf16.mxu0 %v314
  %442 = vmatpush1.bf16.msra.mxu0 %v313
  %443 = vmatprep.subr.bf16.mxu0 %v316
  %444 = vmatpush1.bf16.msra.mxu0 %v315
  %445 = vmatprep.subr.bf16.mxu0 %v318
  %446 = vmatpush1.bf16.msra.mxu0 %v317
  %447 = vmatprep.subr.bf16.mxu0 %v320
  %448 = vmatpush1.bf16.msra.mxu0 %v319
  %449 = vmatprep.subr.bf16.mxu0 %v322
  %450 = vmatpush1.bf16.msra.mxu0 %v321
  %451 = vmatprep.subr.bf16.mxu0 %v324
  %452 = vmatpush1.bf16.msra.mxu0 %v323
  %453 = vmatprep.subr.bf16.mxu0 %v326
  %454 = vmatpush1.bf16.msra.mxu0 %v325
  %455 = vmatprep.subr.bf16.mxu0 %v328
  %456 = vmatpush1.bf16.msra.mxu0 %v327
  %457 = vmatprep.subr.bf16.mxu0 %v330
  %458 = vmatpush1.bf16.msra.mxu0 %v329
  %459 = vmatprep.subr.bf16.mxu0 %v332
  %460 = vmatpush1.bf16.msra.mxu0 %v331
  %461 = vmatprep.subr.bf16.mxu0 %v334
  %462 = vmatpush1.bf16.msra.mxu0 %v333
  %463 = vmatprep.subr.bf16.mxu0 %v336
  %464 = vmatpush1.bf16.msra.mxu0 %v335
  %465 = vmatprep.subr.bf16.mxu0 %v338
  %466 = vmatpush1.bf16.msra.mxu0 %v337
  %467 = vmatprep.subr.bf16.mxu0 %v340
  %468 = vmatpush1.bf16.msra.mxu0 %v339
  %469 = vmatprep.subr.bf16.mxu0 %v342
  %470 = vmatpush1.bf16.msra.mxu0 %v341
  %471 = vmatprep.mubr.bf16.mxu0 %v112
  %472 = vmatmul.mubr.bf16.gmra.mrb[0].mxu0 %v111
  %v473 = vpop.f32.mrb[0].mxu0
  %v474 = vadd.f32 %v98, %v473
  %v475 = vpop.f32.mrb[0].mxu0
  %v476 = vadd.f32 %v102, %v475
  %v477 = vpop.f32.mrb[0].mxu0
  %v478 = vpop.f32.mrb[0].mxu0
  %479 = vdwg.mxu0
  %480 = vmatprep.subr.bf16.mxu0 %v344
  %481 = vmatpush1.bf16.msra.mxu0 %v343
  %482 = vmatprep.subr.bf16.mxu0 %v346
  %483 = vmatpush1.bf16.msra.mxu0 %v345
  %484 = vmatprep.subr.bf16.mxu0 %v348
  %485 = vmatpush1.bf16.msra.mxu0 %v347
  %486 = vmatprep.subr.bf16.mxu0 %v350
  %487 = vmatpush1.bf16.msra.mxu0 %v349
  %488 = vmatprep.subr.bf16.mxu0 %v352
  %489 = vmatpush1.bf16.msra.mxu0 %v351
  %490 = vmatprep.subr.bf16.mxu0 %v354
  %491 = vmatpush1.bf16.msra.mxu0 %v353
  %492 = vmatprep.subr.bf16.mxu0 %v356
  %493 = vmatpush1.bf16.msra.mxu0 %v355
  %494 = vmatprep.subr.bf16.mxu0 %v358
  %495 = vmatpush1.bf16.msra.mxu0 %v357
  %496 = vmatprep.subr.bf16.mxu0 %v360
  %497 = vmatpush1.bf16.msra.mxu0 %v359
  %498 = vmatprep.subr.bf16.mxu0 %v362
  %499 = vmatpush1.bf16.msra.mxu0 %v361
  %500 = vmatprep.subr.bf16.mxu0 %v364
  %501 = vmatpush1.bf16.msra.mxu0 %v363
  %502 = vmatprep.subr.bf16.mxu0 %v366
  %503 = vmatpush1.bf16.msra.mxu0 %v365
  %504 = vmatprep.subr.bf16.mxu0 %v368
  %505 = vmatpush1.bf16.msra.mxu0 %v367
  %506 = vmatprep.subr.bf16.mxu0 %v370
  %507 = vmatpush1.bf16.msra.mxu0 %v369
  %508 = vmatprep.subr.bf16.mxu0 %v372
  %509 = vmatpush1.bf16.msra.mxu0 %v371
  %510 = vmatprep.subr.bf16.mxu0 %v374
  %511 = vmatpush1.bf16.msra.mxu0 %v373
  %512 = vmatprep.mubr.bf16.mxu0 %v114
  %513 = vmatmul.mubr.bf16.gmra.mrb[0].mxu0 %v113
  %v514 = vpop.f32.mrb[0].mxu0
  %v515 = vadd.f32 %v474, %v514
  %v516 = vpop.f32.mrb[0].mxu0
  %v517 = vadd.f32 %v476, %v516
  %v518 = vpop.f32.mrb[0].mxu0
  %v519 = vpop.f32.mrb[0].mxu0
  %520 = vdwg.mxu0
  %v521 = vmax.f32 %v515, 0.0
  %v522 = vmax.f32 %v517, 0.0
  %v523 = vpack.c.bf16 %v521, %v521
  %v524 = vpack.c.bf16 %v522, %v522
  %v525 = vld [vmem:[%s3] sm:$0xf]
  %v526 = vld [vmem:[%s3 + $0x4] sm:$0xf]
  %v527 = vld [vmem:[%s3 + $0x8] sm:$0xf]
  %v528 = vld [vmem:[%s3 + $0xc] sm:$0xf]
  %v529 = vld [vmem:[%s3 + $0x10] sm:$0xf]
  %v530 = vld [vmem:[%s3 + $0x14] sm:$0xf]
  %v531 = vld [vmem:[%s3 + $0x18] sm:$0xf]
  %v532 = vld [vmem:[%s3 + $0x1c] sm:$0xf]
  %v533 = vld [vmem:[%s3 + $0x20] sm:$0xf]
  %v534 = vld [vmem:[%s3 + $0x24] sm:$0xf]
  %v535 = vld [vmem:[%s3 + $0x28] sm:$0xf]
  %v536 = vld [vmem:[%s3 + $0x2c] sm:$0xf]
  %v537 = vld [vmem:[%s3 + $0x30] sm:$0xf]
  %v538 = vld [vmem:[%s3 + $0x34] sm:$0xf]
  %v539 = vld [vmem:[%s3 + $0x38] sm:$0xf]
  %v540 = vld [vmem:[%s3 + $0x3c] sm:$0xf]
  %v541 = vld [vmem:[%s3 + $0x40] sm:$0xf]
  %v542 = vld [vmem:[%s3 + $0x44] sm:$0xf]
  %v543 = vld [vmem:[%s3 + $0x48] sm:$0xf]
  %v544 = vld [vmem:[%s3 + $0x4c] sm:$0xf]
  %v545 = vld [vmem:[%s3 + $0x50] sm:$0xf]
  %v546 = vld [vmem:[%s3 + $0x54] sm:$0xf]
  %v547 = vld [vmem:[%s3 + $0x58] sm:$0xf]
  %v548 = vld [vmem:[%s3 + $0x5c] sm:$0xf]
  %v549 = vld [vmem:[%s3 + $0x60] sm:$0xf]
  %v550 = vld [vmem:[%s3 + $0x64] sm:$0xf]
  %v551 = vld [vmem:[%s3 + $0x68] sm:$0xf]
  %v552 = vld [vmem:[%s3 + $0x6c] sm:$0xf]
  %v553 = vld [vmem:[%s3 + $0x70] sm:$0xf]
  %v554 = vld [vmem:[%s3 + $0x74] sm:$0xf]
  %v555 = vld [vmem:[%s3 + $0x78] sm:$0xf]
  %v556 = vld [vmem:[%s3 + $0x7c] sm:$0xf]
  %v557 = vld [vmem:[%s4] sm:$0x1]
  %v559 = vlaneseq
  %v560 = vshrl.u32 %v559, 7
  %v561 = vsub.s32 0, %v560
  %v562 = vrot.slane %v557, %v561
  %v596 = vunpack.c.l.b16 %v525
  %v597 = vunpack.c.l.b16 %v526
  %v598 = vunpack.c.l.b16 %v527
  %v599 = vunpack.c.l.b16 %v528
  %v600 = vunpack.c.l.b16 %v529
  %v601 = vunpack.c.l.b16 %v530
  %v602 = vunpack.c.l.b16 %v531
  %v603 = vunpack.c.l.b16 %v532
  %v604 = vunpack.c.l.b16 %v533
  %v605 = vunpack.c.l.b16 %v534
  %v606 = vunpack.c.l.b16 %v535
  %v607 = vunpack.c.l.b16 %v536
  %v608 = vunpack.c.l.b16 %v537
  %v609 = vunpack.c.l.b16 %v538
  %v610 = vunpack.c.l.b16 %v539
  %v611 = vunpack.c.l.b16 %v540
  %v612 = vunpack.c.l.b16 %v541
  %v613 = vunpack.c.l.b16 %v542
  %v614 = vunpack.c.l.b16 %v543
  %v615 = vunpack.c.l.b16 %v544
  %v616 = vunpack.c.l.b16 %v545
  %v617 = vunpack.c.l.b16 %v546
  %v618 = vunpack.c.l.b16 %v547
  %v619 = vunpack.c.l.b16 %v548
  %v620 = vunpack.c.l.b16 %v549
  %v621 = vunpack.c.l.b16 %v550
  %v622 = vunpack.c.l.b16 %v551
  %v623 = vunpack.c.l.b16 %v552
  %v624 = vunpack.c.l.b16 %v553
  %v625 = vunpack.c.l.b16 %v554
  %v626 = vunpack.c.l.b16 %v555
  %v627 = vunpack.c.l.b16 %v556
  %v628 = vpack.c.b16 %v597, %v596
  %v629 = vpack.c.b16 %v599, %v598
  %v630 = vpack.c.b16 %v601, %v600
  %v631 = vpack.c.b16 %v603, %v602
  %v632 = vpack.c.b16 %v605, %v604
  %v633 = vpack.c.b16 %v607, %v606
  %v634 = vpack.c.b16 %v609, %v608
  %v635 = vpack.c.b16 %v611, %v610
  %v636 = vpack.c.b16 %v613, %v612
  %v637 = vpack.c.b16 %v615, %v614
  %v638 = vpack.c.b16 %v617, %v616
  %v639 = vpack.c.b16 %v619, %v618
  %v640 = vpack.c.b16 %v621, %v620
  %v641 = vpack.c.b16 %v623, %v622
  %v642 = vpack.c.b16 %v625, %v624
  %v643 = vpack.c.b16 %v627, %v626
  %660 = vmatprep.subr.bf16.mxu0 0
  %661 = vmatpush1.bf16.msra.mxu0 %v628
  %662 = vmatprep.subr.bf16.mxu0 0
  %663 = vmatpush1.bf16.msra.mxu0 %v629
  %664 = vmatprep.subr.bf16.mxu0 0
  %665 = vmatpush1.bf16.msra.mxu0 %v630
  %666 = vmatprep.subr.bf16.mxu0 0
  %667 = vmatpush1.bf16.msra.mxu0 %v631
  %668 = vmatprep.subr.bf16.mxu0 0
  %669 = vmatpush1.bf16.msra.mxu0 %v632
  %670 = vmatprep.subr.bf16.mxu0 0
  %671 = vmatpush1.bf16.msra.mxu0 %v633
  %672 = vmatprep.subr.bf16.mxu0 0
  %673 = vmatpush1.bf16.msra.mxu0 %v634
  %674 = vmatprep.subr.bf16.mxu0 0
  %675 = vmatpush1.bf16.msra.mxu0 %v635
  %676 = vmatprep.subr.bf16.mxu0 0
  %677 = vmatpush1.bf16.msra.mxu0 %v636
  %678 = vmatprep.subr.bf16.mxu0 0
  %679 = vmatpush1.bf16.msra.mxu0 %v637
  %680 = vmatprep.subr.bf16.mxu0 0
  %681 = vmatpush1.bf16.msra.mxu0 %v638
  %682 = vmatprep.subr.bf16.mxu0 0
  %683 = vmatpush1.bf16.msra.mxu0 %v639
  %684 = vmatprep.subr.bf16.mxu0 0
  %685 = vmatpush1.bf16.msra.mxu0 %v640
  %686 = vmatprep.subr.bf16.mxu0 0
  %687 = vmatpush1.bf16.msra.mxu0 %v641
  %688 = vmatprep.subr.bf16.mxu0 0
  %689 = vmatpush1.bf16.msra.mxu0 %v642
  %690 = vmatprep.subr.bf16.mxu0 0
  %691 = vmatpush1.bf16.msra.mxu0 %v643
  %692 = vmatprep.mubr.bf16.mxu0 %v524
  %693 = vmatmul.mubr.bf16.gmra.mrb[0].mxu0 %v523
  %v694 = vpop.f32.mrb[0].mxu0
  %v695 = vadd.f32 %v562, %v694
  %v696 = vpop.f32.mrb[0].mxu0
  %v697 = vpop.f32.mrb[0].mxu0
  %v698 = vpop.f32.mrb[0].mxu0
  %699 = vdwg.mxu0
  %v700 = vmax.f32 %v695, 0.0
  %v701 = vpack.c.bf16 %v700, %v700
  %v702 = vld [vmem:[%s5] sm:$0xf]
  %v703 = vld [vmem:[%s5 + $0x4] sm:$0xf]
  %v704 = vld [vmem:[%s5 + $0x8] sm:$0xf]
  %v705 = vld [vmem:[%s5 + $0xc] sm:$0xf]
  %v706 = vld [vmem:[%s5 + $0x10] sm:$0xf]
  %v707 = vld [vmem:[%s5 + $0x14] sm:$0xf]
  %v708 = vld [vmem:[%s5 + $0x18] sm:$0xf]
  %v709 = vld [vmem:[%s5 + $0x1c] sm:$0xf]
  %v710 = vld [vmem:[%s6] sm:$0x1]
  %v712 = vlaneseq
  %v713 = vshrl.u32 %v712, 7
  %v714 = vsub.s32 0, %v713
  %v715 = vrot.slane %v710, %v714
  %v725 = vunpack.c.l.b16 %v702
  %v726 = vunpack.c.l.b16 %v703
  %v727 = vunpack.c.l.b16 %v704
  %v728 = vunpack.c.l.b16 %v705
  %v729 = vunpack.c.l.b16 %v706
  %v730 = vunpack.c.l.b16 %v707
  %v731 = vunpack.c.l.b16 %v708
  %v732 = vunpack.c.l.b16 %v709
  %v733 = vpack.c.b16 %v726, %v725
  %v734 = vpack.c.b16 %v728, %v727
  %v735 = vpack.c.b16 %v730, %v729
  %v736 = vpack.c.b16 %v732, %v731
  %vm741 = vcmask 523264
  %v743 = vsel %vm741, %v701, 0
  %745 = vmatprep.subr.bf16.mxu0 0
  %746 = vmatpush1.bf16.msra.mxu0 %v733
  %747 = vmatprep.subr.bf16.mxu0 0
  %748 = vmatpush1.bf16.msra.mxu0 %v734
  %749 = vmatprep.subr.bf16.mxu0 0
  %750 = vmatpush1.bf16.msra.mxu0 %v735
  %751 = vmatprep.subr.bf16.mxu0 0
  %752 = vmatpush1.bf16.msra.mxu0 %v736
  %753 = vmatprep.subr.bf16.mxu0 0
  %754 = vmatpush1.bf16.msra.mxu0 0
  %755 = vmatprep.subr.bf16.mxu0 0
  %756 = vmatpush1.bf16.msra.mxu0 0
  %757 = vmatprep.subr.bf16.mxu0 0
  %758 = vmatpush1.bf16.msra.mxu0 0
  %759 = vmatprep.subr.bf16.mxu0 0
  %760 = vmatpush1.bf16.msra.mxu0 0
  %761 = vmatprep.subr.bf16.mxu0 0
  %762 = vmatpush1.bf16.msra.mxu0 0
  %763 = vmatprep.subr.bf16.mxu0 0
  %764 = vmatpush1.bf16.msra.mxu0 0
  %765 = vmatprep.subr.bf16.mxu0 0
  %766 = vmatpush1.bf16.msra.mxu0 0
  %767 = vmatprep.subr.bf16.mxu0 0
  %768 = vmatpush1.bf16.msra.mxu0 0
  %769 = vmatprep.subr.bf16.mxu0 0
  %770 = vmatpush1.bf16.msra.mxu0 0
  %771 = vmatprep.subr.bf16.mxu0 0
  %772 = vmatpush1.bf16.msra.mxu0 0
  %773 = vmatprep.subr.bf16.mxu0 0
  %774 = vmatpush1.bf16.msra.mxu0 0
  %775 = vmatprep.subr.bf16.mxu0 0
  %776 = vmatpush1.bf16.msra.mxu0 0
  %777 = vmatprep.mubr.bf16.mxu0 0
  %778 = vmatmul.mubr.bf16.gmra.mrb[0].mxu0 %v743
  %v779 = vpop.f32.mrb[0].mxu0
  %v780 = vadd.f32 %v715, %v779
  %v781 = vpop.f32.mrb[0].mxu0
  %v782 = vpop.f32.mrb[0].mxu0
  %v783 = vpop.f32.mrb[0].mxu0
  %784 = vdwg.mxu0
  %vm785 = vcmask 15360
  %786 = vst.msk [vmem:[%s7] sm:$0xff] %vm785, %v780
  // Predicated region
  $region30: #{_lambda_.3} parent=0 // pred_check
    _
  $region31: #{_lambda_.3} parent=0 // pred_check_branch
    %788 = sbr.rel (0) target = $region33
  $region32: #{_lambda_.3} parent=0 // pred_region
    _
  $region33: #{_lambda_.3} parent=0 // pred_fallthru
    _
  // Predicated region
  $region34: #{_lambda_.3} parent=0 // pred_check
    _
  $region35: #{_lambda_.3} parent=0 // pred_check_branch
    %790 = sbr.rel (0) target = $region37
  $region36: #{_lambda_.3} parent=0 // pred_region
    _
  $region37: #{_lambda_.3} parent=0 // pred_fallthru
    _

// kernel: _lambda_.2
$region0: #{_lambda_.2}
  #allocation0 [shape = 'u32[]', space=smem, size = 0x4, offset = 0x4, fixed_abs, tag = 'smem constant byte address 0x4 - core index']
  #allocation1 [shape = 'u32[144,128]{1,0:T(1,128)}', space=vmem, size = 0x12000, scoped, tag = 'internal scratch']
  #allocation2 [shape = 'f32[36,16]{1,0:T(8,128)}', space=vmem, size = 0x5000, scoped, tag = 'scratch operand']
  #allocation3 [shape = 'f32[20,32]{1,0:T(8,128)}', space=vmem, size = 0x3000, scoped, tag = 'scratch operand']
  #allocation4 [shape = 'f32[12,64]{1,0:T(8,128)}', space=vmem, size = 0x2000, scoped, tag = 'scratch operand']
  %s0 = inlined_call_operand.vmem [shape: f32[2,68,1], index: 0, kind: input, shape index: {}]
  %s1 = inlined_call_operand.vmem [shape: f32[5,16], index: 1, kind: input, shape index: {}]
  %s2 = inlined_call_operand.vmem [shape: f32[1,16], index: 2, kind: input, shape index: {}]
  %s3 = inlined_call_operand.vmem [shape: bf16[5,16,32], index: 3, kind: input, shape index: {}]
  %s4 = inlined_call_operand.vmem [shape: f32[1,32], index: 4, kind: input, shape index: {}]
  %s5 = inlined_call_operand.hbm [shape: bf16[5,32,64], index: 5, kind: input, shape index: {}]
  %s6 = inlined_call_operand.vmem [shape: f32[1,64], index: 6, kind: input, shape index: {}]
  %s7 = inlined_call_operand.vmem [shape: bf16[5,64,128], index: 7, kind: input, shape index: {}]
  %s8 = inlined_call_operand.vmem [shape: f32[1,128], index: 8, kind: input, shape index: {}]
  %s9 = inlined_call_operand.vmem [shape: bf16[2,4,128], index: 9, kind: output, shape index: {}]
  %s10 = sld [smem:[#allocation0]]
  $region73: #{_lambda_.2} parent=0
    _
  %s12 = ssub.s32 1, %s10
  %s13 = scalar_select 0, %s12, %s10
  $region1: #{_lambda_.2} parent=0
    #allocation5 [shape = 'u8[40960]{0}', space=vmem, size = 0xa000, scoped, tag = 'input window, operand 5, single buffered']
    #allocation6 [shape = 's32[2]{0}', space=sflag, size = 0x8, scoped, tag = 'scoped memory for _lambda_.2']
    %14 = vsyncpa [#allocation6], 0
    loop: start=0, step=1, limit=4
    $region2: #{_lambda_.2} parent=1 // loop_pre_header
      _
    $region3: #{_lambda_.2} parent=1 // loop_header
      %s16 = sphi 0, %s20
      %p17 = scmp.ge.s32.totalorder %s16, 4
      %s26 = sphi 0, %s28
      %s29 = sphi 0, %s26
      %s30 = sphi 0, %s29
      %s46 = sphi 0, %s30
      %s50 = sphi 0, %s50
      %s52 = sphi 0, %s50
      %s53 = sphi 0, %s52
      %s67 = sphi 0, %s53
      %s71 = sphi 0, %s71
      %s73 = sphi 0, %s71
      %s74 = sphi 0, %s73
      %s88 = sphi 0, %s74
      %s92 = sphi 0, %s92
      %s94 = sphi 0, %s92
      %s95 = sphi 0, %s94
      %s109 = sphi 0, %s95
      %s113 = sphi 0, %s113
      %s115 = sphi 0, %s113
      %s116 = sphi 0, %s115
      %s130 = sphi 0, %s116
      %s134 = sphi 0, %s134
      %s136 = sphi 0, %s134
      %s137 = sphi 0, %s136
      %s151 = sphi 0, %s137
      %s155 = sphi 0, %s155
      %s157 = sphi 0, %s155
      %s158 = sphi 0, %s157
      %s172 = sphi 0, %s158
      %s176 = sphi 0, %s176
      %s178 = sphi 0, %s176
      %s179 = sphi 0, %s178
      %s193 = sphi 0, %s179
      %s197 = sphi 0, %s197
      %s199 = sphi 0, %s197
      %s200 = sphi 0, %s199
      %s214 = sphi 0, %s200
      %s220 = sphi 0, %s222
      %s223 = sphi 0, %s220
      %s224 = sphi 0, %s223
      %s240 = sphi 0, %s224
    $region4: #{_lambda_.2} parent=1 // loop_header_branch
      %19 = sbr.rel (%p17) target = $region8
    $region5: #{_lambda_.2} parent=1 // loop_body
      %s21 = ssub.s32 %s16, 1
      %s22 = ssub.s32 %s16, 2
      %s23 = sadd.s32 %s16, 1
      %s24 = ssub.s32 %s16, %s23
      %p25 = scmp.eq.s32.totalorder %s24, 0
      %s27 = sadd.s32 %s26, 1
      %s28 = scalar_select %p25, %s26, %s27
      %p31 = pneg %p25
      %p32 = scmp.eq.s32.totalorder %s16, 1
      %p33 = por %p31, %p32
      %p34 = scmp.ne.s32.totalorder %s26, %s29
      %p35 = scmp.eq.s32.totalorder %s16, 0
      %p36 = por %p34, %p35
      %p37 = scmp.ne.s32.totalorder %s26, %s29
      %p38 = scmp.eq.s32.totalorder %s21, 1
      %p39 = por %p37, %p38
      %p40 = scmp.ne.s32.totalorder %s29, %s30
      %p41 = scmp.eq.s32.totalorder %s21, 0
      %p42 = por %p40, %p41
      %p43 = scmp.ne.s32.totalorder %s29, %s30
      %p44 = scmp.eq.s32.totalorder %s22, 1
      %p45 = por %p43, %p44
      %p47 = scmp.ne.s32.totalorder %s30, %s46
      %p48 = scmp.eq.s32.totalorder %s22, 0
      %p49 = por %p47, %p48
      %s51 = sadd.s32 %s50, 1
      %p54 = scmp.eq.s32.totalorder %s16, 1
      %p55 = scmp.ne.s32.totalorder %s50, %s52
      %p56 = scmp.eq.s32.totalorder %s16, 0
      %p57 = por %p55, %p56
      %p58 = scmp.ne.s32.totalorder %s50, %s52
      %p59 = scmp.eq.s32.totalorder %s21, 1
      %p60 = por %p58, %p59
      %p61 = scmp.ne.s32.totalorder %s52, %s53
      %p62 = scmp.eq.s32.totalorder %s21, 0
      %p63 = por %p61, %p62
      %p64 = scmp.ne.s32.totalorder %s52, %s53
      %p65 = scmp.eq.s32.totalorder %s22, 1
      %p66 = por %p64, %p65
      %p68 = scmp.ne.s32.totalorder %s53, %s67
      %p69 = scmp.eq.s32.totalorder %s22, 0
      %p70 = por %p68, %p69
      %s72 = sadd.s32 %s71, 1
      %p75 = scmp.eq.s32.totalorder %s16, 1
      %p76 = scmp.ne.s32.totalorder %s71, %s73
      %p77 = scmp.eq.s32.totalorder %s16, 0
      %p78 = por %p76, %p77
      %p79 = scmp.ne.s32.totalorder %s71, %s73
      %p80 = scmp.eq.s32.totalorder %s21, 1
      %p81 = por %p79, %p80
      %p82 = scmp.ne.s32.totalorder %s73, %s74
      %p83 = scmp.eq.s32.totalorder %s21, 0
      %p84 = por %p82, %p83
      %p85 = scmp.ne.s32.totalorder %s73, %s74
      %p86 = scmp.eq.s32.totalorder %s22, 1
      %p87 = por %p85, %p86
      %p89 = scmp.ne.s32.totalorder %s74, %s88
      %p90 = scmp.eq.s32.totalorder %s22, 0
      %p91 = por %p89, %p90
      %s93 = sadd.s32 %s92, 1
      %p96 = scmp.eq.s32.totalorder %s16, 1
      %p97 = scmp.ne.s32.totalorder %s92, %s94
      %p98 = scmp.eq.s32.totalorder %s16, 0
      %p99 = por %p97, %p98
      %p100 = scmp.ne.s32.totalorder %s92, %s94
      %p101 = scmp.eq.s32.totalorder %s21, 1
      %p102 = por %p100, %p101
      %p103 = scmp.ne.s32.totalorder %s94, %s95
      %p104 = scmp.eq.s32.totalorder %s21, 0
      %p105 = por %p103, %p104
      %p106 = scmp.ne.s32.totalorder %s94, %s95
      %p107 = scmp.eq.s32.totalorder %s22, 1
      %p108 = por %p106, %p107
      %p110 = scmp.ne.s32.totalorder %s95, %s109
      %p111 = scmp.eq.s32.totalorder %s22, 0
      %p112 = por %p110, %p111
      %s114 = sadd.s32 %s113, 1
      %p117 = scmp.eq.s32.totalorder %s16, 1
      %p118 = scmp.ne.s32.totalorder %s113, %s115
      %p119 = scmp.eq.s32.totalorder %s16, 0
      %p120 = por %p118, %p119
      %p121 = scmp.ne.s32.totalorder %s113, %s115
      %p122 = scmp.eq.s32.totalorder %s21, 1
      %p123 = por %p121, %p122
      %p124 = scmp.ne.s32.totalorder %s115, %s116
      %p125 = scmp.eq.s32.totalorder %s21, 0
      %p126 = por %p124, %p125
      %p127 = scmp.ne.s32.totalorder %s115, %s116
      %p128 = scmp.eq.s32.totalorder %s22, 1
      %p129 = por %p127, %p128
      %p131 = scmp.ne.s32.totalorder %s116, %s130
      %p132 = scmp.eq.s32.totalorder %s22, 0
      %p133 = por %p131, %p132
      %s135 = sadd.s32 %s134, 1
      %p138 = scmp.eq.s32.totalorder %s16, 1
      %p139 = scmp.ne.s32.totalorder %s134, %s136
      %p140 = scmp.eq.s32.totalorder %s16, 0
      %p141 = por %p139, %p140
      %p142 = scmp.ne.s32.totalorder %s134, %s136
      %p143 = scmp.eq.s32.totalorder %s21, 1
      %p144 = por %p142, %p143
      %p145 = scmp.ne.s32.totalorder %s136, %s137
      %p146 = scmp.eq.s32.totalorder %s21, 0
      %p147 = por %p145, %p146
      %p148 = scmp.ne.s32.totalorder %s136, %s137
      %p149 = scmp.eq.s32.totalorder %s22, 1
      %p150 = por %p148, %p149
      %p152 = scmp.ne.s32.totalorder %s137, %s151
      %p153 = scmp.eq.s32.totalorder %s22, 0
      %p154 = por %p152, %p153
      %s156 = sadd.s32 %s155, 1
      %p159 = scmp.eq.s32.totalorder %s16, 1
      %p160 = scmp.ne.s32.totalorder %s155, %s157
      %p161 = scmp.eq.s32.totalorder %s16, 0
      %p162 = por %p160, %p161
      %p163 = scmp.ne.s32.totalorder %s155, %s157
      %p164 = scmp.eq.s32.totalorder %s21, 1
      %p165 = por %p163, %p164
      %p166 = scmp.ne.s32.totalorder %s157, %s158
      %p167 = scmp.eq.s32.totalorder %s21, 0
      %p168 = por %p166, %p167
      %p169 = scmp.ne.s32.totalorder %s157, %s158
      %p170 = scmp.eq.s32.totalorder %s22, 1
      %p171 = por %p169, %p170
      %p173 = scmp.ne.s32.totalorder %s158, %s172
      %p174 = scmp.eq.s32.totalorder %s22, 0
      %p175 = por %p173, %p174
      %s177 = sadd.s32 %s176, 1
      %p180 = scmp.eq.s32.totalorder %s16, 1
      %p181 = scmp.ne.s32.totalorder %s176, %s178
      %p182 = scmp.eq.s32.totalorder %s16, 0
      %p183 = por %p181, %p182
      %p184 = scmp.ne.s32.totalorder %s176, %s178
      %p185 = scmp.eq.s32.totalorder %s21, 1
      %p186 = por %p184, %p185
      %p187 = scmp.ne.s32.totalorder %s178, %s179
      %p188 = scmp.eq.s32.totalorder %s21, 0
      %p189 = por %p187, %p188
      %p190 = scmp.ne.s32.totalorder %s178, %s179
      %p191 = scmp.eq.s32.totalorder %s22, 1
      %p192 = por %p190, %p191
      %p194 = scmp.ne.s32.totalorder %s179, %s193
      %p195 = scmp.eq.s32.totalorder %s22, 0
      %p196 = por %p194, %p195
      %s198 = sadd.s32 %s197, 1
      %p201 = scmp.eq.s32.totalorder %s16, 1
      %p202 = scmp.ne.s32.totalorder %s197, %s199
      %p203 = scmp.eq.s32.totalorder %s16, 0
      %p204 = por %p202, %p203
      %p205 = scmp.ne.s32.totalorder %s197, %s199
      %p206 = scmp.eq.s32.totalorder %s21, 1
      %p207 = por %p205, %p206
      %p208 = scmp.ne.s32.totalorder %s199, %s200
      %p209 = scmp.eq.s32.totalorder %s21, 0
      %p210 = por %p208, %p209
      %p211 = scmp.ne.s32.totalorder %s199, %s200
      %p212 = scmp.eq.s32.totalorder %s22, 1
      %p213 = por %p211, %p212
      %p215 = scmp.ne.s32.totalorder %s200, %s214
      %p216 = scmp.eq.s32.totalorder %s22, 0
      %p217 = por %p215, %p216
      %s218 = ssub.s32 %s16, %s23
      %p219 = scmp.eq.s32.totalorder %s218, 0
      %s221 = sadd.s32 %s220, 1
      %s222 = scalar_select %p219, %s220, %s221
      %p225 = pneg %p219
      %p226 = scmp.eq.s32.totalorder %s16, 1
      %p227 = por %p225, %p226
      %p228 = scmp.ne.s32.totalorder %s220, %s223
      %p229 = scmp.eq.s32.totalorder %s16, 0
      %p230 = por %p228, %p229
      %p231 = scmp.ne.s32.totalorder %s220, %s223
      %p232 = scmp.eq.s32.totalorder %s21, 1
      %p233 = por %p231, %p232
      %p234 = scmp.ne.s32.totalorder %s223, %s224
      %p235 = scmp.eq.s32.totalorder %s21, 0
      %p236 = por %p234, %p235
      %p237 = scmp.ne.s32.totalorder %s223, %s224
      %p238 = scmp.eq.s32.totalorder %s22, 1
      %p239 = por %p237, %p238
      %p241 = scmp.ne.s32.totalorder %s224, %s240
      %p242 = scmp.eq.s32.totalorder %s22, 0
      %p243 = por %p241, %p242
      %p244 = scmp.le.s32.totalorder 1, %s16
      %p245 = scmp.lt.s32.totalorder %s16, 3
      %p246 = pnand %p244, %p245
      %p247 = pneg %p246
      // Predicated region
      $region9: #{_lambda_.2} parent=5 // pred_check
        _
      $region10: #{_lambda_.2} parent=5 // pred_check_branch
        %249 = sbr.rel (%p246) target = $region12
      $region11: #{_lambda_.2} parent=5 // pred_region
        %s250 = ssub.s32 %s16, 1
        // Predicated region
        $region13: #{_lambda_.2} parent=11 // pred_check
          %p251 = pneg %p63
        $region14: #{_lambda_.2} parent=11 // pred_check_branch
          %253 = sbr.rel (%p251) target = $region16
        $region15: #{_lambda_.2} parent=11 // pred_region
          _
        $region16: #{_lambda_.2} parent=11 // pred_fallthru
          _
        // Predicated region
        $region17: #{_lambda_.2} parent=11 // pred_check
          %p254 = pneg %p84
        $region18: #{_lambda_.2} parent=11 // pred_check_branch
          %256 = sbr.rel (%p254) target = $region20
        $region19: #{_lambda_.2} parent=11 // pred_region
          _
        $region20: #{_lambda_.2} parent=11 // pred_fallthru
          _
        // Predicated region
        $region21: #{_lambda_.2} parent=11 // pred_check
          %p257 = pneg %p105
        $region22: #{_lambda_.2} parent=11 // pred_check_branch
          %259 = sbr.rel (%p257) target = $region24
        $region23: #{_lambda_.2} parent=11 // pred_region
          _
        $region24: #{_lambda_.2} parent=11 // pred_fallthru
          _
        // Predicated region
        $region25: #{_lambda_.2} parent=11 // pred_check
          %p260 = pneg %p126
        $region26: #{_lambda_.2} parent=11 // pred_check_branch
          %262 = sbr.rel (%p260) target = $region28
        $region27: #{_lambda_.2} parent=11 // pred_region
          _
        $region28: #{_lambda_.2} parent=11 // pred_fallthru
          _
        // Predicated region
        $region29: #{_lambda_.2} parent=11 // pred_check
          %p263 = pneg %p147
        $region30: #{_lambda_.2} parent=11 // pred_check_branch
          %265 = sbr.rel (%p263) target = $region32
        $region31: #{_lambda_.2} parent=11 // pred_region
          %s267 = ssub.s32 1280, 1280
          %268 = vsyncadd [#allocation6], %s267
          %s269 = sshll.u32 [#allocation5], 4
          %s270 = int_to_ptr.vmem [resolvable:$true] %s269
          %275 = dma.hbm_to_vmem [thread:$0]  %s5, 1280, %s270, [#allocation6], 64, 64, 4
        $region32: #{_lambda_.2} parent=11 // pred_fallthru
          _
        // Predicated region
        $region33: #{_lambda_.2} parent=11 // pred_check
          %p276 = pneg %p168
        $region34: #{_lambda_.2} parent=11 // pred_check_branch
          %278 = sbr.rel (%p276) target = $region36
        $region35: #{_lambda_.2} parent=11 // pred_region
          _
        $region36: #{_lambda_.2} parent=11 // pred_fallthru
          _
        // Predicated region
        $region37: #{_lambda_.2} parent=11 // pred_check
          %p279 = pneg %p189
        $region38: #{_lambda_.2} parent=11 // pred_check_branch
          %281 = sbr.rel (%p279) target = $region40
        $region39: #{_lambda_.2} parent=11 // pred_region
          _
        $region40: #{_lambda_.2} parent=11 // pred_fallthru
          _
        // Predicated region
        $region41: #{_lambda_.2} parent=11 // pred_check
          %p282 = pneg %p210
        $region42: #{_lambda_.2} parent=11 // pred_check_branch
          %284 = sbr.rel (%p282) target = $region44
        $region43: #{_lambda_.2} parent=11 // pred_region
          _
        $region44: #{_lambda_.2} parent=11 // pred_fallthru
          _
      $region12: #{_lambda_.2} parent=5 // pred_fallthru
        _
      %p285 = scmp.lt.s32.totalorder %s16, 2
      // Predicated region
      $region45: #{_lambda_.2} parent=5 // pred_check
        %p286 = pneg %p285
      $region46: #{_lambda_.2} parent=5 // pred_check_branch
        %288 = sbr.rel (%p286) target = $region48
      $region47: #{_lambda_.2} parent=5 // pred_region
        // Predicated region
        $region49: #{_lambda_.2} parent=47 // pred_check
          %p289 = pneg %p36
        $region50: #{_lambda_.2} parent=47 // pred_check_branch
          %291 = sbr.rel (%p289) target = $region52
        $region51: #{_lambda_.2} parent=47 // pred_region
          %p292 = scmp.lt.s32.totalorder %s16, 1
          %s293 = scalar_select %p292, %s16, 1
          %s294 = smul.addr %s293, 9
          %s295 = smul.addr %s294, 8
          %s296 = scalar_lea.vmem %s0, %s295
        $region52: #{_lambda_.2} parent=47 // pred_fallthru
          _
      $region48: #{_lambda_.2} parent=5 // pred_fallthru
        _
      %p297 = scmp.le.s32.totalorder 1, %s16
      %p298 = scmp.lt.s32.totalorder %s16, 3
      %p299 = pnand %p297, %p298
      %p300 = pneg %p299
      // Predicated region
      $region53: #{_lambda_.2} parent=5 // pred_check
        _
      $region54: #{_lambda_.2} parent=5 // pred_check_branch
        %302 = sbr.rel (%p299) target = $region56
      $region55: #{_lambda_.2} parent=5 // pred_region
        %s303 = ssub.s32 %s16, 1
        // Predicated region
        $region57: #{_lambda_.2} parent=55 // pred_check
          %p304 = pneg %p147
        $region58: #{_lambda_.2} parent=55 // pred_check_branch
          %306 = sbr.rel (%p304) target = $region60
        $region59: #{_lambda_.2} parent=55 // pred_region
          %307 = dma.done [#allocation6], 1280
        $region60: #{_lambda_.2} parent=55 // pred_fallthru
          _
        %p308 = scmp.lt.s32.totalorder %s21, 1
        %s309 = scalar_select %p308, %s21, 1
        %s310 = smul.addr %s309, 9
        %s311 = smul.addr %s310, 8
        %s312 = scalar_lea.vmem %s0, %s311
        %p313 = pneg %p42
        %p314 = pneg %p39
        %p315 = pneg %p63
        %p316 = pneg %p60
        %p317 = pneg %p84
        %p318 = pneg %p81
        %p319 = pneg %p105
        %p320 = pneg %p102
        %p321 = pneg %p126
        %p322 = pneg %p123
        %p323 = pneg %p147
        %p324 = pneg %p144
        %p325 = pneg %p168
        %p326 = pneg %p165
        %p327 = pneg %p189
        %p328 = pneg %p186
        %p329 = pneg %p210
        %p330 = pneg %p207
        %p331 = pneg %p236
        %p332 = pneg %p233
        %p333 = scmp.lt.s32.totalorder %s21, 1
        %s334 = scalar_select %p333, %s21, 1
        %s335 = smul.addr %s334, 2
        %s336 = scalar_lea.vmem %s9, %s335
        %p337 = scmp.lt.s32.totalorder %s21, 1
        %s338 = scalar_select %p337, %s21, 1
        %s339 = smul.addr %s338, 9
        %s340 = smul.addr %s339, 8
        %s341 = scalar_lea.vmem %s0, %s340
        %p342 = scmp.lt.s32.totalorder %s21, 1
        %s343 = scalar_select %p342, %s21, 1
        %s344 = smul.addr %s343, 2
        %s345 = scalar_lea.vmem %s9, %s344
        %v347 = vld [vmem:[%s1] sm:$0x1]
        %v348 = vld [vmem:[%s341] ss:$2 sm:$0xff]
        %s349 = scalar_lea.vmem %s341, 16
        %v350 = vld [vmem:[%s349] ss:$2 sm:$0xff]
        %s351 = scalar_lea.vmem %s341, 32
        %v352 = vld [vmem:[%s351] ss:$2 sm:$0xff]
        %s353 = scalar_lea.vmem %s341, 48
        %v354 = vld [vmem:[%s353] ss:$2 sm:$0xff]
        %356 = vset.pattern.permute.xlu0 0
        %357 = vperm.xlu0 %356, %v348
        %v358 = vpop.permute.xlu0 %357
        %361 = vset.pattern.permute.xlu0 0
        %362 = vperm.xlu0 %361, %v350
        %v363 = vpop.permute.xlu0 %362
        %366 = vset.pattern.permute.xlu0 0
        %367 = vperm.xlu0 %366, %v352
        %v368 = vpop.permute.xlu0 %367
        %371 = vset.pattern.permute.xlu0 0
        %372 = vperm.xlu0 %371, %v354
        %v373 = vpop.permute.xlu0 %372
        %v375 = vlaneseq
        %v376 = vshrl.u32 %v375, 7
        %v377 = vsub.s32 0, %v376
        %v378 = vrot.slane %v347, %v377
        %v379 = vmul.f32 %v358, %v378
        %v380 = vmul.f32 %v363, %v378
        %v381 = vmul.f32 %v368, %v378
        %v382 = vmul.f32 %v373, %v378
        %v383 = vadd.f32 %v379, 0.0
        %v384 = vadd.f32 %v380, 0.0
        %v385 = vadd.f32 %v381, 0.0
        %v386 = vadd.f32 %v382, 0.0
        %s387 = scalar_lea.vmem %s341, 1
        %v388 = vld [vmem:[%s387] ss:$2 sm:$0xff]
        %s389 = scalar_lea.vmem %s341, 17
        %v390 = vld [vmem:[%s389] ss:$2 sm:$0xff]
        %s391 = scalar_lea.vmem %s341, 33
        %v392 = vld [vmem:[%s391] ss:$2 sm:$0xff]
        %s393 = scalar_lea.vmem %s341, 49
        %v394 = vld [vmem:[%s393] ss:$2 sm:$0xff]
        %396 = vset.pattern.permute.xlu0 0
        %397 = vperm.xlu0 %396, %v388
        %v398 = vpop.permute.xlu0 %397
        %401 = vset.pattern.permute.xlu0 0
        %402 = vperm.xlu0 %401, %v390
        %v403 = vpop.permute.xlu0 %402
        %406 = vset.pattern.permute.xlu0 0
        %407 = vperm.xlu0 %406, %v392
        %v408 = vpop.permute.xlu0 %407
        %411 = vset.pattern.permute.xlu0 0
        %412 = vperm.xlu0 %411, %v394
        %v413 = vpop.permute.xlu0 %412
        %v415 = vmul.f32 %v398, %v378
        %v416 = vmul.f32 %v403, %v378
        %v417 = vmul.f32 %v408, %v378
        %v418 = vmul.f32 %v413, %v378
        %v419 = vadd.f32 %v415, 0.0
        %v420 = vadd.f32 %v416, 0.0
        %v421 = vadd.f32 %v417, 0.0
        %v422 = vadd.f32 %v418, 0.0
        %v423 = vld [vmem:[%s1 + $0x1] sm:$0x1]
        %v424 = vlaneseq
        %v425 = vshrl.u32 %v424, 7
        %v426 = vsub.s32 0, %v425
        %v427 = vrot.slane %v423, %v426
        %v428 = vmul.f32 %v398, %v427
        %v429 = vmul.f32 %v403, %v427
        %v430 = vmul.f32 %v408, %v427
        %v431 = vmul.f32 %v413, %v427
        %v432 = vadd.f32 %v383, %v428
        %v433 = vadd.f32 %v384, %v429
        %v434 = vadd.f32 %v385, %v430
        %v435 = vadd.f32 %v386, %v431
        %s436 = scalar_lea.vmem %s341, 2
        %v437 = vld [vmem:[%s436] ss:$2 sm:$0xff]
        %s438 = scalar_lea.vmem %s341, 18
        %v439 = vld [vmem:[%s438] ss:$2 sm:$0xff]
        %s440 = scalar_lea.vmem %s341, 34
        %v441 = vld [vmem:[%s440] ss:$2 sm:$0xff]
        %s442 = scalar_lea.vmem %s341, 50
        %v443 = vld [vmem:[%s442] ss:$2 sm:$0xff]
        %445 = vset.pattern.permute.xlu0 0
        %446 = vperm.xlu0 %445, %v437
        %v447 = vpop.permute.xlu0 %446
        %450 = vset.pattern.permute.xlu0 0
        %451 = vperm.xlu0 %450, %v439
        %v452 = vpop.permute.xlu0 %451
        %455 = vset.pattern.permute.xlu0 0
        %456 = vperm.xlu0 %455, %v441
        %v457 = vpop.permute.xlu0 %456
        %460 = vset.pattern.permute.xlu0 0
        %461 = vperm.xlu0 %460, %v443
        %v462 = vpop.permute.xlu0 %461
        %v464 = vmul.f32 %v447, %v427
        %v465 = vmul.f32 %v452, %v427
        %v466 = vmul.f32 %v457, %v427
        %v467 = vmul.f32 %v462, %v427
        %v468 = vadd.f32 %v419, %v464
        %v469 = vadd.f32 %v420, %v465
        %v470 = vadd.f32 %v421, %v466
        %v471 = vadd.f32 %v422, %v467
        %v472 = vld [vmem:[%s1 + $0x2] sm:$0x1]
        %v473 = vlaneseq
        %v474 = vshrl.u32 %v473, 7
        %v475 = vsub.s32 0, %v474
        %v476 = vrot.slane %v472, %v475
        %v477 = vmul.f32 %v447, %v476
        %v478 = vmul.f32 %v452, %v476
        %v479 = vmul.f32 %v457, %v476
        %v480 = vmul.f32 %v462, %v476
        %v481 = vadd.f32 %v432, %v477
        %v482 = vadd.f32 %v433, %v478
        %v483 = vadd.f32 %v434, %v479
        %v484 = vadd.f32 %v435, %v480
        %s485 = scalar_lea.vmem %s341, 3
        %v486 = vld [vmem:[%s485] ss:$2 sm:$0xff]
        %s487 = scalar_lea.vmem %s341, 19
        %v488 = vld [vmem:[%s487] ss:$2 sm:$0xff]
        %s489 = scalar_lea.vmem %s341, 35
        %v490 = vld [vmem:[%s489] ss:$2 sm:$0xff]
        %s491 = scalar_lea.vmem %s341, 51
        %v492 = vld [vmem:[%s491] ss:$2 sm:$0xff]
        %494 = vset.pattern.permute.xlu0 0
        %495 = vperm.xlu0 %494, %v486
        %v496 = vpop.permute.xlu0 %495
        %499 = vset.pattern.permute.xlu0 0
        %500 = vperm.xlu0 %499, %v488
        %v501 = vpop.permute.xlu0 %500
        %504 = vset.pattern.permute.xlu0 0
        %505 = vperm.xlu0 %504, %v490
        %v506 = vpop.permute.xlu0 %505
        %509 = vset.pattern.permute.xlu0 0
        %510 = vperm.xlu0 %509, %v492
        %v511 = vpop.permute.xlu0 %510
        %v513 = vmul.f32 %v496, %v476
        %v514 = vmul.f32 %v501, %v476
        %v515 = vmul.f32 %v506, %v476
        %v516 = vmul.f32 %v511, %v476
        %v517 = vadd.f32 %v468, %v513
        %v518 = vadd.f32 %v469, %v514
        %v519 = vadd.f32 %v470, %v515
        %v520 = vadd.f32 %v471, %v516
        %v521 = vld [vmem:[%s1 + $0x3] sm:$0x1]
        %v522 = vlaneseq
        %v523 = vshrl.u32 %v522, 7
        %v524 = vsub.s32 0, %v523
        %v525 = vrot.slane %v521, %v524
        %v526 = vmul.f32 %v496, %v525
        %v527 = vmul.f32 %v501, %v525
        %v528 = vmul.f32 %v506, %v525
        %v529 = vmul.f32 %v511, %v525
        %v530 = vadd.f32 %v481, %v526
        %v531 = vadd.f32 %v482, %v527
        %v532 = vadd.f32 %v483, %v528
        %v533 = vadd.f32 %v484, %v529
        %s534 = scalar_lea.vmem %s341, 4
        %v535 = vld [vmem:[%s534] ss:$2 sm:$0xff]
        %s536 = scalar_lea.vmem %s341, 20
        %v537 = vld [vmem:[%s536] ss:$2 sm:$0xff]
        %s538 = scalar_lea.vmem %s341, 36
        %v539 = vld [vmem:[%s538] ss:$2 sm:$0xff]
        %s540 = scalar_lea.vmem %s341, 52
        %v541 = vld [vmem:[%s540] ss:$2 sm:$0xff]
        %543 = vset.pattern.permute.xlu0 0
        %544 = vperm.xlu0 %543, %v535
        %v545 = vpop.permute.xlu0 %544
        %548 = vset.pattern.permute.xlu0 0
        %549 = vperm.xlu0 %548, %v537
        %v550 = vpop.permute.xlu0 %549
        %553 = vset.pattern.permute.xlu0 0
        %554 = vperm.xlu0 %553, %v539
        %v555 = vpop.permute.xlu0 %554
        %558 = vset.pattern.permute.xlu0 0
        %559 = vperm.xlu0 %558, %v541
        %v560 = vpop.permute.xlu0 %559
        %v562 = vmul.f32 %v545, %v525
        %v563 = vmul.f32 %v550, %v525
        %v564 = vmul.f32 %v555, %v525
        %v565 = vmul.f32 %v560, %v525
        %v566 = vadd.f32 %v517, %v562
        %v567 = vadd.f32 %v518, %v563
        %v568 = vadd.f32 %v519, %v564
        %v569 = vadd.f32 %v520, %v565
        %v570 = vld [vmem:[%s1 + $0x4] sm:$0x1]
        %v571 = vlaneseq
        %v572 = vshrl.u32 %v571, 7
        %v573 = vsub.s32 0, %v572
        %v574 = vrot.slane %v570, %v573
        %v575 = vmul.f32 %v545, %v574
        %v576 = vmul.f32 %v550, %v574
        %v577 = vmul.f32 %v555, %v574
        %v578 = vmul.f32 %v560, %v574
        %v579 = vadd.f32 %v530, %v575
        %v580 = vadd.f32 %v531, %v576
        %v581 = vadd.f32 %v532, %v577
        %v582 = vadd.f32 %v533, %v578
        %s583 = scalar_lea.vmem %s341, 5
        %v584 = vld [vmem:[%s583] ss:$2 sm:$0xff]
        %s585 = scalar_lea.vmem %s341, 21
        %v586 = vld [vmem:[%s585] ss:$2 sm:$0xff]
        %s587 = scalar_lea.vmem %s341, 37
        %v588 = vld [vmem:[%s587] ss:$2 sm:$0xff]
        %s589 = scalar_lea.vmem %s341, 53
        %v590 = vld [vmem:[%s589] ss:$2 sm:$0xff]
        %592 = vset.pattern.permute.xlu0 0
        %593 = vperm.xlu0 %592, %v584
        %v594 = vpop.permute.xlu0 %593
        %597 = vset.pattern.permute.xlu0 0
        %598 = vperm.xlu0 %597, %v586
        %v599 = vpop.permute.xlu0 %598
        %602 = vset.pattern.permute.xlu0 0
        %603 = vperm.xlu0 %602, %v588
        %v604 = vpop.permute.xlu0 %603
        %607 = vset.pattern.permute.xlu0 0
        %608 = vperm.xlu0 %607, %v590
        %v609 = vpop.permute.xlu0 %608
        %v611 = vmul.f32 %v594, %v574
        %v612 = vmul.f32 %v599, %v574
        %v613 = vmul.f32 %v604, %v574
        %v614 = vmul.f32 %v609, %v574
        %v615 = vadd.f32 %v566, %v611
        %v616 = vadd.f32 %v567, %v612
        %v617 = vadd.f32 %v568, %v613
        %v618 = vadd.f32 %v569, %v614
        %v619 = vld [vmem:[%s2] sm:$0x1]
        %v621 = vlaneseq
        %v622 = vshrl.u32 %v621, 7
        %v623 = vsub.s32 0, %v622
        %v624 = vrot.slane %v619, %v623
        %v626 = vadd.f32 %v579, %v624
        %v627 = vadd.f32 %v580, %v624
        %v628 = vadd.f32 %v581, %v624
        %v629 = vadd.f32 %v582, %v624
        %v630 = vmax.f32 %v626, 0.0
        %v631 = vmax.f32 %v627, 0.0
        %v632 = vmax.f32 %v628, 0.0
        %v633 = vmax.f32 %v629, 0.0
        %v634 = vadd.f32 %v615, %v624
        %v635 = vadd.f32 %v616, %v624
        %v636 = vadd.f32 %v617, %v624
        %v637 = vadd.f32 %v618, %v624
        %v638 = vmax.f32 %v634, 0.0
        %v639 = vmax.f32 %v635, 0.0
        %v640 = vmax.f32 %v636, 0.0
        %v641 = vmax.f32 %v637, 0.0
        %v642 = vmax.f32 %v630, %v638
        %v643 = vmax.f32 %v631, %v639
        %v644 = vmax.f32 %v632, %v640
        %v645 = vmax.f32 %v633, %v641
        %vm646 = vcmask 123904
        %647 = vst.msk [vmem:[#allocation2] sm:$0x3] %vm646, 0.0
        %vm648 = vcmask 130048
        %649 = vst.msk [vmem:[#allocation2 + $0x2] sm:$0xff] %vm648, %v642
        %650 = vst.msk [vmem:[#allocation2 + $0xa] sm:$0xff] %vm648, %v643
        %651 = vst.msk [vmem:[#allocation2 + $0x12] sm:$0xff] %vm648, %v644
        %652 = vst.msk [vmem:[#allocation2 + $0x1a] sm:$0xff] %vm648, %v645
        %653 = vst.msk [vmem:[#allocation2 + $0x22] sm:$0x3] %vm646, 0.0
        %v654 = vld [vmem:[%s3] sm:$0xf]
        %v655 = vld [vmem:[%s3 + $0x4] sm:$0xf]
        %v656 = vld [vmem:[#allocation2] ss:$2 sm:$0xff]
        %s657 = scalar_lea.vmem [#allocation2], 16
        %v658 = vld [vmem:[%s657] ss:$2 sm:$0xff]
        %s659 = scalar_lea.vmem [#allocation2], 1
        %v660 = vld [vmem:[%s659] ss:$2 sm:$0xff]
        %s661 = scalar_lea.vmem [#allocation2], 17
        %v662 = vld [vmem:[%s661] ss:$2 sm:$0xff]
        %v663 = vpack.c.bf16 %v658, %v656
        %v664 = vpack.c.bf16 %v662, %v660
        %s665 = scalar_lea.vmem %s3, 8
        %v666 = vld [vmem:[%s665] sm:$0xf]
        %v667 = vld [vmem:[%s665 + $0x4] sm:$0xf]
        %s668 = scalar_lea.vmem [#allocation2], 2
        %v669 = vld [vmem:[%s668] ss:$2 sm:$0xff]
        %s670 = scalar_lea.vmem [#allocation2], 18
        %v671 = vld [vmem:[%s670] ss:$2 sm:$0xff]
        %v674 = vunpack.c.l.b16 %v666
        %v675 = vunpack.c.l.b16 %v667
        %v676 = vpack.c.b16 %v675, %v674
        %v679 = vsel %vm648, %v664, 0
        %681 = vmatprep.subr.bf16.mxu0 0
        %682 = vmatpush1.bf16.msra.mxu0 %v676
        %683 = vmatprep.subr.bf16.mxu0 0
        %684 = vmatpush1.bf16.msra.mxu0 0
        %685 = vmatprep.subr.bf16.mxu0 0
        %686 = vmatpush1.bf16.msra.mxu0 0
        %687 = vmatprep.subr.bf16.mxu0 0
        %688 = vmatpush1.bf16.msra.mxu0 0
        %689 = vmatprep.subr.bf16.mxu0 0
        %690 = vmatpush1.bf16.msra.mxu0 0
        %691 = vmatprep.subr.bf16.mxu0 0
        %692 = vmatpush1.bf16.msra.mxu0 0
        %693 = vmatprep.subr.bf16.mxu0 0
        %694 = vmatpush1.bf16.msra.mxu0 0
        %695 = vmatprep.subr.bf16.mxu0 0
        %696 = vmatpush1.bf16.msra.mxu0 0
        %697 = vmatprep.subr.bf16.mxu0 0
        %698 = vmatpush1.bf16.msra.mxu0 0
        %699 = vmatprep.subr.bf16.mxu0 0
        %700 = vmatpush1.bf16.msra.mxu0 0
        %701 = vmatprep.subr.bf16.mxu0 0
        %702 = vmatpush1.bf16.msra.mxu0 0
        %703 = vmatprep.subr.bf16.mxu0 0
        %704 = vmatpush1.bf16.msra.mxu0 0
        %705 = vmatprep.subr.bf16.mxu0 0
        %706 = vmatpush1.bf16.msra.mxu0 0
        %707 = vmatprep.subr.bf16.mxu0 0
        %708 = vmatpush1.bf16.msra.mxu0 0
        %709 = vmatprep.subr.bf16.mxu0 0
        %710 = vmatpush1.bf16.msra.mxu0 0
        %711 = vmatprep.subr.bf16.mxu0 0
        %712 = vmatpush1.bf16.msra.mxu0 0
        %713 = vmatprep.mubr.bf16.mxu0 0
        %714 = vmatmul.mubr.bf16.gmra.mrb[0].mxu0 %v679
        %v715 = vpop.f32.mrb[0].mxu0
        %v716 = vadd.f32 0.0, %v715
        %v717 = vpop.f32.mrb[0].mxu0
        %v718 = vpop.f32.mrb[0].mxu0
        %v719 = vadd.f32 0.0, %v718
        %v720 = vpop.f32.mrb[0].mxu0
        %721 = vdwg.mxu0
        %v724 = vunpack.c.l.b16 %v654
        %v725 = vunpack.c.l.b16 %v655
        %v726 = vpack.c.b16 %v725, %v724
        %v729 = vsel %vm648, %v663, 0
        %731 = vmatprep.subr.bf16.mxu0 0
        %732 = vmatpush1.bf16.msra.mxu0 %v726
        %733 = vmatprep.subr.bf16.mxu0 0
        %734 = vmatpush1.bf16.msra.mxu0 0
        %735 = vmatprep.subr.bf16.mxu0 0
        %736 = vmatpush1.bf16.msra.mxu0 0
        %737 = vmatprep.subr.bf16.mxu0 0
        %738 = vmatpush1.bf16.msra.mxu0 0
        %739 = vmatprep.subr.bf16.mxu0 0
        %740 = vmatpush1.bf16.msra.mxu0 0
        %741 = vmatprep.subr.bf16.mxu0 0
        %742 = vmatpush1.bf16.msra.mxu0 0
        %743 = vmatprep.subr.bf16.mxu0 0
        %744 = vmatpush1.bf16.msra.mxu0 0
        %745 = vmatprep.subr.bf16.mxu0 0
        %746 = vmatpush1.bf16.msra.mxu0 0
        %747 = vmatprep.subr.bf16.mxu0 0
        %748 = vmatpush1.bf16.msra.mxu0 0
        %749 = vmatprep.subr.bf16.mxu0 0
        %750 = vmatpush1.bf16.msra.mxu0 0
        %751 = vmatprep.subr.bf16.mxu0 0
        %752 = vmatpush1.bf16.msra.mxu0 0
        %753 = vmatprep.subr.bf16.mxu0 0
        %754 = vmatpush1.bf16.msra.mxu0 0
        %755 = vmatprep.subr.bf16.mxu0 0
        %756 = vmatpush1.bf16.msra.mxu0 0
        %757 = vmatprep.subr.bf16.mxu0 0
        %758 = vmatpush1.bf16.msra.mxu0 0
        %759 = vmatprep.subr.bf16.mxu0 0
        %760 = vmatpush1.bf16.msra.mxu0 0
        %761 = vmatprep.subr.bf16.mxu0 0
        %762 = vmatpush1.bf16.msra.mxu0 0
        %763 = vmatprep.mubr.bf16.mxu0 0
        %764 = vmatmul.mubr.bf16.gmra.mrb[0].mxu0 %v729
        %v765 = vpop.f32.mrb[0].mxu0
        %v766 = vadd.f32 %v716, %v765
        %v767 = vpop.f32.mrb[0].mxu0
        %v768 = vpop.f32.mrb[0].mxu0
        %v769 = vadd.f32 %v719, %v768
        %v770 = vpop.f32.mrb[0].mxu0
        %771 = vdwg.mxu0
        %v772 = vpack.c.bf16 %v671, %v669
        %v774 = vsel %vm648, %v772, 0
        %776 = vmatprep.subr.bf16.mxu0 0
        %777 = vmatpush1.bf16.msra.mxu0 %v676
        %778 = vmatprep.subr.bf16.mxu0 0
        %779 = vmatpush1.bf16.msra.mxu0 0
        %780 = vmatprep.subr.bf16.mxu0 0
        %781 = vmatpush1.bf16.msra.mxu0 0
        %782 = vmatprep.subr.bf16.mxu0 0
        %783 = vmatpush1.bf16.msra.mxu0 0
        %784 = vmatprep.subr.bf16.mxu0 0
        %785 = vmatpush1.bf16.msra.mxu0 0
        %786 = vmatprep.subr.bf16.mxu0 0
        %787 = vmatpush1.bf16.msra.mxu0 0
        %788 = vmatprep.subr.bf16.mxu0 0
        %789 = vmatpush1.bf16.msra.mxu0 0
        %790 = vmatprep.subr.bf16.mxu0 0
        %791 = vmatpush1.bf16.msra.mxu0 0
        %792 = vmatprep.subr.bf16.mxu0 0
        %793 = vmatpush1.bf16.msra.mxu0 0
        %794 = vmatprep.subr.bf16.mxu0 0
        %795 = vmatpush1.bf16.msra.mxu0 0
        %796 = vmatprep.subr.bf16.mxu0 0
        %797 = vmatpush1.bf16.msra.mxu0 0
        %798 = vmatprep.subr.bf16.mxu0 0
        %799 = vmatpush1.bf16.msra.mxu0 0
        %800 = vmatprep.subr.bf16.mxu0 0
        %801 = vmatpush1.bf16.msra.mxu0 0
        %802 = vmatprep.subr.bf16.mxu0 0
        %803 = vmatpush1.bf16.msra.mxu0 0
        %804 = vmatprep.subr.bf16.mxu0 0
        %805 = vmatpush1.bf16.msra.mxu0 0
        %806 = vmatprep.subr.bf16.mxu0 0
        %807 = vmatpush1.bf16.msra.mxu0 0
        %808 = vmatprep.mubr.bf16.mxu0 0
        %809 = vmatmul.mubr.bf16.gmra.mrb[0].mxu0 %v774
        %v810 = vpop.f32.mrb[0].mxu0
        %v811 = vadd.f32 0.0, %v810
        %v812 = vpop.f32.mrb[0].mxu0
        %v813 = vpop.f32.mrb[0].mxu0
        %v814 = vadd.f32 0.0, %v813
        %v815 = vpop.f32.mrb[0].mxu0
        %816 = vdwg.mxu0
        %817 = vmatprep.subr.bf16.mxu0 0
        %818 = vmatpush1.bf16.msra.mxu0 %v726
        %819 = vmatprep.subr.bf16.mxu0 0
        %820 = vmatpush1.bf16.msra.mxu0 0
        %821 = vmatprep.subr.bf16.mxu0 0
        %822 = vmatpush1.bf16.msra.mxu0 0
        %823 = vmatprep.subr.bf16.mxu0 0
        %824 = vmatpush1.bf16.msra.mxu0 0
        %825 = vmatprep.subr.bf16.mxu0 0
        %826 = vmatpush1.bf16.msra.mxu0 0
        %827 = vmatprep.subr.bf16.mxu0 0
        %828 = vmatpush1.bf16.msra.mxu0 0
        %829 = vmatprep.subr.bf16.mxu0 0
        %830 = vmatpush1.bf16.msra.mxu0 0
        %831 = vmatprep.subr.bf16.mxu0 0
        %832 = vmatpush1.bf16.msra.mxu0 0
        %833 = vmatprep.subr.bf16.mxu0 0
        %834 = vmatpush1.bf16.msra.mxu0 0
        %835 = vmatprep.subr.bf16.mxu0 0
        %836 = vmatpush1.bf16.msra.mxu0 0
        %837 = vmatprep.subr.bf16.mxu0 0
        %838 = vmatpush1.bf16.msra.mxu0 0
        %839 = vmatprep.subr.bf16.mxu0 0
        %840 = vmatpush1.bf16.msra.mxu0 0
        %841 = vmatprep.subr.bf16.mxu0 0
        %842 = vmatpush1.bf16.msra.mxu0 0
        %843 = vmatprep.subr.bf16.mxu0 0
        %844 = vmatpush1.bf16.msra.mxu0 0
        %845 = vmatprep.subr.bf16.mxu0 0
        %846 = vmatpush1.bf16.msra.mxu0 0
        %847 = vmatprep.subr.bf16.mxu0 0
        %848 = vmatpush1.bf16.msra.mxu0 0
        %849 = vmatprep.mubr.bf16.mxu0 0
        %850 = vmatmul.mubr.bf16.gmra.mrb[0].mxu0 %v679
        %v851 = vpop.f32.mrb[0].mxu0
        %v852 = vadd.f32 %v811, %v851
        %v853 = vpop.f32.mrb[0].mxu0
        %v854 = vpop.f32.mrb[0].mxu0
        %v855 = vadd.f32 %v814, %v854
        %v856 = vpop.f32.mrb[0].mxu0
        %857 = vdwg.mxu0
        %s858 = scalar_lea.vmem %s3, 16
        %v859 = vld [vmem:[%s858] sm:$0xf]
        %v860 = vld [vmem:[%s858 + $0x4] sm:$0xf]
        %s861 = scalar_lea.vmem [#allocation2], 3
        %v862 = vld [vmem:[%s861] ss:$2 sm:$0xff]
        %s863 = scalar_lea.vmem [#allocation2], 19
        %v864 = vld [vmem:[%s863] ss:$2 sm:$0xff]
        %v867 = vunpack.c.l.b16 %v859
        %v868 = vunpack.c.l.b16 %v860
        %v869 = vpack.c.b16 %v868, %v867
        %871 = vmatprep.subr.bf16.mxu0 0
        %872 = vmatpush1.bf16.msra.mxu0 %v869
        %873 = vmatprep.subr.bf16.mxu0 0
        %874 = vmatpush1.bf16.msra.mxu0 0
        %875 = vmatprep.subr.bf16.mxu0 0
        %876 = vmatpush1.bf16.msra.mxu0 0
        %877 = vmatprep.subr.bf16.mxu0 0
        %878 = vmatpush1.bf16.msra.mxu0 0
        %879 = vmatprep.subr.bf16.mxu0 0
        %880 = vmatpush1.bf16.msra.mxu0 0
        %881 = vmatprep.subr.bf16.mxu0 0
        %882 = vmatpush1.bf16.msra.mxu0 0
        %883 = vmatprep.subr.bf16.mxu0 0
        %884 = vmatpush1.bf16.msra.mxu0 0
        %885 = vmatprep.subr.bf16.mxu0 0
        %886 = vmatpush1.bf16.msra.mxu0 0
        %887 = vmatprep.subr.bf16.mxu0 0
        %888 = vmatpush1.bf16.msra.mxu0 0
        %889 = vmatprep.subr.bf16.mxu0 0
        %890 = vmatpush1.bf16.msra.mxu0 0
        %891 = vmatprep.subr.bf16.mxu0 0
        %892 = vmatpush1.bf16.msra.mxu0 0
        %893 = vmatprep.subr.bf16.mxu0 0
        %894 = vmatpush1.bf16.msra.mxu0 0
        %895 = vmatprep.subr.bf16.mxu0 0
        %896 = vmatpush1.bf16.msra.mxu0 0
        %897 = vmatprep.subr.bf16.mxu0 0
        %898 = vmatpush1.bf16.msra.mxu0 0
        %899 = vmatprep.subr.bf16.mxu0 0
        %900 = vmatpush1.bf16.msra.mxu0 0
        %901 = vmatprep.subr.bf16.mxu0 0
        %902 = vmatpush1.bf16.msra.mxu0 0
        %903 = vmatprep.mubr.bf16.mxu0 0
        %904 = vmatmul.mubr.bf16.gmra.mrb[0].mxu0 %v774
        %v905 = vpop.f32.mrb[0].mxu0
        %v906 = vadd.f32 0.0, %v905
        %v907 = vpop.f32.mrb[0].mxu0
        %v908 = vpop.f32.mrb[0].mxu0
        %v909 = vadd.f32 0.0, %v908
        %v910 = vpop.f32.mrb[0].mxu0
        %911 = vdwg.mxu0
        %v912 = vadd.f32 %v766, %v906
        %v913 = vadd.f32 %v769, %v909
        %v914 = vpack.c.bf16 %v864, %v862
        %v916 = vsel %vm648, %v914, 0
        %918 = vmatprep.subr.bf16.mxu0 0
        %919 = vmatpush1.bf16.msra.mxu0 %v869
        %920 = vmatprep.subr.bf16.mxu0 0
        %921 = vmatpush1.bf16.msra.mxu0 0
        %922 = vmatprep.subr.bf16.mxu0 0
        %923 = vmatpush1.bf16.msra.mxu0 0
        %924 = vmatprep.subr.bf16.mxu0 0
        %925 = vmatpush1.bf16.msra.mxu0 0
        %926 = vmatprep.subr.bf16.mxu0 0
        %927 = vmatpush1.bf16.msra.mxu0 0
        %928 = vmatprep.subr.bf16.mxu0 0
        %929 = vmatpush1.bf16.msra.mxu0 0
        %930 = vmatprep.subr.bf16.mxu0 0
        %931 = vmatpush1.bf16.msra.mxu0 0
        %932 = vmatprep.subr.bf16.mxu0 0
        %933 = vmatpush1.bf16.msra.mxu0 0
        %934 = vmatprep.subr.bf16.mxu0 0
        %935 = vmatpush1.bf16.msra.mxu0 0
        %936 = vmatprep.subr.bf16.mxu0 0
        %937 = vmatpush1.bf16.msra.mxu0 0
        %938 = vmatprep.subr.bf16.mxu0 0
        %939 = vmatpush1.bf16.msra.mxu0 0
        %940 = vmatprep.subr.bf16.mxu0 0
        %941 = vmatpush1.bf16.msra.mxu0 0
        %942 = vmatprep.subr.bf16.mxu0 0
        %943 = vmatpush1.bf16.msra.mxu0 0
        %944 = vmatprep.subr.bf16.mxu0 0
        %945 = vmatpush1.bf16.msra.mxu0 0
        %946 = vmatprep.subr.bf16.mxu0 0
        %947 = vmatpush1.bf16.msra.mxu0 0
        %948 = vmatprep.subr.bf16.mxu0 0
        %949 = vmatpush1.bf16.msra.mxu0 0
        %950 = vmatprep.mubr.bf16.mxu0 0
        %951 = vmatmul.mubr.bf16.gmra.mrb[0].mxu0 %v916
        %v952 = vpop.f32.mrb[0].mxu0
        %v953 = vadd.f32 0.0, %v952
        %v954 = vpop.f32.mrb[0].mxu0
        %v955 = vpop.f32.mrb[0].mxu0
        %v956 = vadd.f32 0.0, %v955
        %v957 = vpop.f32.mrb[0].mxu0
        %958 = vdwg.mxu0
        %v959 = vadd.f32 %v852, %v953
        %v960 = vadd.f32 %v855, %v956
        %s961 = scalar_lea.vmem %s3, 24
        %v962 = vld [vmem:[%s961] sm:$0xf]
        %v963 = vld [vmem:[%s961 + $0x4] sm:$0xf]
        %s964 = scalar_lea.vmem [#allocation2], 4
        %v965 = vld [vmem:[%s964] ss:$2 sm:$0xff]
        %s966 = scalar_lea.vmem [#allocation2], 20
        %v967 = vld [vmem:[%s966] ss:$2 sm:$0xff]
        %v970 = vunpack.c.l.b16 %v962
        %v971 = vunpack.c.l.b16 %v963
        %v972 = vpack.c.b16 %v971, %v970
        %974 = vmatprep.subr.bf16.mxu0 0
        %975 = vmatpush1.bf16.msra.mxu0 %v972
        %976 = vmatprep.subr.bf16.mxu0 0
        %977 = vmatpush1.bf16.msra.mxu0 0
        %978 = vmatprep.subr.bf16.mxu0 0
        %979 = vmatpush1.bf16.msra.mxu0 0
        %980 = vmatprep.subr.bf16.mxu0 0
        %981 = vmatpush1.bf16.msra.mxu0 0
        %982 = vmatprep.subr.bf16.mxu0 0
        %983 = vmatpush1.bf16.msra.mxu0 0
        %984 = vmatprep.subr.bf16.mxu0 0
        %985 = vmatpush1.bf16.msra.mxu0 0
        %986 = vmatprep.subr.bf16.mxu0 0
        %987 = vmatpush1.bf16.msra.mxu0 0
        %988 = vmatprep.subr.bf16.mxu0 0
        %989 = vmatpush1.bf16.msra.mxu0 0
        %990 = vmatprep.subr.bf16.mxu0 0
        %991 = vmatpush1.bf16.msra.mxu0 0
        %992 = vmatprep.subr.bf16.mxu0 0
        %993 = vmatpush1.bf16.msra.mxu0 0
        %994 = vmatprep.subr.bf16.mxu0 0
        %995 = vmatpush1.bf16.msra.mxu0 0
        %996 = vmatprep.subr.bf16.mxu0 0
        %997 = vmatpush1.bf16.msra.mxu0 0
        %998 = vmatprep.subr.bf16.mxu0 0
        %999 = vmatpush1.bf16.msra.mxu0 0
        %1000 = vmatprep.subr.bf16.mxu0 0
        %1001 = vmatpush1.bf16.msra.mxu0 0
        %1002 = vmatprep.subr.bf16.mxu0 0
        %1003 = vmatpush1.bf16.msra.mxu0 0
        %1004 = vmatprep.subr.bf16.mxu0 0
        %1005 = vmatpush1.bf16.msra.mxu0 0
        %1006 = vmatprep.mubr.bf16.mxu0 0
        %1007 = vmatmul.mubr.bf16.gmra.mrb[0].mxu0 %v916
        %v1008 = vpop.f32.mrb[0].mxu0
        %v1009 = vadd.f32 0.0, %v1008
        %v1010 = vpop.f32.mrb[0].mxu0
        %v1011 = vpop.f32.mrb[0].mxu0
        %v1012 = vadd.f32 0.0, %v1011
        %v1013 = vpop.f32.mrb[0].mxu0
        %1014 = vdwg.mxu0
        %v1015 = vadd.f32 %v912, %v1009
        %v1016 = vadd.f32 %v913, %v1012
        %v1017 = vpack.c.bf16 %v967, %v965
        %v1019 = vsel %vm648, %v1017, 0
        %1021 = vmatprep.subr.bf16.mxu0 0
        %1022 = vmatpush1.bf16.msra.mxu0 %v972
        %1023 = vmatprep.subr.bf16.mxu0 0
        %1024 = vmatpush1.bf16.msra.mxu0 0
        %1025 = vmatprep.subr.bf16.mxu0 0
        %1026 = vmatpush1.bf16.msra.mxu0 0
        %1027 = vmatprep.subr.bf16.mxu0 0
        %1028 = vmatpush1.bf16.msra.mxu0 0
        %1029 = vmatprep.subr.bf16.mxu0 0
        %1030 = vmatpush1.bf16.msra.mxu0 0
        %1031 = vmatprep.subr.bf16.mxu0 0
        %1032 = vmatpush1.bf16.msra.mxu0 0
        %1033 = vmatprep.subr.bf16.mxu0 0
        %1034 = vmatpush1.bf16.msra.mxu0 0
        %1035 = vmatprep.subr.bf16.mxu0 0
        %1036 = vmatpush1.bf16.msra.mxu0 0
        %1037 = vmatprep.subr.bf16.mxu0 0
        %1038 = vmatpush1.bf16.msra.mxu0 0
        %1039 = vmatprep.subr.bf16.mxu0 0
        %1040 = vmatpush1.bf16.msra.mxu0 0
        %1041 = vmatprep.subr.bf16.mxu0 0
        %1042 = vmatpush1.bf16.msra.mxu0 0
        %1043 = vmatprep.subr.bf16.mxu0 0
        %1044 = vmatpush1.bf16.msra.mxu0 0
        %1045 = vmatprep.subr.bf16.mxu0 0
        %1046 = vmatpush1.bf16.msra.mxu0 0
        %1047 = vmatprep.subr.bf16.mxu0 0
        %1048 = vmatpush1.bf16.msra.mxu0 0
        %1049 = vmatprep.subr.bf16.mxu0 0
        %1050 = vmatpush1.bf16.msra.mxu0 0
        %1051 = vmatprep.subr.bf16.mxu0 0
        %1052 = vmatpush1.bf16.msra.mxu0 0
        %1053 = vmatprep.mubr.bf16.mxu0 0
        %1054 = vmatmul.mubr.bf16.gmra.mrb[0].mxu0 %v1019
        %v1055 = vpop.f32.mrb[0].mxu0
        %v1056 = vadd.f32 0.0, %v1055
        %v1057 = vpop.f32.mrb[0].mxu0
        %v1058 = vpop.f32.mrb[0].mxu0
        %v1059 = vadd.f32 0.0, %v1058
        %v1060 = vpop.f32.mrb[0].mxu0
        %1061 = vdwg.mxu0
        %v1062 = vadd.f32 %v959, %v1056
        %v1063 = vadd.f32 %v960, %v1059
        %s1064 = scalar_lea.vmem %s3, 32
        %v1065 = vld [vmem:[%s1064] sm:$0xf]
        %v1066 = vld [vmem:[%s1064 + $0x4] sm:$0xf]
        %s1067 = scalar_lea.vmem [#allocation2], 5
        %v1068 = vld [vmem:[%s1067] ss:$2 sm:$0xff]
        %s1069 = scalar_lea.vmem [#allocation2], 21
        %v1070 = vld [vmem:[%s1069] ss:$2 sm:$0xff]
        %v1073 = vunpack.c.l.b16 %v1065
        %v1074 = vunpack.c.l.b16 %v1066
        %v1075 = vpack.c.b16 %v1074, %v1073
        %1077 = vmatprep.subr.bf16.mxu0 0
        %1078 = vmatpush1.bf16.msra.mxu0 %v1075
        %1079 = vmatprep.subr.bf16.mxu0 0
        %1080 = vmatpush1.bf16.msra.mxu0 0
        %1081 = vmatprep.subr.bf16.mxu0 0
        %1082 = vmatpush1.bf16.msra.mxu0 0
        %1083 = vmatprep.subr.bf16.mxu0 0
        %1084 = vmatpush1.bf16.msra.mxu0 0
        %1085 = vmatprep.subr.bf16.mxu0 0
        %1086 = vmatpush1.bf16.msra.mxu0 0
        %1087 = vmatprep.subr.bf16.mxu0 0
        %1088 = vmatpush1.bf16.msra.mxu0 0
        %1089 = vmatprep.subr.bf16.mxu0 0
        %1090 = vmatpush1.bf16.msra.mxu0 0
        %1091 = vmatprep.subr.bf16.mxu0 0
        %1092 = vmatpush1.bf16.msra.mxu0 0
        %1093 = vmatprep.subr.bf16.mxu0 0
        %1094 = vmatpush1.bf16.msra.mxu0 0
        %1095 = vmatprep.subr.bf16.mxu0 0
        %1096 = vmatpush1.bf16.msra.mxu0 0
        %1097 = vmatprep.subr.bf16.mxu0 0
        %1098 = vmatpush1.bf16.msra.mxu0 0
        %1099 = vmatprep.subr.bf16.mxu0 0
        %1100 = vmatpush1.bf16.msra.mxu0 0
        %1101 = vmatprep.subr.bf16.mxu0 0
        %1102 = vmatpush1.bf16.msra.mxu0 0
        %1103 = vmatprep.subr.bf16.mxu0 0
        %1104 = vmatpush1.bf16.msra.mxu0 0
        %1105 = vmatprep.subr.bf16.mxu0 0
        %1106 = vmatpush1.bf16.msra.mxu0 0
        %1107 = vmatprep.subr.bf16.mxu0 0
        %1108 = vmatpush1.bf16.msra.mxu0 0
        %1109 = vmatprep.mubr.bf16.mxu0 0
        %1110 = vmatmul.mubr.bf16.gmra.mrb[0].mxu0 %v1019
        %v1111 = vpop.f32.mrb[0].mxu0
        %v1112 = vadd.f32 0.0, %v1111
        %v1113 = vpop.f32.mrb[0].mxu0
        %v1114 = vpop.f32.mrb[0].mxu0
        %v1115 = vadd.f32 0.0, %v1114
        %v1116 = vpop.f32.mrb[0].mxu0
        %1117 = vdwg.mxu0
        %v1118 = vadd.f32 %v1015, %v1112
        %v1119 = vadd.f32 %v1016, %v1115
        %v1120 = vpack.c.bf16 %v1070, %v1068
        %v1122 = vsel %vm648, %v1120, 0
        %1124 = vmatprep.subr.bf16.mxu0 0
        %1125 = vmatpush1.bf16.msra.mxu0 %v1075
        %1126 = vmatprep.subr.bf16.mxu0 0
        %1127 = vmatpush1.bf16.msra.mxu0 0
        %1128 = vmatprep.subr.bf16.mxu0 0
        %1129 = vmatpush1.bf16.msra.mxu0 0
        %1130 = vmatprep.subr.bf16.mxu0 0
        %1131 = vmatpush1.bf16.msra.mxu0 0
        %1132 = vmatprep.subr.bf16.mxu0 0
        %1133 = vmatpush1.bf16.msra.mxu0 0
        %1134 = vmatprep.subr.bf16.mxu0 0
        %1135 = vmatpush1.bf16.msra.mxu0 0
        %1136 = vmatprep.subr.bf16.mxu0 0
        %1137 = vmatpush1.bf16.msra.mxu0 0
        %1138 = vmatprep.subr.bf16.mxu0 0
        %1139 = vmatpush1.bf16.msra.mxu0 0
        %1140 = vmatprep.subr.bf16.mxu0 0
        %1141 = vmatpush1.bf16.msra.mxu0 0
        %1142 = vmatprep.subr.bf16.mxu0 0
        %1143 = vmatpush1.bf16.msra.mxu0 0
        %1144 = vmatprep.subr.bf16.mxu0 0
        %1145 = vmatpush1.bf16.msra.mxu0 0
        %1146 = vmatprep.subr.bf16.mxu0 0
        %1147 = vmatpush1.bf16.msra.mxu0 0
        %1148 = vmatprep.subr.bf16.mxu0 0
        %1149 = vmatpush1.bf16.msra.mxu0 0
        %1150 = vmatprep.subr.bf16.mxu0 0
        %1151 = vmatpush1.bf16.msra.mxu0 0
        %1152 = vmatprep.subr.bf16.mxu0 0
        %1153 = vmatpush1.bf16.msra.mxu0 0
        %1154 = vmatprep.subr.bf16.mxu0 0
        %1155 = vmatpush1.bf16.msra.mxu0 0
        %1156 = vmatprep.mubr.bf16.mxu0 0
        %1157 = vmatmul.mubr.bf16.gmra.mrb[0].mxu0 %v1122
        %v1158 = vpop.f32.mrb[0].mxu0
        %v1159 = vadd.f32 0.0, %v1158
        %v1160 = vpop.f32.mrb[0].mxu0
        %v1161 = vpop.f32.mrb[0].mxu0
        %v1162 = vadd.f32 0.0, %v1161
        %v1163 = vpop.f32.mrb[0].mxu0
        %1164 = vdwg.mxu0
        %v1165 = vadd.f32 %v1062, %v1159
        %v1166 = vadd.f32 %v1063, %v1162
        %v1167 = vld [vmem:[%s4] sm:$0x1]
        %v1169 = vlaneseq
        %v1170 = vshrl.u32 %v1169, 7
        %v1171 = vsub.s32 0, %v1170
        %v1172 = vrot.slane %v1167, %v1171
        %v1174 = vadd.f32 %v1118, %v1172
        %v1175 = vadd.f32 %v1119, %v1172
        %v1176 = vmax.f32 %v1174, 0.0
        %v1177 = vmax.f32 %v1175, 0.0
        %v1178 = vadd.f32 %v1165, %v1172
        %v1179 = vadd.f32 %v1166, %v1172
        %v1180 = vmax.f32 %v1178, 0.0
        %v1181 = vmax.f32 %v1179, 0.0
        %v1182 = vmax.f32 %v1176, %v1180
        %v1183 = vmax.f32 %v1177, %v1181
        %vm1184 = vcmask 254976
        %1185 = vst.msk [vmem:[#allocation3] sm:$0x3] %vm1184, 0.0
        %vm1186 = vcmask 261120
        %1187 = vst.msk [vmem:[#allocation3 + $0x2] sm:$0xff] %vm1186, %v1182
        %1188 = vst.msk [vmem:[#allocation3 + $0xa] sm:$0xff] %vm1186, %v1183
        %1189 = vst.msk [vmem:[#allocation3 + $0x12] sm:$0x3] %vm1184, 0.0
        %v1190 = vld [vmem:[#allocation5] sm:$0xf]
        %v1191 = vld [vmem:[#allocation5 + $0x4] sm:$0xf]
        %v1192 = vld [vmem:[#allocation5 + $0x8] sm:$0xf]
        %v1193 = vld [vmem:[#allocation5 + $0xc] sm:$0xf]
        %v1194 = vld [vmem:[#allocation3] ss:$2 sm:$0xff]
        %s1195 = scalar_lea.vmem [#allocation3], 1
        %v1196 = vld [vmem:[%s1195] ss:$2 sm:$0xff]
        %v1197 = vpack.c.bf16 %v1194, %v1194
        %v1198 = vpack.c.bf16 %v1196, %v1196
        %s1199 = scalar_lea.vmem [#allocation5], 16
        %v1200 = vld [vmem:[%s1199] sm:$0xf]
        %v1201 = vld [vmem:[%s1199 + $0x4] sm:$0xf]
        %v1202 = vld [vmem:[%s1199 + $0x8] sm:$0xf]
        %v1203 = vld [vmem:[%s1199 + $0xc] sm:$0xf]
        %s1204 = scalar_lea.vmem [#allocation3], 2
        %v1205 = vld [vmem:[%s1204] ss:$2 sm:$0xff]
        %v1210 = vunpack.c.l.b16 %v1200
        %v1211 = vunpack.c.l.b16 %v1201
        %v1212 = vunpack.c.l.b16 %v1202
        %v1213 = vunpack.c.l.b16 %v1203
        %v1214 = vpack.c.b16 %v1211, %v1210
        %v1215 = vpack.c.b16 %v1213, %v1212
        %v1219 = vsel %vm1186, %v1198, 0
        %1221 = vmatprep.subr.bf16.mxu0 0
        %1222 = vmatpush1.bf16.msra.mxu0 %v1214
        %1223 = vmatprep.subr.bf16.mxu0 0
        %1224 = vmatpush1.bf16.msra.mxu0 %v1215
        %1225 = vmatprep.subr.bf16.mxu0 0
        %1226 = vmatpush1.bf16.msra.mxu0 0
        %1227 = vmatprep.subr.bf16.mxu0 0
        %1228 = vmatpush1.bf16.msra.mxu0 0
        %1229 = vmatprep.subr.bf16.mxu0 0
        %1230 = vmatpush1.bf16.msra.mxu0 0
        %1231 = vmatprep.subr.bf16.mxu0 0
        %1232 = vmatpush1.bf16.msra.mxu0 0
        %1233 = vmatprep.subr.bf16.mxu0 0
        %1234 = vmatpush1.bf16.msra.mxu0 0
        %1235 = vmatprep.subr.bf16.mxu0 0
        %1236 = vmatpush1.bf16.msra.mxu0 0
        %1237 = vmatprep.subr.bf16.mxu0 0
        %1238 = vmatpush1.bf16.msra.mxu0 0
        %1239 = vmatprep.subr.bf16.mxu0 0
        %1240 = vmatpush1.bf16.msra.mxu0 0
        %1241 = vmatprep.subr.bf16.mxu0 0
        %1242 = vmatpush1.bf16.msra.mxu0 0
        %1243 = vmatprep.subr.bf16.mxu0 0
        %1244 = vmatpush1.bf16.msra.mxu0 0
        %1245 = vmatprep.subr.bf16.mxu0 0
        %1246 = vmatpush1.bf16.msra.mxu0 0
        %1247 = vmatprep.subr.bf16.mxu0 0
        %1248 = vmatpush1.bf16.msra.mxu0 0
        %1249 = vmatprep.subr.bf16.mxu0 0
        %1250 = vmatpush1.bf16.msra.mxu0 0
        %1251 = vmatprep.subr.bf16.mxu0 0
        %1252 = vmatpush1.bf16.msra.mxu0 0
        %1253 = vmatprep.mubr.bf16.mxu0 0
        %1254 = vmatmul.mubr.bf16.gmra.mrb[0].mxu0 %v1219
        %v1255 = vpop.f32.mrb[0].mxu0
        %v1256 = vadd.f32 0.0, %v1255
        %v1257 = vpop.f32.mrb[0].mxu0
        %v1258 = vpop.f32.mrb[0].mxu0
        %v1259 = vpop.f32.mrb[0].mxu0
        %1260 = vdwg.mxu0
        %v1265 = vunpack.c.l.b16 %v1190
        %v1266 = vunpack.c.l.b16 %v1191
        %v1267 = vunpack.c.l.b16 %v1192
        %v1268 = vunpack.c.l.b16 %v1193
        %v1269 = vpack.c.b16 %v1266, %v1265
        %v1270 = vpack.c.b16 %v1268, %v1267
        %v1274 = vsel %vm1186, %v1197, 0
        %1276 = vmatprep.subr.bf16.mxu0 0
        %1277 = vmatpush1.bf16.msra.mxu0 %v1269
        %1278 = vmatprep.subr.bf16.mxu0 0
        %1279 = vmatpush1.bf16.msra.mxu0 %v1270
        %1280 = vmatprep.subr.bf16.mxu0 0
        %1281 = vmatpush1.bf16.msra.mxu0 0
        %1282 = vmatprep.subr.bf16.mxu0 0
        %1283 = vmatpush1.bf16.msra.mxu0 0
        %1284 = vmatprep.subr.bf16.mxu0 0
        %1285 = vmatpush1.bf16.msra.mxu0 0
        %1286 = vmatprep.subr.bf16.mxu0 0
        %1287 = vmatpush1.bf16.msra.mxu0 0
        %1288 = vmatprep.subr.bf16.mxu0 0
        %1289 = vmatpush1.bf16.msra.mxu0 0
        %1290 = vmatprep.subr.bf16.mxu0 0
        %1291 = vmatpush1.bf16.msra.mxu0 0
        %1292 = vmatprep.subr.bf16.mxu0 0
        %1293 = vmatpush1.bf16.msra.mxu0 0
        %1294 = vmatprep.subr.bf16.mxu0 0
        %1295 = vmatpush1.bf16.msra.mxu0 0
        %1296 = vmatprep.subr.bf16.mxu0 0
        %1297 = vmatpush1.bf16.msra.mxu0 0
        %1298 = vmatprep.subr.bf16.mxu0 0
        %1299 = vmatpush1.bf16.msra.mxu0 0
        %1300 = vmatprep.subr.bf16.mxu0 0
        %1301 = vmatpush1.bf16.msra.mxu0 0
        %1302 = vmatprep.subr.bf16.mxu0 0
        %1303 = vmatpush1.bf16.msra.mxu0 0
        %1304 = vmatprep.subr.bf16.mxu0 0
        %1305 = vmatpush1.bf16.msra.mxu0 0
        %1306 = vmatprep.subr.bf16.mxu0 0
        %1307 = vmatpush1.bf16.msra.mxu0 0
        %1308 = vmatprep.mubr.bf16.mxu0 0
        %1309 = vmatmul.mubr.bf16.gmra.mrb[0].mxu0 %v1274
        %v1310 = vpop.f32.mrb[0].mxu0
        %v1311 = vadd.f32 %v1256, %v1310
        %v1312 = vpop.f32.mrb[0].mxu0
        %v1313 = vpop.f32.mrb[0].mxu0
        %v1314 = vpop.f32.mrb[0].mxu0
        %1315 = vdwg.mxu0
        %v1316 = vpack.c.bf16 %v1205, %v1205
        %v1318 = vsel %vm1186, %v1316, 0
        %1320 = vmatprep.subr.bf16.mxu0 0
        %1321 = vmatpush1.bf16.msra.mxu0 %v1214
        %1322 = vmatprep.subr.bf16.mxu0 0
        %1323 = vmatpush1.bf16.msra.mxu0 %v1215
        %1324 = vmatprep.subr.bf16.mxu0 0
        %1325 = vmatpush1.bf16.msra.mxu0 0
        %1326 = vmatprep.subr.bf16.mxu0 0
        %1327 = vmatpush1.bf16.msra.mxu0 0
        %1328 = vmatprep.subr.bf16.mxu0 0
        %1329 = vmatpush1.bf16.msra.mxu0 0
        %1330 = vmatprep.subr.bf16.mxu0 0
        %1331 = vmatpush1.bf16.msra.mxu0 0
        %1332 = vmatprep.subr.bf16.mxu0 0
        %1333 = vmatpush1.bf16.msra.mxu0 0
        %1334 = vmatprep.subr.bf16.mxu0 0
        %1335 = vmatpush1.bf16.msra.mxu0 0
        %1336 = vmatprep.subr.bf16.mxu0 0
        %1337 = vmatpush1.bf16.msra.mxu0 0
        %1338 = vmatprep.subr.bf16.mxu0 0
        %1339 = vmatpush1.bf16.msra.mxu0 0
        %1340 = vmatprep.subr.bf16.mxu0 0
        %1341 = vmatpush1.bf16.msra.mxu0 0
        %1342 = vmatprep.subr.bf16.mxu0 0
        %1343 = vmatpush1.bf16.msra.mxu0 0
        %1344 = vmatprep.subr.bf16.mxu0 0
        %1345 = vmatpush1.bf16.msra.mxu0 0
        %1346 = vmatprep.subr.bf16.mxu0 0
        %1347 = vmatpush1.bf16.msra.mxu0 0
        %1348 = vmatprep.subr.bf16.mxu0 0
        %1349 = vmatpush1.bf16.msra.mxu0 0
        %1350 = vmatprep.subr.bf16.mxu0 0
        %1351 = vmatpush1.bf16.msra.mxu0 0
        %1352 = vmatprep.mubr.bf16.mxu0 0
        %1353 = vmatmul.mubr.bf16.gmra.mrb[0].mxu0 %v1318
        %v1354 = vpop.f32.mrb[0].mxu0
        %v1355 = vadd.f32 0.0, %v1354
        %v1356 = vpop.f32.mrb[0].mxu0
        %v1357 = vpop.f32.mrb[0].mxu0
        %v1358 = vpop.f32.mrb[0].mxu0
        %1359 = vdwg.mxu0
        %1360 = vmatprep.subr.bf16.mxu0 0
        %1361 = vmatpush1.bf16.msra.mxu0 %v1269
        %1362 = vmatprep.subr.bf16.mxu0 0
        %1363 = vmatpush1.bf16.msra.mxu0 %v1270
        %1364 = vmatprep.subr.bf16.mxu0 0
        %1365 = vmatpush1.bf16.msra.mxu0 0
        %1366 = vmatprep.subr.bf16.mxu0 0
        %1367 = vmatpush1.bf16.msra.mxu0 0
        %1368 = vmatprep.subr.bf16.mxu0 0
        %1369 = vmatpush1.bf16.msra.mxu0 0
        %1370 = vmatprep.subr.bf16.mxu0 0
        %1371 = vmatpush1.bf16.msra.mxu0 0
        %1372 = vmatprep.subr.bf16.mxu0 0
        %1373 = vmatpush1.bf16.msra.mxu0 0
        %1374 = vmatprep.subr.bf16.mxu0 0
        %1375 = vmatpush1.bf16.msra.mxu0 0
        %1376 = vmatprep.subr.bf16.mxu0 0
        %1377 = vmatpush1.bf16.msra.mxu0 0
        %1378 = vmatprep.subr.bf16.mxu0 0
        %1379 = vmatpush1.bf16.msra.mxu0 0
        %1380 = vmatprep.subr.bf16.mxu0 0
        %1381 = vmatpush1.bf16.msra.mxu0 0
        %1382 = vmatprep.subr.bf16.mxu0 0
        %1383 = vmatpush1.bf16.msra.mxu0 0
        %1384 = vmatprep.subr.bf16.mxu0 0
        %1385 = vmatpush1.bf16.msra.mxu0 0
        %1386 = vmatprep.subr.bf16.mxu0 0
        %1387 = vmatpush1.bf16.msra.mxu0 0
        %1388 = vmatprep.subr.bf16.mxu0 0
        %1389 = vmatpush1.bf16.msra.mxu0 0
        %1390 = vmatprep.subr.bf16.mxu0 0
        %1391 = vmatpush1.bf16.msra.mxu0 0
        %1392 = vmatprep.mubr.bf16.mxu0 0
        %1393 = vmatmul.mubr.bf16.gmra.mrb[0].mxu0 %v1219
        %v1394 = vpop.f32.mrb[0].mxu0
        %v1395 = vadd.f32 %v1355, %v1394
        %v1396 = vpop.f32.mrb[0].mxu0
        %v1397 = vpop.f32.mrb[0].mxu0
        %v1398 = vpop.f32.mrb[0].mxu0
        %1399 = vdwg.mxu0
        %s1400 = scalar_lea.vmem [#allocation5], 32
        %v1401 = vld [vmem:[%s1400] sm:$0xf]
        %v1402 = vld [vmem:[%s1400 + $0x4] sm:$0xf]
        %v1403 = vld [vmem:[%s1400 + $0x8] sm:$0xf]
        %v1404 = vld [vmem:[%s1400 + $0xc] sm:$0xf]
        %s1405 = scalar_lea.vmem [#allocation3], 3
        %v1406 = vld [vmem:[%s1405] ss:$2 sm:$0xff]
        %v1411 = vunpack.c.l.b16 %v1401
        %v1412 = vunpack.c.l.b16 %v1402
        %v1413 = vunpack.c.l.b16 %v1403
        %v1414 = vunpack.c.l.b16 %v1404
        %v1415 = vpack.c.b16 %v1412, %v1411
        %v1416 = vpack.c.b16 %v1414, %v1413
        %1419 = vmatprep.subr.bf16.mxu0 0
        %1420 = vmatpush1.bf16.msra.mxu0 %v1415
        %1421 = vmatprep.subr.bf16.mxu0 0
        %1422 = vmatpush1.bf16.msra.mxu0 %v1416
        %1423 = vmatprep.subr.bf16.mxu0 0
        %1424 = vmatpush1.bf16.msra.mxu0 0
        %1425 = vmatprep.subr.bf16.mxu0 0
        %1426 = vmatpush1.bf16.msra.mxu0 0
        %1427 = vmatprep.subr.bf16.mxu0 0
        %1428 = vmatpush1.bf16.msra.mxu0 0
        %1429 = vmatprep.subr.bf16.mxu0 0
        %1430 = vmatpush1.bf16.msra.mxu0 0
        %1431 = vmatprep.subr.bf16.mxu0 0
        %1432 = vmatpush1.bf16.msra.mxu0 0
        %1433 = vmatprep.subr.bf16.mxu0 0
        %1434 = vmatpush1.bf16.msra.mxu0 0
        %1435 = vmatprep.subr.bf16.mxu0 0
        %1436 = vmatpush1.bf16.msra.mxu0 0
        %1437 = vmatprep.subr.bf16.mxu0 0
        %1438 = vmatpush1.bf16.msra.mxu0 0
        %1439 = vmatprep.subr.bf16.mxu0 0
        %1440 = vmatpush1.bf16.msra.mxu0 0
        %1441 = vmatprep.subr.bf16.mxu0 0
        %1442 = vmatpush1.bf16.msra.mxu0 0
        %1443 = vmatprep.subr.bf16.mxu0 0
        %1444 = vmatpush1.bf16.msra.mxu0 0
        %1445 = vmatprep.subr.bf16.mxu0 0
        %1446 = vmatpush1.bf16.msra.mxu0 0
        %1447 = vmatprep.subr.bf16.mxu0 0
        %1448 = vmatpush1.bf16.msra.mxu0 0
        %1449 = vmatprep.subr.bf16.mxu0 0
        %1450 = vmatpush1.bf16.msra.mxu0 0
        %1451 = vmatprep.mubr.bf16.mxu0 0
        %1452 = vmatmul.mubr.bf16.gmra.mrb[0].mxu0 %v1318
        %v1453 = vpop.f32.mrb[0].mxu0
        %v1454 = vadd.f32 0.0, %v1453
        %v1455 = vpop.f32.mrb[0].mxu0
        %v1456 = vpop.f32.mrb[0].mxu0
        %v1457 = vpop.f32.mrb[0].mxu0
        %1458 = vdwg.mxu0
        %v1459 = vadd.f32 %v1311, %v1454
        %v1460 = vpack.c.bf16 %v1406, %v1406
        %v1462 = vsel %vm1186, %v1460, 0
        %1464 = vmatprep.subr.bf16.mxu0 0
        %1465 = vmatpush1.bf16.msra.mxu0 %v1415
        %1466 = vmatprep.subr.bf16.mxu0 0
        %1467 = vmatpush1.bf16.msra.mxu0 %v1416
        %1468 = vmatprep.subr.bf16.mxu0 0
        %1469 = vmatpush1.bf16.msra.mxu0 0
        %1470 = vmatprep.subr.bf16.mxu0 0
        %1471 = vmatpush1.bf16.msra.mxu0 0
        %1472 = vmatprep.subr.bf16.mxu0 0
        %1473 = vmatpush1.bf16.msra.mxu0 0
        %1474 = vmatprep.subr.bf16.mxu0 0
        %1475 = vmatpush1.bf16.msra.mxu0 0
        %1476 = vmatprep.subr.bf16.mxu0 0
        %1477 = vmatpush1.bf16.msra.mxu0 0
        %1478 = vmatprep.subr.bf16.mxu0 0
        %1479 = vmatpush1.bf16.msra.mxu0 0
        %1480 = vmatprep.subr.bf16.mxu0 0
        %1481 = vmatpush1.bf16.msra.mxu0 0
        %1482 = vmatprep.subr.bf16.mxu0 0
        %1483 = vmatpush1.bf16.msra.mxu0 0
        %1484 = vmatprep.subr.bf16.mxu0 0
        %1485 = vmatpush1.bf16.msra.mxu0 0
        %1486 = vmatprep.subr.bf16.mxu0 0
        %1487 = vmatpush1.bf16.msra.mxu0 0
        %1488 = vmatprep.subr.bf16.mxu0 0
        %1489 = vmatpush1.bf16.msra.mxu0 0
        %1490 = vmatprep.subr.bf16.mxu0 0
        %1491 = vmatpush1.bf16.msra.mxu0 0
        %1492 = vmatprep.subr.bf16.mxu0 0
        %1493 = vmatpush1.bf16.msra.mxu0 0
        %1494 = vmatprep.subr.bf16.mxu0 0
        %1495 = vmatpush1.bf16.msra.mxu0 0
        %1496 = vmatprep.mubr.bf16.mxu0 0
        %1497 = vmatmul.mubr.bf16.gmra.mrb[0].mxu0 %v1462
        %v1498 = vpop.f32.mrb[0].mxu0
        %v1499 = vadd.f32 0.0, %v1498
        %v1500 = vpop.f32.mrb[0].mxu0
        %v1501 = vpop.f32.mrb[0].mxu0
        %v1502 = vpop.f32.mrb[0].mxu0
        %1503 = vdwg.mxu0
        %v1504 = vadd.f32 %v1395, %v1499
        %s1505 = scalar_lea.vmem [#allocation5], 48
        %v1506 = vld [vmem:[%s1505] sm:$0xf]
        %v1507 = vld [vmem:[%s1505 + $0x4] sm:$0xf]
        %v1508 = vld [vmem:[%s1505 + $0x8] sm:$0xf]
        %v1509 = vld [vmem:[%s1505 + $0xc] sm:$0xf]
        %s1510 = scalar_lea.vmem [#allocation3], 4
        %v1511 = vld [vmem:[%s1510] ss:$2 sm:$0xff]
        %v1516 = vunpack.c.l.b16 %v1506
        %v1517 = vunpack.c.l.b16 %v1507
        %v1518 = vunpack.c.l.b16 %v1508
        %v1519 = vunpack.c.l.b16 %v1509
        %v1520 = vpack.c.b16 %v1517, %v1516
        %v1521 = vpack.c.b16 %v1519, %v1518
        %1524 = vmatprep.subr.bf16.mxu0 0
        %1525 = vmatpush1.bf16.msra.mxu0 %v1520
        %1526 = vmatprep.subr.bf16.mxu0 0
        %1527 = vmatpush1.bf16.msra.mxu0 %v1521
        %1528 = vmatprep.subr.bf16.mxu0 0
        %1529 = vmatpush1.bf16.msra.mxu0 0
        %1530 = vmatprep.subr.bf16.mxu0 0
        %1531 = vmatpush1.bf16.msra.mxu0 0
        %1532 = vmatprep.subr.bf16.mxu0 0
        %1533 = vmatpush1.bf16.msra.mxu0 0
        %1534 = vmatprep.subr.bf16.mxu0 0
        %1535 = vmatpush1.bf16.msra.mxu0 0
        %1536 = vmatprep.subr.bf16.mxu0 0
        %1537 = vmatpush1.bf16.msra.mxu0 0
        %1538 = vmatprep.subr.bf16.mxu0 0
        %1539 = vmatpush1.bf16.msra.mxu0 0
        %1540 = vmatprep.subr.bf16.mxu0 0
        %1541 = vmatpush1.bf16.msra.mxu0 0
        %1542 = vmatprep.subr.bf16.mxu0 0
        %1543 = vmatpush1.bf16.msra.mxu0 0
        %1544 = vmatprep.subr.bf16.mxu0 0
        %1545 = vmatpush1.bf16.msra.mxu0 0
        %1546 = vmatprep.subr.bf16.mxu0 0
        %1547 = vmatpush1.bf16.msra.mxu0 0
        %1548 = vmatprep.subr.bf16.mxu0 0
        %1549 = vmatpush1.bf16.msra.mxu0 0
        %1550 = vmatprep.subr.bf16.mxu0 0
        %1551 = vmatpush1.bf16.msra.mxu0 0
        %1552 = vmatprep.subr.bf16.mxu0 0
        %1553 = vmatpush1.bf16.msra.mxu0 0
        %1554 = vmatprep.subr.bf16.mxu0 0
        %1555 = vmatpush1.bf16.msra.mxu0 0
        %1556 = vmatprep.mubr.bf16.mxu0 0
        %1557 = vmatmul.mubr.bf16.gmra.mrb[0].mxu0 %v1462
        %v1558 = vpop.f32.mrb[0].mxu0
        %v1559 = vadd.f32 0.0, %v1558
        %v1560 = vpop.f32.mrb[0].mxu0
        %v1561 = vpop.f32.mrb[0].mxu0
        %v1562 = vpop.f32.mrb[0].mxu0
        %1563 = vdwg.mxu0
        %v1564 = vadd.f32 %v1459, %v1559
        %v1565 = vpack.c.bf16 %v1511, %v1511
        %v1567 = vsel %vm1186, %v1565, 0
        %1569 = vmatprep.subr.bf16.mxu0 0
        %1570 = vmatpush1.bf16.msra.mxu0 %v1520
        %1571 = vmatprep.subr.bf16.mxu0 0
        %1572 = vmatpush1.bf16.msra.mxu0 %v1521
        %1573 = vmatprep.subr.bf16.mxu0 0
        %1574 = vmatpush1.bf16.msra.mxu0 0
        %1575 = vmatprep.subr.bf16.mxu0 0
        %1576 = vmatpush1.bf16.msra.mxu0 0
        %1577 = vmatprep.subr.bf16.mxu0 0
        %1578 = vmatpush1.bf16.msra.mxu0 0
        %1579 = vmatprep.subr.bf16.mxu0 0
        %1580 = vmatpush1.bf16.msra.mxu0 0
        %1581 = vmatprep.subr.bf16.mxu0 0
        %1582 = vmatpush1.bf16.msra.mxu0 0
        %1583 = vmatprep.subr.bf16.mxu0 0
        %1584 = vmatpush1.bf16.msra.mxu0 0
        %1585 = vmatprep.subr.bf16.mxu0 0
        %1586 = vmatpush1.bf16.msra.mxu0 0
        %1587 = vmatprep.subr.bf16.mxu0 0
        %1588 = vmatpush1.bf16.msra.mxu0 0
        %1589 = vmatprep.subr.bf16.mxu0 0
        %1590 = vmatpush1.bf16.msra.mxu0 0
        %1591 = vmatprep.subr.bf16.mxu0 0
        %1592 = vmatpush1.bf16.msra.mxu0 0
        %1593 = vmatprep.subr.bf16.mxu0 0
        %1594 = vmatpush1.bf16.msra.mxu0 0
        %1595 = vmatprep.subr.bf16.mxu0 0
        %1596 = vmatpush1.bf16.msra.mxu0 0
        %1597 = vmatprep.subr.bf16.mxu0 0
        %1598 = vmatpush1.bf16.msra.mxu0 0
        %1599 = vmatprep.subr.bf16.mxu0 0
        %1600 = vmatpush1.bf16.msra.mxu0 0
        %1601 = vmatprep.mubr.bf16.mxu0 0
        %1602 = vmatmul.mubr.bf16.gmra.mrb[0].mxu0 %v1567
        %v1603 = vpop.f32.mrb[0].mxu0
        %v1604 = vadd.f32 0.0, %v1603
        %v1605 = vpop.f32.mrb[0].mxu0
        %v1606 = vpop.f32.mrb[0].mxu0
        %v1607 = vpop.f32.mrb[0].mxu0
        %1608 = vdwg.mxu0
        %v1609 = vadd.f32 %v1504, %v1604
        %s1610 = scalar_lea.vmem [#allocation5], 64
        %v1611 = vld [vmem:[%s1610] sm:$0xf]
        %v1612 = vld [vmem:[%s1610 + $0x4] sm:$0xf]
        %v1613 = vld [vmem:[%s1610 + $0x8] sm:$0xf]
        %v1614 = vld [vmem:[%s1610 + $0xc] sm:$0xf]
        %s1615 = scalar_lea.vmem [#allocation3], 5
        %v1616 = vld [vmem:[%s1615] ss:$2 sm:$0xff]
        %v1621 = vunpack.c.l.b16 %v1611
        %v1622 = vunpack.c.l.b16 %v1612
        %v1623 = vunpack.c.l.b16 %v1613
        %v1624 = vunpack.c.l.b16 %v1614
        %v1625 = vpack.c.b16 %v1622, %v1621
        %v1626 = vpack.c.b16 %v1624, %v1623
        %1629 = vmatprep.subr.bf16.mxu0 0
        %1630 = vmatpush1.bf16.msra.mxu0 %v1625
        %1631 = vmatprep.subr.bf16.mxu0 0
        %1632 = vmatpush1.bf16.msra.mxu0 %v1626
        %1633 = vmatprep.subr.bf16.mxu0 0
        %1634 = vmatpush1.bf16.msra.mxu0 0
        %1635 = vmatprep.subr.bf16.mxu0 0
        %1636 = vmatpush1.bf16.msra.mxu0 0
        %1637 = vmatprep.subr.bf16.mxu0 0
        %1638 = vmatpush1.bf16.msra.mxu0 0
        %1639 = vmatprep.subr.bf16.mxu0 0
        %1640 = vmatpush1.bf16.msra.mxu0 0
        %1641 = vmatprep.subr.bf16.mxu0 0
        %1642 = vmatpush1.bf16.msra.mxu0 0
        %1643 = vmatprep.subr.bf16.mxu0 0
        %1644 = vmatpush1.bf16.msra.mxu0 0
        %1645 = vmatprep.subr.bf16.mxu0 0
        %1646 = vmatpush1.bf16.msra.mxu0 0
        %1647 = vmatprep.subr.bf16.mxu0 0
        %1648 = vmatpush1.bf16.msra.mxu0 0
        %1649 = vmatprep.subr.bf16.mxu0 0
        %1650 = vmatpush1.bf16.msra.mxu0 0
        %1651 = vmatprep.subr.bf16.mxu0 0
        %1652 = vmatpush1.bf16.msra.mxu0 0
        %1653 = vmatprep.subr.bf16.mxu0 0
        %1654 = vmatpush1.bf16.msra.mxu0 0
        %1655 = vmatprep.subr.bf16.mxu0 0
        %1656 = vmatpush1.bf16.msra.mxu0 0
        %1657 = vmatprep.subr.bf16.mxu0 0
        %1658 = vmatpush1.bf16.msra.mxu0 0
        %1659 = vmatprep.subr.bf16.mxu0 0
        %1660 = vmatpush1.bf16.msra.mxu0 0
        %1661 = vmatprep.mubr.bf16.mxu0 0
        %1662 = vmatmul.mubr.bf16.gmra.mrb[0].mxu0 %v1567
        %v1663 = vpop.f32.mrb[0].mxu0
        %v1664 = vadd.f32 0.0, %v1663
        %v1665 = vpop.f32.mrb[0].mxu0
        %v1666 = vpop.f32.mrb[0].mxu0
        %v1667 = vpop.f32.mrb[0].mxu0
        %1668 = vdwg.mxu0
        %v1669 = vadd.f32 %v1564, %v1664
        %v1670 = vpack.c.bf16 %v1616, %v1616
        %v1672 = vsel %vm1186, %v1670, 0
        %1674 = vmatprep.subr.bf16.mxu0 0
        %1675 = vmatpush1.bf16.msra.mxu0 %v1625
        %1676 = vmatprep.subr.bf16.mxu0 0
        %1677 = vmatpush1.bf16.msra.mxu0 %v1626
        %1678 = vmatprep.subr.bf16.mxu0 0
        %1679 = vmatpush1.bf16.msra.mxu0 0
        %1680 = vmatprep.subr.bf16.mxu0 0
        %1681 = vmatpush1.bf16.msra.mxu0 0
        %1682 = vmatprep.subr.bf16.mxu0 0
        %1683 = vmatpush1.bf16.msra.mxu0 0
        %1684 = vmatprep.subr.bf16.mxu0 0
        %1685 = vmatpush1.bf16.msra.mxu0 0
        %1686 = vmatprep.subr.bf16.mxu0 0
        %1687 = vmatpush1.bf16.msra.mxu0 0
        %1688 = vmatprep.subr.bf16.mxu0 0
        %1689 = vmatpush1.bf16.msra.mxu0 0
        %1690 = vmatprep.subr.bf16.mxu0 0
        %1691 = vmatpush1.bf16.msra.mxu0 0
        %1692 = vmatprep.subr.bf16.mxu0 0
        %1693 = vmatpush1.bf16.msra.mxu0 0
        %1694 = vmatprep.subr.bf16.mxu0 0
        %1695 = vmatpush1.bf16.msra.mxu0 0
        %1696 = vmatprep.subr.bf16.mxu0 0
        %1697 = vmatpush1.bf16.msra.mxu0 0
        %1698 = vmatprep.subr.bf16.mxu0 0
        %1699 = vmatpush1.bf16.msra.mxu0 0
        %1700 = vmatprep.subr.bf16.mxu0 0
        %1701 = vmatpush1.bf16.msra.mxu0 0
        %1702 = vmatprep.subr.bf16.mxu0 0
        %1703 = vmatpush1.bf16.msra.mxu0 0
        %1704 = vmatprep.subr.bf16.mxu0 0
        %1705 = vmatpush1.bf16.msra.mxu0 0
        %1706 = vmatprep.mubr.bf16.mxu0 0
        %1707 = vmatmul.mubr.bf16.gmra.mrb[0].mxu0 %v1672
        %v1708 = vpop.f32.mrb[0].mxu0
        %v1709 = vadd.f32 0.0, %v1708
        %v1710 = vpop.f32.mrb[0].mxu0
        %v1711 = vpop.f32.mrb[0].mxu0
        %v1712 = vpop.f32.mrb[0].mxu0
        %1713 = vdwg.mxu0
        %v1714 = vadd.f32 %v1609, %v1709
        %v1715 = vld [vmem:[%s6] sm:$0x1]
        %v1717 = vlaneseq
        %v1718 = vshrl.u32 %v1717, 7
        %v1719 = vsub.s32 0, %v1718
        %v1720 = vrot.slane %v1715, %v1719
        %v1722 = vadd.f32 %v1669, %v1720
        %v1723 = vmax.f32 %v1722, 0.0
        %v1724 = vadd.f32 %v1714, %v1720
        %v1725 = vmax.f32 %v1724, 0.0
        %v1726 = vmax.f32 %v1723, %v1725
        %vm1727 = vcmask 517120
        %1728 = vst.msk [vmem:[#allocation4] sm:$0x3] %vm1727, 0.0
        %vm1729 = vcmask 523264
        %1730 = vst.msk [vmem:[#allocation4 + $0x2] sm:$0xff] %vm1729, %v1726
        %1731 = vst.msk [vmem:[#allocation4 + $0xa] sm:$0x3] %vm1727, 0.0
        %v1732 = vld [vmem:[%s7] sm:$0xf]
        %v1733 = vld [vmem:[%s7 + $0x4] sm:$0xf]
        %v1734 = vld [vmem:[%s7 + $0x8] sm:$0xf]
        %v1735 = vld [vmem:[%s7 + $0xc] sm:$0xf]
        %v1736 = vld [vmem:[%s7 + $0x10] sm:$0xf]
        %v1737 = vld [vmem:[%s7 + $0x14] sm:$0xf]
        %v1738 = vld [vmem:[%s7 + $0x18] sm:$0xf]
        %v1739 = vld [vmem:[%s7 + $0x1c] sm:$0xf]
        %v1740 = vld [vmem:[#allocation4] ss:$2 sm:$0xf]
        %s1741 = scalar_lea.vmem [#allocation4], 1
        %v1742 = vld [vmem:[%s1741] ss:$2 sm:$0xf]
        %v1743 = vpack.c.bf16 %v1740, %v1740
        %v1744 = vpack.c.bf16 %v1742, %v1742
        %s1745 = scalar_lea.vmem %s7, 32
        %v1746 = vld [vmem:[%s1745] sm:$0xf]
        %v1747 = vld [vmem:[%s1745 + $0x4] sm:$0xf]
        %v1748 = vld [vmem:[%s1745 + $0x8] sm:$0xf]
        %v1749 = vld [vmem:[%s1745 + $0xc] sm:$0xf]
        %v1750 = vld [vmem:[%s1745 + $0x10] sm:$0xf]
        %v1751 = vld [vmem:[%s1745 + $0x14] sm:$0xf]
        %v1752 = vld [vmem:[%s1745 + $0x18] sm:$0xf]
        %v1753 = vld [vmem:[%s1745 + $0x1c] sm:$0xf]
        %s1754 = scalar_lea.vmem [#allocation4], 2
        %v1755 = vld [vmem:[%s1754] ss:$2 sm:$0xf]
        %v1764 = vunpack.c.l.b16 %v1746
        %v1765 = vunpack.c.l.b16 %v1747
        %v1766 = vunpack.c.l.b16 %v1748
        %v1767 = vunpack.c.l.b16 %v1749
        %v1768 = vunpack.c.l.b16 %v1750
        %v1769 = vunpack.c.l.b16 %v1751
        %v1770 = vunpack.c.l.b16 %v1752
        %v1771 = vunpack.c.l.b16 %v1753
        %v1772 = vpack.c.b16 %v1765, %v1764
        %v1773 = vpack.c.b16 %v1767, %v1766
        %v1774 = vpack.c.b16 %v1769, %v1768
        %v1775 = vpack.c.b16 %v1771, %v1770
        %v1781 = vsel %vm1729, %v1744, 0
        %1783 = vmatprep.subr.bf16.mxu0 0
        %1784 = vmatpush1.bf16.msra.mxu0 %v1772
        %1785 = vmatprep.subr.bf16.mxu0 0
        %1786 = vmatpush1.bf16.msra.mxu0 %v1773
        %1787 = vmatprep.subr.bf16.mxu0 0
        %1788 = vmatpush1.bf16.msra.mxu0 %v1774
        %1789 = vmatprep.subr.bf16.mxu0 0
        %1790 = vmatpush1.bf16.msra.mxu0 %v1775
        %1791 = vmatprep.subr.bf16.mxu0 0
        %1792 = vmatpush1.bf16.msra.mxu0 0
        %1793 = vmatprep.subr.bf16.mxu0 0
        %1794 = vmatpush1.bf16.msra.mxu0 0
        %1795 = vmatprep.subr.bf16.mxu0 0
        %1796 = vmatpush1.bf16.msra.mxu0 0
        %1797 = vmatprep.subr.bf16.mxu0 0
        %1798 = vmatpush1.bf16.msra.mxu0 0
        %1799 = vmatprep.subr.bf16.mxu0 0
        %1800 = vmatpush1.bf16.msra.mxu0 0
        %1801 = vmatprep.subr.bf16.mxu0 0
        %1802 = vmatpush1.bf16.msra.mxu0 0
        %1803 = vmatprep.subr.bf16.mxu0 0
        %1804 = vmatpush1.bf16.msra.mxu0 0
        %1805 = vmatprep.subr.bf16.mxu0 0
        %1806 = vmatpush1.bf16.msra.mxu0 0
        %1807 = vmatprep.subr.bf16.mxu0 0
        %1808 = vmatpush1.bf16.msra.mxu0 0
        %1809 = vmatprep.subr.bf16.mxu0 0
        %1810 = vmatpush1.bf16.msra.mxu0 0
        %1811 = vmatprep.subr.bf16.mxu0 0
        %1812 = vmatpush1.bf16.msra.mxu0 0
        %1813 = vmatprep.subr.bf16.mxu0 0
        %1814 = vmatpush1.bf16.msra.mxu0 0
        %1815 = vmatprep.mubr.bf16.mxu0 0
        %1816 = vmatmul.mubr.bf16.gmra.mrb[0].mxu0 %v1781
        %v1817 = vpop.f32.mrb[0].mxu0
        %v1818 = vadd.f32 0.0, %v1817
        %v1819 = vpop.f32.mrb[0].mxu0
        %v1820 = vpop.f32.mrb[0].mxu0
        %v1821 = vpop.f32.mrb[0].mxu0
        %1822 = vdwg.mxu0
        %v1831 = vunpack.c.l.b16 %v1732
        %v1832 = vunpack.c.l.b16 %v1733
        %v1833 = vunpack.c.l.b16 %v1734
        %v1834 = vunpack.c.l.b16 %v1735
        %v1835 = vunpack.c.l.b16 %v1736
        %v1836 = vunpack.c.l.b16 %v1737
        %v1837 = vunpack.c.l.b16 %v1738
        %v1838 = vunpack.c.l.b16 %v1739
        %v1839 = vpack.c.b16 %v1832, %v1831
        %v1840 = vpack.c.b16 %v1834, %v1833
        %v1841 = vpack.c.b16 %v1836, %v1835
        %v1842 = vpack.c.b16 %v1838, %v1837
        %v1848 = vsel %vm1729, %v1743, 0
        %1850 = vmatprep.subr.bf16.mxu0 0
        %1851 = vmatpush1.bf16.msra.mxu0 %v1839
        %1852 = vmatprep.subr.bf16.mxu0 0
        %1853 = vmatpush1.bf16.msra.mxu0 %v1840
        %1854 = vmatprep.subr.bf16.mxu0 0
        %1855 = vmatpush1.bf16.msra.mxu0 %v1841
        %1856 = vmatprep.subr.bf16.mxu0 0
        %1857 = vmatpush1.bf16.msra.mxu0 %v1842
        %1858 = vmatprep.subr.bf16.mxu0 0
        %1859 = vmatpush1.bf16.msra.mxu0 0
        %1860 = vmatprep.subr.bf16.mxu0 0
        %1861 = vmatpush1.bf16.msra.mxu0 0
        %1862 = vmatprep.subr.bf16.mxu0 0
        %1863 = vmatpush1.bf16.msra.mxu0 0
        %1864 = vmatprep.subr.bf16.mxu0 0
        %1865 = vmatpush1.bf16.msra.mxu0 0
        %1866 = vmatprep.subr.bf16.mxu0 0
        %1867 = vmatpush1.bf16.msra.mxu0 0
        %1868 = vmatprep.subr.bf16.mxu0 0
        %1869 = vmatpush1.bf16.msra.mxu0 0
        %1870 = vmatprep.subr.bf16.mxu0 0
        %1871 = vmatpush1.bf16.msra.mxu0 0
        %1872 = vmatprep.subr.bf16.mxu0 0
        %1873 = vmatpush1.bf16.msra.mxu0 0
        %1874 = vmatprep.subr.bf16.mxu0 0
        %1875 = vmatpush1.bf16.msra.mxu0 0
        %1876 = vmatprep.subr.bf16.mxu0 0
        %1877 = vmatpush1.bf16.msra.mxu0 0
        %1878 = vmatprep.subr.bf16.mxu0 0
        %1879 = vmatpush1.bf16.msra.mxu0 0
        %1880 = vmatprep.subr.bf16.mxu0 0
        %1881 = vmatpush1.bf16.msra.mxu0 0
        %1882 = vmatprep.mubr.bf16.mxu0 0
        %1883 = vmatmul.mubr.bf16.gmra.mrb[0].mxu0 %v1848
        %v1884 = vpop.f32.mrb[0].mxu0
        %v1885 = vadd.f32 %v1818, %v1884
        %v1886 = vpop.f32.mrb[0].mxu0
        %v1887 = vpop.f32.mrb[0].mxu0
        %v1888 = vpop.f32.mrb[0].mxu0
        %1889 = vdwg.mxu0
        %v1890 = vpack.c.bf16 %v1755, %v1755
        %v1892 = vsel %vm1729, %v1890, 0
        %1894 = vmatprep.subr.bf16.mxu0 0
        %1895 = vmatpush1.bf16.msra.mxu0 %v1772
        %1896 = vmatprep.subr.bf16.mxu0 0
        %1897 = vmatpush1.bf16.msra.mxu0 %v1773
        %1898 = vmatprep.subr.bf16.mxu0 0
        %1899 = vmatpush1.bf16.msra.mxu0 %v1774
        %1900 = vmatprep.subr.bf16.mxu0 0
        %1901 = vmatpush1.bf16.msra.mxu0 %v1775
        %1902 = vmatprep.subr.bf16.mxu0 0
        %1903 = vmatpush1.bf16.msra.mxu0 0
        %1904 = vmatprep.subr.bf16.mxu0 0
        %1905 = vmatpush1.bf16.msra.mxu0 0
        %1906 = vmatprep.subr.bf16.mxu0 0
        %1907 = vmatpush1.bf16.msra.mxu0 0
        %1908 = vmatprep.subr.bf16.mxu0 0
        %1909 = vmatpush1.bf16.msra.mxu0 0
        %1910 = vmatprep.subr.bf16.mxu0 0
        %1911 = vmatpush1.bf16.msra.mxu0 0
        %1912 = vmatprep.subr.bf16.mxu0 0
        %1913 = vmatpush1.bf16.msra.mxu0 0
        %1914 = vmatprep.subr.bf16.mxu0 0
        %1915 = vmatpush1.bf16.msra.mxu0 0
        %1916 = vmatprep.subr.bf16.mxu0 0
        %1917 = vmatpush1.bf16.msra.mxu0 0
        %1918 = vmatprep.subr.bf16.mxu0 0
        %1919 = vmatpush1.bf16.msra.mxu0 0
        %1920 = vmatprep.subr.bf16.mxu0 0
        %1921 = vmatpush1.bf16.msra.mxu0 0
        %1922 = vmatprep.subr.bf16.mxu0 0
        %1923 = vmatpush1.bf16.msra.mxu0 0
        %1924 = vmatprep.subr.bf16.mxu0 0
        %1925 = vmatpush1.bf16.msra.mxu0 0
        %1926 = vmatprep.mubr.bf16.mxu0 0
        %1927 = vmatmul.mubr.bf16.gmra.mrb[0].mxu0 %v1892
        %v1928 = vpop.f32.mrb[0].mxu0
        %v1929 = vadd.f32 0.0, %v1928
        %v1930 = vpop.f32.mrb[0].mxu0
        %v1931 = vpop.f32.mrb[0].mxu0
        %v1932 = vpop.f32.mrb[0].mxu0
        %1933 = vdwg.mxu0
        %1934 = vmatprep.subr.bf16.mxu0 0
        %1935 = vmatpush1.bf16.msra.mxu0 %v1839
        %1936 = vmatprep.subr.bf16.mxu0 0
        %1937 = vmatpush1.bf16.msra.mxu0 %v1840
        %1938 = vmatprep.subr.bf16.mxu0 0
        %1939 = vmatpush1.bf16.msra.mxu0 %v1841
        %1940 = vmatprep.subr.bf16.mxu0 0
        %1941 = vmatpush1.bf16.msra.mxu0 %v1842
        %1942 = vmatprep.subr.bf16.mxu0 0
        %1943 = vmatpush1.bf16.msra.mxu0 0
        %1944 = vmatprep.subr.bf16.mxu0 0
        %1945 = vmatpush1.bf16.msra.mxu0 0
        %1946 = vmatprep.subr.bf16.mxu0 0
        %1947 = vmatpush1.bf16.msra.mxu0 0
        %1948 = vmatprep.subr.bf16.mxu0 0
        %1949 = vmatpush1.bf16.msra.mxu0 0
        %1950 = vmatprep.subr.bf16.mxu0 0
        %1951 = vmatpush1.bf16.msra.mxu0 0
        %1952 = vmatprep.subr.bf16.mxu0 0
        %1953 = vmatpush1.bf16.msra.mxu0 0
        %1954 = vmatprep.subr.bf16.mxu0 0
        %1955 = vmatpush1.bf16.msra.mxu0 0
        %1956 = vmatprep.subr.bf16.mxu0 0
        %1957 = vmatpush1.bf16.msra.mxu0 0
        %1958 = vmatprep.subr.bf16.mxu0 0
        %1959 = vmatpush1.bf16.msra.mxu0 0
        %1960 = vmatprep.subr.bf16.mxu0 0
        %1961 = vmatpush1.bf16.msra.mxu0 0
        %1962 = vmatprep.subr.bf16.mxu0 0
        %1963 = vmatpush1.bf16.msra.mxu0 0
        %1964 = vmatprep.subr.bf16.mxu0 0
        %1965 = vmatpush1.bf16.msra.mxu0 0
        %1966 = vmatprep.mubr.bf16.mxu0 0
        %1967 = vmatmul.mubr.bf16.gmra.mrb[0].mxu0 %v1781
        %v1968 = vpop.f32.mrb[0].mxu0
        %v1969 = vadd.f32 %v1929, %v1968
        %v1970 = vpop.f32.mrb[0].mxu0
        %v1971 = vpop.f32.mrb[0].mxu0
        %v1972 = vpop.f32.mrb[0].mxu0
        %1973 = vdwg.mxu0
        %s1974 = scalar_lea.vmem %s7, 64
        %v1975 = vld [vmem:[%s1974] sm:$0xf]
        %v1976 = vld [vmem:[%s1974 + $0x4] sm:$0xf]
        %v1977 = vld [vmem:[%s1974 + $0x8] sm:$0xf]
        %v1978 = vld [vmem:[%s1974 + $0xc] sm:$0xf]
        %v1979 = vld [vmem:[%s1974 + $0x10] sm:$0xf]
        %v1980 = vld [vmem:[%s1974 + $0x14] sm:$0xf]
        %v1981 = vld [vmem:[%s1974 + $0x18] sm:$0xf]
        %v1982 = vld [vmem:[%s1974 + $0x1c] sm:$0xf]
        %s1983 = scalar_lea.vmem [#allocation4], 3
        %v1984 = vld [vmem:[%s1983] ss:$2 sm:$0xf]
        %v1993 = vunpack.c.l.b16 %v1975
        %v1994 = vunpack.c.l.b16 %v1976
        %v1995 = vunpack.c.l.b16 %v1977
        %v1996 = vunpack.c.l.b16 %v1978
        %v1997 = vunpack.c.l.b16 %v1979
        %v1998 = vunpack.c.l.b16 %v1980
        %v1999 = vunpack.c.l.b16 %v1981
        %v2000 = vunpack.c.l.b16 %v1982
        %v2001 = vpack.c.b16 %v1994, %v1993
        %v2002 = vpack.c.b16 %v1996, %v1995
        %v2003 = vpack.c.b16 %v1998, %v1997
        %v2004 = vpack.c.b16 %v2000, %v1999
        %2009 = vmatprep.subr.bf16.mxu0 0
        %2010 = vmatpush1.bf16.msra.mxu0 %v2001
        %2011 = vmatprep.subr.bf16.mxu0 0
        %2012 = vmatpush1.bf16.msra.mxu0 %v2002
        %2013 = vmatprep.subr.bf16.mxu0 0
        %2014 = vmatpush1.bf16.msra.mxu0 %v2003
        %2015 = vmatprep.subr.bf16.mxu0 0
        %2016 = vmatpush1.bf16.msra.mxu0 %v2004
        %2017 = vmatprep.subr.bf16.mxu0 0
        %2018 = vmatpush1.bf16.msra.mxu0 0
        %2019 = vmatprep.subr.bf16.mxu0 0
        %2020 = vmatpush1.bf16.msra.mxu0 0
        %2021 = vmatprep.subr.bf16.mxu0 0
        %2022 = vmatpush1.bf16.msra.mxu0 0
        %2023 = vmatprep.subr.bf16.mxu0 0
        %2024 = vmatpush1.bf16.msra.mxu0 0
        %2025 = vmatprep.subr.bf16.mxu0 0
        %2026 = vmatpush1.bf16.msra.mxu0 0
        %2027 = vmatprep.subr.bf16.mxu0 0
        %2028 = vmatpush1.bf16.msra.mxu0 0
        %2029 = vmatprep.subr.bf16.mxu0 0
        %2030 = vmatpush1.bf16.msra.mxu0 0
        %2031 = vmatprep.subr.bf16.mxu0 0
        %2032 = vmatpush1.bf16.msra.mxu0 0
        %2033 = vmatprep.subr.bf16.mxu0 0
        %2034 = vmatpush1.bf16.msra.mxu0 0
        %2035 = vmatprep.subr.bf16.mxu0 0
        %2036 = vmatpush1.bf16.msra.mxu0 0
        %2037 = vmatprep.subr.bf16.mxu0 0
        %2038 = vmatpush1.bf16.msra.mxu0 0
        %2039 = vmatprep.subr.bf16.mxu0 0
        %2040 = vmatpush1.bf16.msra.mxu0 0
        %2041 = vmatprep.mubr.bf16.mxu0 0
        %2042 = vmatmul.mubr.bf16.gmra.mrb[0].mxu0 %v1892
        %v2043 = vpop.f32.mrb[0].mxu0
        %v2044 = vadd.f32 0.0, %v2043
        %v2045 = vpop.f32.mrb[0].mxu0
        %v2046 = vpop.f32.mrb[0].mxu0
        %v2047 = vpop.f32.mrb[0].mxu0
        %2048 = vdwg.mxu0
        %v2049 = vadd.f32 %v1885, %v2044
        %v2050 = vpack.c.bf16 %v1984, %v1984
        %v2052 = vsel %vm1729, %v2050, 0
        %2054 = vmatprep.subr.bf16.mxu0 0
        %2055 = vmatpush1.bf16.msra.mxu0 %v2001
        %2056 = vmatprep.subr.bf16.mxu0 0
        %2057 = vmatpush1.bf16.msra.mxu0 %v2002
        %2058 = vmatprep.subr.bf16.mxu0 0
        %2059 = vmatpush1.bf16.msra.mxu0 %v2003
        %2060 = vmatprep.subr.bf16.mxu0 0
        %2061 = vmatpush1.bf16.msra.mxu0 %v2004
        %2062 = vmatprep.subr.bf16.mxu0 0
        %2063 = vmatpush1.bf16.msra.mxu0 0
        %2064 = vmatprep.subr.bf16.mxu0 0
        %2065 = vmatpush1.bf16.msra.mxu0 0
        %2066 = vmatprep.subr.bf16.mxu0 0
        %2067 = vmatpush1.bf16.msra.mxu0 0
        %2068 = vmatprep.subr.bf16.mxu0 0
        %2069 = vmatpush1.bf16.msra.mxu0 0
        %2070 = vmatprep.subr.bf16.mxu0 0
        %2071 = vmatpush1.bf16.msra.mxu0 0
        %2072 = vmatprep.subr.bf16.mxu0 0
        %2073 = vmatpush1.bf16.msra.mxu0 0
        %2074 = vmatprep.subr.bf16.mxu0 0
        %2075 = vmatpush1.bf16.msra.mxu0 0
        %2076 = vmatprep.subr.bf16.mxu0 0
        %2077 = vmatpush1.bf16.msra.mxu0 0
        %2078 = vmatprep.subr.bf16.mxu0 0
        %2079 = vmatpush1.bf16.msra.mxu0 0
        %2080 = vmatprep.subr.bf16.mxu0 0
        %2081 = vmatpush1.bf16.msra.mxu0 0
        %2082 = vmatprep.subr.bf16.mxu0 0
        %2083 = vmatpush1.bf16.msra.mxu0 0
        %2084 = vmatprep.subr.bf16.mxu0 0
        %2085 = vmatpush1.bf16.msra.mxu0 0
        %2086 = vmatprep.mubr.bf16.mxu0 0
        %2087 = vmatmul.mubr.bf16.gmra.mrb[0].mxu0 %v2052
        %v2088 = vpop.f32.mrb[0].mxu0
        %v2089 = vadd.f32 0.0, %v2088
        %v2090 = vpop.f32.mrb[0].mxu0
        %v2091 = vpop.f32.mrb[0].mxu0
        %v2092 = vpop.f32.mrb[0].mxu0
        %2093 = vdwg.mxu0
        %v2094 = vadd.f32 %v1969, %v2089
        %s2095 = scalar_lea.vmem %s7, 96
        %v2096 = vld [vmem:[%s2095] sm:$0xf]
        %v2097 = vld [vmem:[%s2095 + $0x4] sm:$0xf]
        %v2098 = vld [vmem:[%s2095 + $0x8] sm:$0xf]
        %v2099 = vld [vmem:[%s2095 + $0xc] sm:$0xf]
        %v2100 = vld [vmem:[%s2095 + $0x10] sm:$0xf]
        %v2101 = vld [vmem:[%s2095 + $0x14] sm:$0xf]
        %v2102 = vld [vmem:[%s2095 + $0x18] sm:$0xf]
        %v2103 = vld [vmem:[%s2095 + $0x1c] sm:$0xf]
        %s2104 = scalar_lea.vmem [#allocation4], 4
        %v2105 = vld [vmem:[%s2104] ss:$2 sm:$0xf]
        %v2114 = vunpack.c.l.b16 %v2096
        %v2115 = vunpack.c.l.b16 %v2097
        %v2116 = vunpack.c.l.b16 %v2098
        %v2117 = vunpack.c.l.b16 %v2099
        %v2118 = vunpack.c.l.b16 %v2100
        %v2119 = vunpack.c.l.b16 %v2101
        %v2120 = vunpack.c.l.b16 %v2102
        %v2121 = vunpack.c.l.b16 %v2103
        %v2122 = vpack.c.b16 %v2115, %v2114
        %v2123 = vpack.c.b16 %v2117, %v2116
        %v2124 = vpack.c.b16 %v2119, %v2118
        %v2125 = vpack.c.b16 %v2121, %v2120
        %2130 = vmatprep.subr.bf16.mxu0 0
        %2131 = vmatpush1.bf16.msra.mxu0 %v2122
        %2132 = vmatprep.subr.bf16.mxu0 0
        %2133 = vmatpush1.bf16.msra.mxu0 %v2123
        %2134 = vmatprep.subr.bf16.mxu0 0
        %2135 = vmatpush1.bf16.msra.mxu0 %v2124
        %2136 = vmatprep.subr.bf16.mxu0 0
        %2137 = vmatpush1.bf16.msra.mxu0 %v2125
        %2138 = vmatprep.subr.bf16.mxu0 0
        %2139 = vmatpush1.bf16.msra.mxu0 0
        %2140 = vmatprep.subr.bf16.mxu0 0
        %2141 = vmatpush1.bf16.msra.mxu0 0
        %2142 = vmatprep.subr.bf16.mxu0 0
        %2143 = vmatpush1.bf16.msra.mxu0 0
        %2144 = vmatprep.subr.bf16.mxu0 0
        %2145 = vmatpush1.bf16.msra.mxu0 0
        %2146 = vmatprep.subr.bf16.mxu0 0
        %2147 = vmatpush1.bf16.msra.mxu0 0
        %2148 = vmatprep.subr.bf16.mxu0 0
        %2149 = vmatpush1.bf16.msra.mxu0 0
        %2150 = vmatprep.subr.bf16.mxu0 0
        %2151 = vmatpush1.bf16.msra.mxu0 0
        %2152 = vmatprep.subr.bf16.mxu0 0
        %2153 = vmatpush1.bf16.msra.mxu0 0
        %2154 = vmatprep.subr.bf16.mxu0 0
        %2155 = vmatpush1.bf16.msra.mxu0 0
        %2156 = vmatprep.subr.bf16.mxu0 0
        %2157 = vmatpush1.bf16.msra.mxu0 0
        %2158 = vmatprep.subr.bf16.mxu0 0
        %2159 = vmatpush1.bf16.msra.mxu0 0
        %2160 = vmatprep.subr.bf16.mxu0 0
        %2161 = vmatpush1.bf16.msra.mxu0 0
        %2162 = vmatprep.mubr.bf16.mxu0 0
        %2163 = vmatmul.mubr.bf16.gmra.mrb[0].mxu0 %v2052
        %v2164 = vpop.f32.mrb[0].mxu0
        %v2165 = vadd.f32 0.0, %v2164
        %v2166 = vpop.f32.mrb[0].mxu0
        %v2167 = vpop.f32.mrb[0].mxu0
        %v2168 = vpop.f32.mrb[0].mxu0
        %2169 = vdwg.mxu0
        %v2170 = vadd.f32 %v2049, %v2165
        %v2171 = vpack.c.bf16 %v2105, %v2105
        %v2173 = vsel %vm1729, %v2171, 0
        %2175 = vmatprep.subr.bf16.mxu0 0
        %2176 = vmatpush1.bf16.msra.mxu0 %v2122
        %2177 = vmatprep.subr.bf16.mxu0 0
        %2178 = vmatpush1.bf16.msra.mxu0 %v2123
        %2179 = vmatprep.subr.bf16.mxu0 0
        %2180 = vmatpush1.bf16.msra.mxu0 %v2124
        %2181 = vmatprep.subr.bf16.mxu0 0
        %2182 = vmatpush1.bf16.msra.mxu0 %v2125
        %2183 = vmatprep.subr.bf16.mxu0 0
        %2184 = vmatpush1.bf16.msra.mxu0 0
        %2185 = vmatprep.subr.bf16.mxu0 0
        %2186 = vmatpush1.bf16.msra.mxu0 0
        %2187 = vmatprep.subr.bf16.mxu0 0
        %2188 = vmatpush1.bf16.msra.mxu0 0
        %2189 = vmatprep.subr.bf16.mxu0 0
        %2190 = vmatpush1.bf16.msra.mxu0 0
        %2191 = vmatprep.subr.bf16.mxu0 0
        %2192 = vmatpush1.bf16.msra.mxu0 0
        %2193 = vmatprep.subr.bf16.mxu0 0
        %2194 = vmatpush1.bf16.msra.mxu0 0
        %2195 = vmatprep.subr.bf16.mxu0 0
        %2196 = vmatpush1.bf16.msra.mxu0 0
        %2197 = vmatprep.subr.bf16.mxu0 0
        %2198 = vmatpush1.bf16.msra.mxu0 0
        %2199 = vmatprep.subr.bf16.mxu0 0
        %2200 = vmatpush1.bf16.msra.mxu0 0
        %2201 = vmatprep.subr.bf16.mxu0 0
        %2202 = vmatpush1.bf16.msra.mxu0 0
        %2203 = vmatprep.subr.bf16.mxu0 0
        %2204 = vmatpush1.bf16.msra.mxu0 0
        %2205 = vmatprep.subr.bf16.mxu0 0
        %2206 = vmatpush1.bf16.msra.mxu0 0
        %2207 = vmatprep.mubr.bf16.mxu0 0
        %2208 = vmatmul.mubr.bf16.gmra.mrb[0].mxu0 %v2173
        %v2209 = vpop.f32.mrb[0].mxu0
        %v2210 = vadd.f32 0.0, %v2209
        %v2211 = vpop.f32.mrb[0].mxu0
        %v2212 = vpop.f32.mrb[0].mxu0
        %v2213 = vpop.f32.mrb[0].mxu0
        %2214 = vdwg.mxu0
        %v2215 = vadd.f32 %v2094, %v2210
        %s2216 = scalar_lea.vmem %s7, 128
        %v2217 = vld [vmem:[%s2216] sm:$0xf]
        %v2218 = vld [vmem:[%s2216 + $0x4] sm:$0xf]
        %v2219 = vld [vmem:[%s2216 + $0x8] sm:$0xf]
        %v2220 = vld [vmem:[%s2216 + $0xc] sm:$0xf]
        %v2221 = vld [vmem:[%s2216 + $0x10] sm:$0xf]
        %v2222 = vld [vmem:[%s2216 + $0x14] sm:$0xf]
        %v2223 = vld [vmem:[%s2216 + $0x18] sm:$0xf]
        %v2224 = vld [vmem:[%s2216 + $0x1c] sm:$0xf]
        %s2225 = scalar_lea.vmem [#allocation4], 5
        %v2226 = vld [vmem:[%s2225] ss:$2 sm:$0xf]
        %v2235 = vunpack.c.l.b16 %v2217
        %v2236 = vunpack.c.l.b16 %v2218
        %v2237 = vunpack.c.l.b16 %v2219
        %v2238 = vunpack.c.l.b16 %v2220
        %v2239 = vunpack.c.l.b16 %v2221
        %v2240 = vunpack.c.l.b16 %v2222
        %v2241 = vunpack.c.l.b16 %v2223
        %v2242 = vunpack.c.l.b16 %v2224
        %v2243 = vpack.c.b16 %v2236, %v2235
        %v2244 = vpack.c.b16 %v2238, %v2237
        %v2245 = vpack.c.b16 %v2240, %v2239
        %v2246 = vpack.c.b16 %v2242, %v2241
        %2251 = vmatprep.subr.bf16.mxu0 0
        %2252 = vmatpush1.bf16.msra.mxu0 %v2243
        %2253 = vmatprep.subr.bf16.mxu0 0
        %2254 = vmatpush1.bf16.msra.mxu0 %v2244
        %2255 = vmatprep.subr.bf16.mxu0 0
        %2256 = vmatpush1.bf16.msra.mxu0 %v2245
        %2257 = vmatprep.subr.bf16.mxu0 0
        %2258 = vmatpush1.bf16.msra.mxu0 %v2246
        %2259 = vmatprep.subr.bf16.mxu0 0
        %2260 = vmatpush1.bf16.msra.mxu0 0
        %2261 = vmatprep.subr.bf16.mxu0 0
        %2262 = vmatpush1.bf16.msra.mxu0 0
        %2263 = vmatprep.subr.bf16.mxu0 0
        %2264 = vmatpush1.bf16.msra.mxu0 0
        %2265 = vmatprep.subr.bf16.mxu0 0
        %2266 = vmatpush1.bf16.msra.mxu0 0
        %2267 = vmatprep.subr.bf16.mxu0 0
        %2268 = vmatpush1.bf16.msra.mxu0 0
        %2269 = vmatprep.subr.bf16.mxu0 0
        %2270 = vmatpush1.bf16.msra.mxu0 0
        %2271 = vmatprep.subr.bf16.mxu0 0
        %2272 = vmatpush1.bf16.msra.mxu0 0
        %2273 = vmatprep.subr.bf16.mxu0 0
        %2274 = vmatpush1.bf16.msra.mxu0 0
        %2275 = vmatprep.subr.bf16.mxu0 0
        %2276 = vmatpush1.bf16.msra.mxu0 0
        %2277 = vmatprep.subr.bf16.mxu0 0
        %2278 = vmatpush1.bf16.msra.mxu0 0
        %2279 = vmatprep.subr.bf16.mxu0 0
        %2280 = vmatpush1.bf16.msra.mxu0 0
        %2281 = vmatprep.subr.bf16.mxu0 0
        %2282 = vmatpush1.bf16.msra.mxu0 0
        %2283 = vmatprep.mubr.bf16.mxu0 0
        %2284 = vmatmul.mubr.bf16.gmra.mrb[0].mxu0 %v2173
        %v2285 = vpop.f32.mrb[0].mxu0
        %v2286 = vadd.f32 0.0, %v2285
        %v2287 = vpop.f32.mrb[0].mxu0
        %v2288 = vpop.f32.mrb[0].mxu0
        %v2289 = vpop.f32.mrb[0].mxu0
        %2290 = vdwg.mxu0
        %v2291 = vadd.f32 %v2170, %v2286
        %v2292 = vpack.c.bf16 %v2226, %v2226
        %v2294 = vsel %vm1729, %v2292, 0
        %2296 = vmatprep.subr.bf16.mxu0 0
        %2297 = vmatpush1.bf16.msra.mxu0 %v2243
        %2298 = vmatprep.subr.bf16.mxu0 0
        %2299 = vmatpush1.bf16.msra.mxu0 %v2244
        %2300 = vmatprep.subr.bf16.mxu0 0
        %2301 = vmatpush1.bf16.msra.mxu0 %v2245
        %2302 = vmatprep.subr.bf16.mxu0 0
        %2303 = vmatpush1.bf16.msra.mxu0 %v2246
        %2304 = vmatprep.subr.bf16.mxu0 0
        %2305 = vmatpush1.bf16.msra.mxu0 0
        %2306 = vmatprep.subr.bf16.mxu0 0
        %2307 = vmatpush1.bf16.msra.mxu0 0
        %2308 = vmatprep.subr.bf16.mxu0 0
        %2309 = vmatpush1.bf16.msra.mxu0 0
        %2310 = vmatprep.subr.bf16.mxu0 0
        %2311 = vmatpush1.bf16.msra.mxu0 0
        %2312 = vmatprep.subr.bf16.mxu0 0
        %2313 = vmatpush1.bf16.msra.mxu0 0
        %2314 = vmatprep.subr.bf16.mxu0 0
        %2315 = vmatpush1.bf16.msra.mxu0 0
        %2316 = vmatprep.subr.bf16.mxu0 0
        %2317 = vmatpush1.bf16.msra.mxu0 0
        %2318 = vmatprep.subr.bf16.mxu0 0
        %2319 = vmatpush1.bf16.msra.mxu0 0
        %2320 = vmatprep.subr.bf16.mxu0 0
        %2321 = vmatpush1.bf16.msra.mxu0 0
        %2322 = vmatprep.subr.bf16.mxu0 0
        %2323 = vmatpush1.bf16.msra.mxu0 0
        %2324 = vmatprep.subr.bf16.mxu0 0
        %2325 = vmatpush1.bf16.msra.mxu0 0
        %2326 = vmatprep.subr.bf16.mxu0 0
        %2327 = vmatpush1.bf16.msra.mxu0 0
        %2328 = vmatprep.mubr.bf16.mxu0 0
        %2329 = vmatmul.mubr.bf16.gmra.mrb[0].mxu0 %v2294
        %v2330 = vpop.f32.mrb[0].mxu0
        %v2331 = vadd.f32 0.0, %v2330
        %v2332 = vpop.f32.mrb[0].mxu0
        %v2333 = vpop.f32.mrb[0].mxu0
        %v2334 = vpop.f32.mrb[0].mxu0
        %2335 = vdwg.mxu0
        %v2336 = vadd.f32 %v2215, %v2331
        %v2337 = vld [vmem:[%s8] sm:$0x1]
        %v2339 = vlaneseq
        %v2340 = vshrl.u32 %v2339, 7
        %v2341 = vsub.s32 0, %v2340
        %v2342 = vrot.slane %v2337, %v2341
        %v2344 = vadd.f32 %v2291, %v2342
        %v2345 = vmax.f32 %v2344, 0.0
        %v2346 = vadd.f32 %v2336, %v2342
        %v2347 = vmax.f32 %v2346, 0.0
        %v2348 = vmax.f32 %v2345, %v2347
        %v2349 = vpack.c.bf16 %v2348, %v2348
        %2350 = vst [vmem:[%s345] sm:$0x3] %v2349
        %p2351 = scmp.lt.s32.totalorder %s21, 1
        %s2352 = scalar_select %p2351, %s21, 1
        %s2353 = smul.addr %s2352, 2
        %s2354 = scalar_lea.vmem %s9, %s2353
        // Predicated region
        $region61: #{_lambda_.2} parent=55 // pred_check
          %p2355 = pneg %p233
        $region62: #{_lambda_.2} parent=55 // pred_check_branch
          %2357 = sbr.rel (%p2355) target = $region64
        $region63: #{_lambda_.2} parent=55 // pred_region
          _
        $region64: #{_lambda_.2} parent=55 // pred_fallthru
          _
      $region56: #{_lambda_.2} parent=5 // pred_fallthru
        _
      %p2358 = scmp.le.s32.totalorder 2, %s16
      // Predicated region
      $region65: #{_lambda_.2} parent=5 // pred_check
        %p2359 = pneg %p2358
      $region66: #{_lambda_.2} parent=5 // pred_check_branch
        %2361 = sbr.rel (%p2359) target = $region68
      $region67: #{_lambda_.2} parent=5 // pred_region
        %s2362 = ssub.s32 %s16, 2
        // Predicated region
        $region69: #{_lambda_.2} parent=67 // pred_check
          %p2363 = pneg %p239
        $region70: #{_lambda_.2} parent=67 // pred_check_branch
          %2365 = sbr.rel (%p2363) target = $region72
        $region71: #{_lambda_.2} parent=67 // pred_region
          %p2366 = scmp.lt.s32.totalorder %s22, 1
          %s2367 = scalar_select %p2366, %s22, 1
          %s2368 = smul.addr %s2367, 2
          %s2369 = scalar_lea.vmem %s9, %s2368
        $region72: #{_lambda_.2} parent=67 // pred_fallthru
          _
      $region68: #{_lambda_.2} parent=5 // pred_fallthru
        _
    $region6: #{_lambda_.2} parent=1 // loop_footer
      %s20 = sadd.s32 1, %s16
    $region7: #{_lambda_.2} parent=1 // loop_footer_branch
      %15 = sbr.rel target = $region3
    $region8: #{_lambda_.2} parent=1 // loop_exit
      _
    %2370 = vsyncpa [#allocation6], 1
    %s2371 = scalar_lea.sflag [#allocation6], 1
    %2372 = vsyncpa %s2371, 1

</llo_original>
